<compile_context>
chip_gen: v6e
topology: v6e:2x2x1
jax: 0.10.0
libtpu: 0.0.40
codegen_flags: <defaults>
</compile_context>

<pallas_src>
import functools

import jax
import jax.numpy as jnp
import numpy as np
from jax.experimental import pallas as pl
from jax.experimental.pallas import tpu as pltpu


_VMEM = pl.BlockSpec(memory_space=pltpu.MemorySpace.VMEM)


# --------------------------------------------------------------------------
# Device helpers
# --------------------------------------------------------------------------

def _tpu_has_two_tensorcores():
    """True on megacore parts (v7x / v4) where a 'parallel' grid axis spans 2 TCs."""
    try:
        kind = jax.devices()[0].device_kind.lower()
    except Exception:
        return False
    return ("v7" in kind) or ("v4" in kind)


def _conv1_tiling(M):
    """Output-column tiling for conv1: (tile_m, num_tiles)."""
    if _tpu_has_two_tensorcores() and M >= 1024:
        tile = (((M + 1) // 2) + 255) // 256 * 256      # 2 tiles -> one per TC
        return tile, 2
    return (M + 127) // 128 * 128, 1                    # single big tile


# --------------------------------------------------------------------------
# Pallas kernels
# --------------------------------------------------------------------------

def _gru_rnn_kernel(last_only, x_ref, we_ref, be_ref, wgi0_ref, bgi0_ref,
                    whh0_ref, bhh0_ref, wblk_ref, bblk_ref, wo_ref, bo_ref,
                    y_ref, h_ref):
    """RNN.forward: y = Linear(GRU(ReLU(Linear(x)))).

    Layouts (all float32, weights stored (in, out), gate order r, z, n):
      x_ref:    (S*Bp, nin)   step-major rows (row t*Bp+b), batch padded to 8.
      we_ref:   (nin, es), be_ref: (1, es)
      wgi0_ref: (es, 3*hs), bgi0_ref: (1, 3*hs)   layer-0 input gates (all steps)
      whh0_ref: (hs, 3*hs), bhh0_ref: (1, 3*hs)   layer-0 hidden gates
      wblk_ref: (nl-1, 2*hs, 4*hs)   fused [x|h] block weight for layers >= 1:
                [[Wih_r Wih_z Wih_n 0], [Whh_r Whh_z 0 Whh_n]]
      bblk_ref: (nl-1, 1, 4*hs)  [bih_r+bhh_r | bih_z+bhh_z | bih_n | bhh_n]
      wo_ref:   (hs, nout), bo_ref: (1, nout)
      y_ref:    (S*Bp, nout)  per-step outputs, or (Bp, nout) if last_only.
      h_ref:    (nl, Bp, hs)  final hidden state.
    """
    f32 = jnp.float32
    hs = whh0_ref.shape[0]
    nl, Bp, _ = h_ref.shape
    S = x_ref.shape[0] // Bp

    # ---- time-parallel prologue (hoisted out of the serial recurrence) ----
    emb = jnp.maximum(
        jnp.dot(x_ref[...], we_ref[...], preferred_element_type=f32)
        + be_ref[...], 0.0)                                        # (S*Bp, es)
    gi0 = (jnp.dot(emb, wgi0_ref[...], preferred_element_type=f32)
           + bgi0_ref[...])                                        # (S*Bp, 3*hs)

    # ---- bias broadcasts hoisted out of the unrolled loop (no CSE in JAX) ----
    bhh0 = jnp.broadcast_to(bhh0_ref[...], (Bp, 3 * hs))
    bblk = [jnp.broadcast_to(bblk_ref[l], (Bp, 4 * hs)) for l in range(nl - 1)]

    # ---- serial recurrence, statically unrolled (S small & static) ----
    h = [jnp.zeros((Bp, hs), f32) for _ in range(nl)]
    outs = []
    for t in range(S):
        rows = slice(t * Bp, (t + 1) * Bp)                         # sublane-aligned
        # layer 0: precomputed input gates + ONE hidden-gate matmul.
        gi = gi0[rows]
        gh = jnp.dot(h[0], whh0_ref[...], preferred_element_type=f32) + bhh0
        rz = jax.nn.sigmoid(gi[:, :2 * hs] + gh[:, :2 * hs])       # one EUP slab
        r, z = rz[:, :hs], rz[:, hs:]
        n = jnp.tanh(gi[:, 2 * hs:] + r * gh[:, 2 * hs:])          # r*(W_hn h + b_hn)
        h[0] = (1.0 - z) * n + z * h[0]
        # layers >= 1: ONE fused gate matmul per layer-step.
        for l in range(1, nl):
            xc = jnp.concatenate([h[l - 1], h[l]], axis=1)         # (Bp, 2*hs)
            g = (jnp.dot(xc, wblk_ref[l - 1], preferred_element_type=f32)
                 + bblk[l - 1])                                    # (Bp, 4*hs)
            rz = jax.nn.sigmoid(g[:, :2 * hs])
            r, z = rz[:, :hs], rz[:, hs:]
            n = jnp.tanh(g[:, 2 * hs:3 * hs] + r * g[:, 3 * hs:])
            h[l] = (1.0 - z) * n + z * h[l]
        if not last_only:
            outs.append(h[nl - 1])

    for l in range(nl):
        h_ref[l] = h[l]

    # ---- time-parallel epilogue: output projection once, after the loop ----
    if last_only:
        y_ref[...] = (jnp.dot(h[nl - 1], wo_ref[...], preferred_element_type=f32)
                      + bo_ref[...])
    else:
        hl_all = jnp.concatenate(outs, axis=0)                     # (S*Bp, hs)
        y_ref[...] = (jnp.dot(hl_all, wo_ref[...], preferred_element_type=f32)
                      + bo_ref[...])


def _conv_mm_kernel(p_ref, w_ref, sc_ref, sh_ref, o_ref):
    """Conv as transposed im2col matmul with folded bias/BN, lane-dense output.

    p_ref: (K, tile_m), w_ref: (Cout, K), sc/sh: (Cout, 1).
    o_ref: (Cout, tile_m) = ReLU((W @ P) * sc + sh).
    """
    acc = jnp.dot(w_ref[...], p_ref[...], preferred_element_type=jnp.float32)
    o_ref[...] = jnp.maximum(acc * sc_ref[...] + sh_ref[...], 0.0)


def _scene_tail_kernel(p2_ref, w2_ref, sc2_ref, sh2_ref, g3_ref, w3s_ref,
                       sc3_ref, sh3_ref, w1s_ref, b1_ref, w2t_ref, b2_ref,
                       o_ref):
    """Fused conv2+BN+ReLU -> conv3+BN+ReLU -> flatten -> Linear/ReLU/Linear.

    p2_ref:  (200, M2)        conv2 im2col patches (M2 = B*9*13).
    w2_ref:  (16, 200), sc2/sh2: (16, 1)      folded conv bias + BN.
    g3_ref:  (M2, 25*M3)      0/1 gather matrix for conv3's im2col
                              (M3 = 6*B, column p*M3 + s*B + b).
    w3s_ref: (25, 32, 16)     conv3 weight per patch position p = kh*5+kw.
    sc3/sh3: (32, 1)          folded conv bias + BN.
    w1s_ref: (6, 128, 32)     Linear(192,128) grouped by conv3 spatial pos s.
    b1_ref:  (128, 1), w2t_ref: (nout, 128), b2_ref: (nout, 1).
    o_ref:   (nout, B)        scene encoding, feature-major.
    """
    f32 = jnp.float32
    B = o_ref.shape[1]
    npatch, c3out, _ = w3s_ref.shape
    nspat = w1s_ref.shape[0]
    M3 = nspat * B

    # conv2 (+ folded BN) + ReLU : one (16, 200) @ (200, M2) matmul.
    c2 = jnp.dot(w2_ref[...], p2_ref[...], preferred_element_type=f32)
    c2 = jnp.maximum(c2 * sc2_ref[...] + sh2_ref[...], 0.0)

    # conv3: one gather matmul + 25 accumulating per-patch-position matmuls.
    cg = jnp.dot(c2, g3_ref[...], preferred_element_type=f32)       # (16, 25*M3)
    acc = jnp.zeros((c3out, M3), f32)
    for p in range(npatch):
        acc = acc + jnp.dot(w3s_ref[p], cg[:, p * M3:(p + 1) * M3],
                            preferred_element_type=f32)
    c3 = jnp.maximum(acc * sc3_ref[...] + sh3_ref[...], 0.0)        # (32, M3)

    # flatten + Linear(192,128): 6 grouped matmuls (no in-kernel transposes).
    h1 = jnp.zeros((w1s_ref.shape[1], B), f32)
    for s in range(nspat):
        h1 = h1 + jnp.dot(w1s_ref[s], c3[:, s * B:(s + 1) * B],
                          preferred_element_type=f32)
    h1 = jnp.maximum(h1 + b1_ref[...], 0.0)                         # (128, B)

    # Linear(128, nout), kept feature-major.
    o_ref[...] = (jnp.dot(w2t_ref[...], h1, preferred_element_type=f32)
                  + b2_ref[...])


# --------------------------------------------------------------------------
# Wrappers (jit-fused glue: reshapes / im2col / param plumbing)
# --------------------------------------------------------------------------

@functools.partial(jax.jit, static_argnames=("last_only",))
def rnn_forward(x, p, last_only=False):
    """Equivalent of RNN.forward. x: (N, S, nin) batch-first.

    Returns (y, hidden); y is (N, S, nout), or (N, nout) (last step only) when
    last_only=True -- the only part encode_conditionals consumes.
    """
    N, S, nin = x.shape
    hs = p["whh0"].shape[0]
    es = p["we"].shape[1]
    nl = p["wblk"].shape[0] + 1
    nout = p["wo"].shape[1]
    Bp = max(8, ((N + 7) // 8) * 8)                     # pad batch to 8 sublanes

    x_tm = jnp.transpose(x, (1, 0, 2)).astype(jnp.float32)          # (S, N, nin)
    x_tm = jnp.pad(x_tm, ((0, 0), (0, Bp - N), (0, 0)))
    x_flat = x_tm.reshape(S * Bp, nin)                              # step-major rows

    y_rows = Bp if last_only else S * Bp
    cost = pl.CostEstimate(
        flops=int(2 * S * Bp * (nin * es + es * 3 * hs + hs * 3 * hs
                                + (nl - 1) * 2 * hs * 4 * hs)
                  + 2 * y_rows * hs * nout + 12 * S * Bp * hs * nl),
        transcendentals=int(3 * S * Bp * hs * nl),
        bytes_accessed=int(4 * (S * Bp * nin + y_rows * nout + nl * Bp * hs
                                + nin * es + es + es * 3 * hs + hs * 3 * hs
                                + 6 * hs + (nl - 1) * (8 * hs * hs + 4 * hs)
                                + hs * nout + nout)))

    y_flat, h = pl.pallas_call(
        functools.partial(_gru_rnn_kernel, last_only),
        out_shape=(jax.ShapeDtypeStruct((y_rows, nout), jnp.float32),
                   jax.ShapeDtypeStruct((nl, Bp, hs), jnp.float32)),
        in_specs=[_VMEM] * 11,
        out_specs=(_VMEM, _VMEM),
        cost_estimate=cost,
    )(x_flat, p["we"], p["be"], p["wgi0"], p["bgi0"], p["whh0"], p["bhh0"],
      p["wblk"], p["bblk"], p["wo"], p["bo"])

    if last_only:
        y = y_flat[:N]
    else:
        y = jnp.transpose(y_flat.reshape(S, Bp, nout)[:, :N, :], (1, 0, 2))
    return y, h[:, :N, :]


def _im2col_cbhw(x, k, stride, Ho, Wo):
    """im2col on CBHW data -> (C*k*k, B*Ho*Wo), K order ci*k*k + kh*k + kw."""
    C = x.shape[0]
    cols = []
    for kh in range(k):
        for kw in range(k):
            cols.append(x[:, :, kh:kh + stride * (Ho - 1) + 1:stride,
                              kw:kw + stride * (Wo - 1) + 1:stride])
    return jnp.stack(cols, axis=1).reshape(C * k * k, -1)


def _conv_matmul(patches, w, scale, shift):
    """conv1: tiled (Cout, K) @ (K, M) matmul kernel with folded bias."""
    K, M = patches.shape
    Cout = w.shape[0]
    tile_m, ntiles = _conv1_tiling(M)
    M_pad = ntiles * tile_m
    patches = jnp.pad(patches, ((0, 0), (0, M_pad - M))).astype(jnp.float32)

    cost = pl.CostEstimate(
        flops=int(2 * M_pad * K * Cout + 2 * M_pad * Cout),
        transcendentals=0,
        bytes_accessed=int(4 * (K * M_pad + Cout * (K + 2) + Cout * M_pad)))

    out = pl.pallas_call(
        _conv_mm_kernel,
        out_shape=jax.ShapeDtypeStruct((Cout, M_pad), jnp.float32),
        grid=(ntiles,),
        in_specs=[
            pl.BlockSpec((K, tile_m), lambda i: (0, i)),
            pl.BlockSpec((Cout, K), lambda i: (0, 0)),
            pl.BlockSpec((Cout, 1), lambda i: (0, 0)),
            pl.BlockSpec((Cout, 1), lambda i: (0, 0)),
        ],
        out_specs=pl.BlockSpec((Cout, tile_m), lambda i: (0, i)),
        compiler_params=pltpu.CompilerParams(dimension_semantics=("parallel",)),
        cost_estimate=cost,
    )(patches, w, scale, shift)
    return out[:, :M]


def _build_conv3_gather(B, H2, W2, Ho3, Wo3, k=5, stride=4):
    """0/1 gather matrix for conv3's im2col, built at trace time (constant)."""
    M2 = B * H2 * W2
    M3 = Ho3 * Wo3 * B
    G = np.zeros((M2, k * k * M3), np.float32)
    for kh in range(k):
        for kw in range(k):
            p = kh * k + kw
            for b in range(B):
                for ho in range(Ho3):
                    for wo in range(Wo3):
                        q = b * H2 * W2 + (stride * ho + kh) * W2 + (stride * wo + kw)
                        m = (ho * Wo3 + wo) * B + b
                        G[q, p * M3 + m] = 1.0
    return jnp.asarray(G)


@jax.jit
def scene_encoder_forward(scene, p):
    """Equivalent of Scene_Encoder.forward. scene: (B, 1, H, W) NCHW like PyTorch."""
    B = scene.shape[0]
    x = jnp.transpose(scene, (1, 0, 2, 3)).astype(jnp.float32)      # (1, B, H, W)

    # ---- conv1 (k=5, stride=4, pad=1): im2col + tiled matmul kernel ----
    x = jnp.pad(x, ((0, 0), (0, 0), (1, 1), (1, 1)))
    H1, W1 = x.shape[2], x.shape[3]
    Ho1, Wo1 = (H1 - 5) // 4 + 1, (W1 - 5) // 4 + 1
    p1 = _im2col_cbhw(x, 5, 4, Ho1, Wo1)                            # (25, B*Ho1*Wo1)
    c1 = _conv_matmul(p1, p["cw1"], p["cs1"], p["csh1"])            # (8, B*Ho1*Wo1)
    c1 = c1.reshape(8, B, Ho1, Wo1)

    # ---- conv2 im2col (pad=1, stride=4); rest fused in one VMEM kernel ----
    c1 = jnp.pad(c1, ((0, 0), (0, 0), (1, 1), (1, 1)))
    H2 = (Ho1 + 2 - 5) // 4 + 1
    W2 = (Wo1 + 2 - 5) // 4 + 1
    p2 = _im2col_cbhw(c1, 5, 4, H2, W2)                             # (200, B*H2*W2)

    Ho3, Wo3 = (H2 - 5) // 4 + 1, (W2 - 5) // 4 + 1
    assert Ho3 * Wo3 == p["lw1s"].shape[0], "scene size incompatible with Linear(32*2*3,...)"
    g3 = _build_conv3_gather(B, H2, W2, Ho3, Wo3, 5, 4)             # trace-time const

    out = pl.pallas_call(
        _scene_tail_kernel,
        out_shape=jax.ShapeDtypeStruct((p["lb2c"].shape[0], B), jnp.float32),
        in_specs=[_VMEM] * 12,
        out_specs=_VMEM,
    )(p2, p["cw2"], p["cs2"], p["csh2"], g3, p["cw3s"], p["cs3"], p["csh3"],
      p["lw1s"], p["lb1c"], p["lw2t"], p["lb2c"])
    return out.T                                                    # (B, enc_dim)


@jax.jit
def _encode_conditionals_map(x, scene, rnn_p, scene_p):
    x_in = x[..., 1:, :] - x[..., :-1, :]                           # rel_coords=True
    x_tar_enc, _ = rnn_forward(x_in[:, 0], rnn_p, last_only=True)
    scene_enc = scene_encoder_forward(scene, scene_p)
    return jnp.concatenate([x_tar_enc, scene_enc], axis=1)


@jax.jit
def _encode_conditionals_nomap(x, rnn_p):
    x_in = x[..., 1:, :] - x[..., :-1, :]
    x_tar_enc, _ = rnn_forward(x_in[:, 0], rnn_p, last_only=True)
    return x_tar_enc


# --------------------------------------------------------------------------
# TrajFlow (Pallas) -- parameters initialized deterministically in-script
# --------------------------------------------------------------------------

class TrajFlowPallas:
    def __init__(self, key, obs_encoding_size=16, scene_encoding_size=8,
                 es_rnn=16, hs_rnn=16, n_layers_rnn=3):
        assert es_rnn == hs_rnn, "stacked per-layer GRU weights assume es == hs"
        self.obs_encoding_size = obs_encoding_size
        self.scene_encoding_size = scene_encoding_size
        keys = iter(jax.random.split(key, 64))

        def nrm(shape, s=0.1):
            return (s * jax.random.normal(next(keys), shape)).astype(jnp.float32)

        hs, es, nl = hs_rnn, es_rnn, n_layers_rnn

        # Per-gate GRU params (gate order r, z, n), weights in (in, out) layout:
        # wih[l, g] == torch weight_ih_l{l}[g*hs:(g+1)*hs].T  etc.
        wih = nrm((nl, 3, es, hs))
        whh = nrm((nl, 3, hs, hs))
        bih = nrm((nl, 3, hs))
        bhh = nrm((nl, 3, hs))
        z_hh = jnp.zeros((hs, hs), jnp.float32)
        self.rnn_params = dict(
            we=nrm((2, es)), be=nrm((1, es)),
            # layer-0 gates (input part precomputed for all steps in the kernel)
            wgi0=jnp.concatenate([wih[0, g] for g in range(3)], axis=1),
            bgi0=jnp.concatenate([bih[0, g] for g in range(3)])[None, :],
            whh0=jnp.concatenate([whh[0, g] for g in range(3)], axis=1),
            bhh0=jnp.concatenate([bhh[0, g] for g in range(3)])[None, :],
            # layers >= 1: fused [x|h] block weight / bias
            wblk=jnp.stack([jnp.concatenate([
                jnp.concatenate([wih[l, 0], wih[l, 1], wih[l, 2], z_hh], axis=1),
                jnp.concatenate([whh[l, 0], whh[l, 1], z_hh, whh[l, 2]], axis=1)],
                axis=0) for l in range(1, nl)]),
            bblk=jnp.stack([jnp.concatenate(
                [bih[l, 0] + bhh[l, 0], bih[l, 1] + bhh[l, 1],
                 bih[l, 2], bhh[l, 2]])[None, :] for l in range(1, nl)]),
            wo=nrm((hs, obs_encoding_size)), bo=nrm((1, obs_encoding_size)),
        )

        # Scene_Encoder params. Conv weights as (Cout, Cin*5*5) (torch
        # weight.reshape(Cout, -1)); conv bias + eval-mode BN folded into
        # per-channel scale/shift applied after the matmul.
        def bn_fold(cout, conv_bias, eps=1e-5):
            gamma = 1.0 + 0.05 * jax.random.normal(next(keys), (cout, 1))
            beta = 0.05 * jax.random.normal(next(keys), (cout, 1))
            mean = 0.05 * jax.random.normal(next(keys), (cout, 1))
            var = 1.0 + 0.05 * jnp.abs(jax.random.normal(next(keys), (cout, 1)))
            scale = gamma / jnp.sqrt(var + eps)
            shift = beta - mean * scale + conv_bias * scale
            return scale.astype(jnp.float32), shift.astype(jnp.float32)

        cw1, cb1 = nrm((8, 1 * 25)), nrm((8, 1))
        cw2, cb2 = nrm((16, 8 * 25)), nrm((16, 1))
        cs2, csh2 = bn_fold(16, cb2)
        cw3, cb3 = nrm((32, 16, 5, 5)), nrm((32, 1))
        cs3, csh3 = bn_fold(32, cb3)
        lw1, lb1 = nrm((32 * 2 * 3, 128)), nrm((128,))
        lw2, lb2 = nrm((128, scene_encoding_size)), nrm((scene_encoding_size,))

        self.scene_params = dict(
            cw1=cw1, cs1=jnp.ones((8, 1), jnp.float32), csh1=cb1,   # conv1: no BN
            cw2=cw2, cs2=cs2, csh2=csh2,
            # conv3 weight grouped by patch position p = kh*5+kw: (25, 32, 16)
            cw3s=jnp.transpose(cw3.reshape(32, 16, 25), (2, 0, 1)),
            cs3=cs3, csh3=csh3,
            # Flatten + Linear(192,128) grouped by conv3 spatial position s:
            # lw1s[s] == lw1[s::6, :].T, consumed against c3's per-s column blocks.
            lw1s=jnp.stack([lw1[s::6, :].T for s in range(6)]),
            lb1c=lb1[:, None],
            lw2t=lw2.T, lb2c=lb2[:, None],
        )

    def encode_conditionals(self, x, scene=None):
        """Target-agent + scene part of TrajFlow._encode_conditionals (total_enc).

        x: (batch, n_agents, n_steps, 2) absolute positions; uses the target
        agent's relative displacements through tar_obs_encoder, last-step
        encoding, concatenated with the scene encoding when a map is provided.
        """
        # TODO(synk): missing-entry shifting / nan_to_num of x_in and the
        # SocialInterGNN social encoding are not reproduced (inputs assumed finite).
        if scene is not None:
            return _encode_conditionals_map(x, scene, self.rnn_params,
                                            self.scene_params)
        return _encode_conditionals_nomap(x, self.rnn_params)


# --------------------------------------------------------------------------
# Demo
# --------------------------------------------------------------------------

if __name__ == "__main__":
    key = jax.random.PRNGKey(0)
    k_x, k_scene, k_param = jax.random.split(key, 3)

    model = TrajFlowPallas(k_param)

    batch, n_agents, n_steps = 2, 3, 9           # 9 observed steps -> 8 displacements
    x = jax.random.normal(k_x, (batch, n_agents, n_steps, 2), dtype=jnp.float32)
    # Scene_Encoder hard-codes Linear(32*2*3, ...): (139, 203) input yields 2x3 conv out.
    scene = jax.random.normal(k_scene, (batch, 1, 139, 203), dtype=jnp.float32)

    enc = model.encode_conditionals(x, scene)
    enc = jax.block_until_ready(enc)

    assert enc.shape == (batch, model.obs_encoding_size + model.scene_encoding_size), enc.shape
    assert bool(jnp.all(jnp.isfinite(enc)))

    # Also exercise the raw RNN path (returns per-step outputs + final hidden).
    y, h = rnn_forward(x[:, 0, 1:, :] - x[:, 0, :-1, :], model.rnn_params)
    jax.block_until_ready((y, h))
    assert y.shape == (batch, n_steps - 1, model.obs_encoding_size)
    assert h.shape == (3, batch, 16)
    assert bool(jnp.all(jnp.isfinite(y))) and bool(jnp.all(jnp.isfinite(h)))

    print("KERNEL_OK")
</pallas_src>

<mosaic_0001>
module attributes {stable_mosaic.version = 11 : i64} {
  func.func @_gru_rnn_kernel(%arg0: memref<64x2xf32, #tpu.memory_space<vmem>>, %arg1: memref<2x16xf32, #tpu.memory_space<vmem>>, %arg2: memref<1x16xf32, #tpu.memory_space<vmem>>, %arg3: memref<16x48xf32, #tpu.memory_space<vmem>>, %arg4: memref<1x48xf32, #tpu.memory_space<vmem>>, %arg5: memref<16x48xf32, #tpu.memory_space<vmem>>, %arg6: memref<1x48xf32, #tpu.memory_space<vmem>>, %arg7: memref<2x32x64xf32, #tpu.memory_space<vmem>>, %arg8: memref<2x1x64xf32, #tpu.memory_space<vmem>>, %arg9: memref<16x16xf32, #tpu.memory_space<vmem>>, %arg10: memref<1x16xf32, #tpu.memory_space<vmem>>, %arg11: memref<8x16xf32, #tpu.memory_space<vmem>>, %arg12: memref<3x8x16xf32, #tpu.memory_space<vmem>>) attributes {dimension_semantics = [], scalar_prefetch = 0 : i64, scratch_operands = 0 : i64, tpu.core_type = #tpu.core_type<tc>} {
    %c0 = arith.constant 0 : index
    %c0_0 = arith.constant 0 : index
    %0 = vector.load %arg0[%c0, %c0_0] : memref<64x2xf32, #tpu.memory_space<vmem>>, vector<64x2xf32>
    %c0_1 = arith.constant 0 : index
    %c0_2 = arith.constant 0 : index
    %1 = vector.load %arg1[%c0_1, %c0_2] : memref<2x16xf32, #tpu.memory_space<vmem>>, vector<2x16xf32>
    %cst = arith.constant dense<0.000000e+00> : vector<64x16xf32>
    %2 = tpu.matmul %0, %1, %cst {dimension_numbers = #tpu.dot_dimension_numbers<[1], [0], [0], [1], [0, 0, 1, 1], [], []>} : vector<64x2xf32>, vector<2x16xf32>, vector<64x16xf32> -> vector<64x16xf32>
    %c0_3 = arith.constant 0 : index
    %c0_4 = arith.constant 0 : index
    %3 = vector.load %arg2[%c0_3, %c0_4] : memref<1x16xf32, #tpu.memory_space<vmem>>, vector<1x16xf32>
    %4 = vector.broadcast %3 : vector<1x16xf32> to vector<64x16xf32>
    %5 = arith.addf %2, %4 : vector<64x16xf32>
    %cst_5 = arith.constant 0.000000e+00 : f32
    %6 = vector.broadcast %cst_5 : f32 to vector<64x16xf32>
    %7 = arith.maximumf %5, %6 : vector<64x16xf32>
    %c0_6 = arith.constant 0 : index
    %c0_7 = arith.constant 0 : index
    %8 = vector.load %arg3[%c0_6, %c0_7] : memref<16x48xf32, #tpu.memory_space<vmem>>, vector<16x48xf32>
    %cst_8 = arith.constant dense<0.000000e+00> : vector<64x48xf32>
    %9 = tpu.matmul %7, %8, %cst_8 {dimension_numbers = #tpu.dot_dimension_numbers<[1], [0], [0], [1], [0, 0, 1, 1], [], []>} : vector<64x16xf32>, vector<16x48xf32>, vector<64x48xf32> -> vector<64x48xf32>
    %c0_9 = arith.constant 0 : index
    %c0_10 = arith.constant 0 : index
    %10 = vector.load %arg4[%c0_9, %c0_10] : memref<1x48xf32, #tpu.memory_space<vmem>>, vector<1x48xf32>
    %11 = vector.broadcast %10 : vector<1x48xf32> to vector<64x48xf32>
    %12 = arith.addf %9, %11 : vector<64x48xf32>
    %c0_11 = arith.constant 0 : index
    %c0_12 = arith.constant 0 : index
    %13 = vector.load %arg6[%c0_11, %c0_12] : memref<1x48xf32, #tpu.memory_space<vmem>>, vector<1x48xf32>
    %14 = vector.shape_cast %13 : vector<1x48xf32> to vector<1x48xf32>
    %15 = vector.broadcast %14 : vector<1x48xf32> to vector<8x48xf32>
    %c0_13 = arith.constant 0 : index
    %c0_14 = arith.constant 0 : index
    %c0_15 = arith.constant 0 : index
    %16 = vector.load %arg8[%c0_13, %c0_14, %c0_15] : memref<2x1x64xf32, #tpu.memory_space<vmem>>, vector<1x1x64xf32>
    %17 = vector.shape_cast %16 : vector<1x1x64xf32> to vector<1x64xf32>
    %18 = vector.shape_cast %17 : vector<1x64xf32> to vector<1x64xf32>
    %19 = vector.broadcast %18 : vector<1x64xf32> to vector<8x64xf32>
    %c1 = arith.constant 1 : index
    %c0_16 = arith.constant 0 : index
    %c0_17 = arith.constant 0 : index
    %20 = vector.load %arg8[%c1, %c0_16, %c0_17] : memref<2x1x64xf32, #tpu.memory_space<vmem>>, vector<1x1x64xf32>
    %21 = vector.shape_cast %20 : vector<1x1x64xf32> to vector<1x64xf32>
    %22 = vector.shape_cast %21 : vector<1x64xf32> to vector<1x64xf32>
    %23 = vector.broadcast %22 : vector<1x64xf32> to vector<8x64xf32>
    %cst_18 = arith.constant 0.000000e+00 : f32
    %24 = vector.broadcast %cst_18 : f32 to vector<8x16xf32>
    %cst_19 = arith.constant 0.000000e+00 : f32
    %25 = vector.broadcast %cst_19 : f32 to vector<8x16xf32>
    %cst_20 = arith.constant 0.000000e+00 : f32
    %26 = vector.broadcast %cst_20 : f32 to vector<8x16xf32>
    %27 = vector.extract_strided_slice %12 {offsets = [0, 0], sizes = [8, 48], strides = [1, 1]} : vector<64x48xf32> to vector<8x48xf32>
    %c0_21 = arith.constant 0 : index
    %c0_22 = arith.constant 0 : index
    %28 = vector.load %arg5[%c0_21, %c0_22] : memref<16x48xf32, #tpu.memory_space<vmem>>, vector<16x48xf32>
    %cst_23 = arith.constant dense<0.000000e+00> : vector<8x48xf32>
    %29 = tpu.matmul %24, %28, %cst_23 {dimension_numbers = #tpu.dot_dimension_numbers<[1], [0], [0], [1], [0, 0, 1, 1], [], []>} : vector<8x16xf32>, vector<16x48xf32>, vector<8x48xf32> -> vector<8x48xf32>
    %30 = arith.addf %29, %15 : vector<8x48xf32>
    %31 = vector.extract_strided_slice %27 {offsets = [0, 0], sizes = [8, 32], strides = [1, 1]} : vector<8x48xf32> to vector<8x32xf32>
    %32 = vector.extract_strided_slice %30 {offsets = [0, 0], sizes = [8, 32], strides = [1, 1]} : vector<8x48xf32> to vector<8x32xf32>
    %33 = arith.addf %31, %32 : vector<8x32xf32>
    %34 = arith.negf %33 : vector<8x32xf32>
    %35 = math.exp %34 : vector<8x32xf32>
    %cst_24 = arith.constant 1.000000e+00 : f32
    %36 = vector.broadcast %cst_24 : f32 to vector<8x32xf32>
    %37 = arith.addf %36, %35 : vector<8x32xf32>
    %38 = arith.divf %36, %37 : vector<8x32xf32>
    %39 = vector.extract_strided_slice %38 {offsets = [0, 0], sizes = [8, 16], strides = [1, 1]} : vector<8x32xf32> to vector<8x16xf32>
    %40 = vector.extract_strided_slice %38 {offsets = [0, 16], sizes = [8, 16], strides = [1, 1]} : vector<8x32xf32> to vector<8x16xf32>
    %41 = vector.extract_strided_slice %27 {offsets = [0, 32], sizes = [8, 16], strides = [1, 1]} : vector<8x48xf32> to vector<8x16xf32>
    %42 = vector.extract_strided_slice %30 {offsets = [0, 32], sizes = [8, 16], strides = [1, 1]} : vector<8x48xf32> to vector<8x16xf32>
    %43 = arith.mulf %39, %42 : vector<8x16xf32>
    %44 = arith.addf %41, %43 : vector<8x16xf32>
    %45 = math.tanh %44 : vector<8x16xf32>
    %cst_25 = arith.constant 1.000000e+00 : f32
    %46 = vector.broadcast %cst_25 : f32 to vector<8x16xf32>
    %47 = arith.subf %46, %40 : vector<8x16xf32>
    %48 = arith.mulf %47, %45 : vector<8x16xf32>
    %49 = arith.mulf %40, %24 : vector<8x16xf32>
    %50 = arith.addf %48, %49 : vector<8x16xf32>
    %51 = tpu.concatenate %50, %25 in 1 : vector<8x16xf32>, vector<8x16xf32> -> vector<8x32xf32>
    %c0_26 = arith.constant 0 : index
    %c0_27 = arith.constant 0 : index
    %c0_28 = arith.constant 0 : index
    %52 = vector.load %arg7[%c0_26, %c0_27, %c0_28] : memref<2x32x64xf32, #tpu.memory_space<vmem>>, vector<1x32x64xf32>
    %53 = vector.shape_cast %52 : vector<1x32x64xf32> to vector<32x64xf32>
    %cst_29 = arith.constant dense<0.000000e+00> : vector<8x64xf32>
    %54 = tpu.matmul %51, %53, %cst_29 {dimension_numbers = #tpu.dot_dimension_numbers<[1], [0], [0], [1], [0, 0, 1, 1], [], []>} : vector<8x32xf32>, vector<32x64xf32>, vector<8x64xf32> -> vector<8x64xf32>
    %55 = arith.addf %54, %19 : vector<8x64xf32>
    %56 = vector.extract_strided_slice %55 {offsets = [0, 0], sizes = [8, 32], strides = [1, 1]} : vector<8x64xf32> to vector<8x32xf32>
    %57 = arith.negf %56 : vector<8x32xf32>
    %58 = math.exp %57 : vector<8x32xf32>
    %cst_30 = arith.constant 1.000000e+00 : f32
    %59 = vector.broadcast %cst_30 : f32 to vector<8x32xf32>
    %60 = arith.addf %59, %58 : vector<8x32xf32>
    %61 = arith.divf %59, %60 : vector<8x32xf32>
    %62 = vector.extract_strided_slice %61 {offsets = [0, 0], sizes = [8, 16], strides = [1, 1]} : vector<8x32xf32> to vector<8x16xf32>
    %63 = vector.extract_strided_slice %61 {offsets = [0, 16], sizes = [8, 16], strides = [1, 1]} : vector<8x32xf32> to vector<8x16xf32>
    %64 = vector.extract_strided_slice %55 {offsets = [0, 32], sizes = [8, 16], strides = [1, 1]} : vector<8x64xf32> to vector<8x16xf32>
    %65 = vector.extract_strided_slice %55 {offsets = [0, 48], sizes = [8, 16], strides = [1, 1]} : vector<8x64xf32> to vector<8x16xf32>
    %66 = arith.mulf %62, %65 : vector<8x16xf32>
    %67 = arith.addf %64, %66 : vector<8x16xf32>
    %68 = math.tanh %67 : vector<8x16xf32>
    %cst_31 = arith.constant 1.000000e+00 : f32
    %69 = vector.broadcast %cst_31 : f32 to vector<8x16xf32>
    %70 = arith.subf %69, %63 : vector<8x16xf32>
    %71 = arith.mulf %70, %68 : vector<8x16xf32>
    %72 = arith.mulf %63, %25 : vector<8x16xf32>
    %73 = arith.addf %71, %72 : vector<8x16xf32>
    %74 = tpu.concatenate %73, %26 in 1 : vector<8x16xf32>, vector<8x16xf32> -> vector<8x32xf32>
    %c1_32 = arith.constant 1 : index
    %c0_33 = arith.constant 0 : index
    %c0_34 = arith.constant 0 : index
    %75 = vector.load %arg7[%c1_32, %c0_33, %c0_34] : memref<2x32x64xf32, #tpu.memory_space<vmem>>, vector<1x32x64xf32>
    %76 = vector.shape_cast %75 : vector<1x32x64xf32> to vector<32x64xf32>
    %cst_35 = arith.constant dense<0.000000e+00> : vector<8x64xf32>
    %77 = tpu.matmul %74, %76, %cst_35 {dimension_numbers = #tpu.dot_dimension_numbers<[1], [0], [0], [1], [0, 0, 1, 1], [], []>} : vector<8x32xf32>, vector<32x64xf32>, vector<8x64xf32> -> vector<8x64xf32>
    %78 = arith.addf %77, %23 : vector<8x64xf32>
    %79 = vector.extract_strided_slice %78 {offsets = [0, 0], sizes = [8, 32], strides = [1, 1]} : vector<8x64xf32> to vector<8x32xf32>
    %80 = arith.negf %79 : vector<8x32xf32>
    %81 = math.exp %80 : vector<8x32xf32>
    %cst_36 = arith.constant 1.000000e+00 : f32
    %82 = vector.broadcast %cst_36 : f32 to vector<8x32xf32>
    %83 = arith.addf %82, %81 : vector<8x32xf32>
    %84 = arith.divf %82, %83 : vector<8x32xf32>
    %85 = vector.extract_strided_slice %84 {offsets = [0, 0], sizes = [8, 16], strides = [1, 1]} : vector<8x32xf32> to vector<8x16xf32>
    %86 = vector.extract_strided_slice %84 {offsets = [0, 16], sizes = [8, 16], strides = [1, 1]} : vector<8x32xf32> to vector<8x16xf32>
    %87 = vector.extract_strided_slice %78 {offsets = [0, 32], sizes = [8, 16], strides = [1, 1]} : vector<8x64xf32> to vector<8x16xf32>
    %88 = vector.extract_strided_slice %78 {offsets = [0, 48], sizes = [8, 16], strides = [1, 1]} : vector<8x64xf32> to vector<8x16xf32>
    %89 = arith.mulf %85, %88 : vector<8x16xf32>
    %90 = arith.addf %87, %89 : vector<8x16xf32>
    %91 = math.tanh %90 : vector<8x16xf32>
    %cst_37 = arith.constant 1.000000e+00 : f32
    %92 = vector.broadcast %cst_37 : f32 to vector<8x16xf32>
    %93 = arith.subf %92, %86 : vector<8x16xf32>
    %94 = arith.mulf %93, %91 : vector<8x16xf32>
    %95 = arith.mulf %86, %26 : vector<8x16xf32>
    %96 = arith.addf %94, %95 : vector<8x16xf32>
    %97 = vector.extract_strided_slice %12 {offsets = [8, 0], sizes = [8, 48], strides = [1, 1]} : vector<64x48xf32> to vector<8x48xf32>
    %c0_38 = arith.constant 0 : index
    %c0_39 = arith.constant 0 : index
    %98 = vector.load %arg5[%c0_38, %c0_39] : memref<16x48xf32, #tpu.memory_space<vmem>>, vector<16x48xf32>
    %cst_40 = arith.constant dense<0.000000e+00> : vector<8x48xf32>
    %99 = tpu.matmul %50, %98, %cst_40 {dimension_numbers = #tpu.dot_dimension_numbers<[1], [0], [0], [1], [0, 0, 1, 1], [], []>} : vector<8x16xf32>, vector<16x48xf32>, vector<8x48xf32> -> vector<8x48xf32>
    %100 = arith.addf %99, %15 : vector<8x48xf32>
    %101 = vector.extract_strided_slice %97 {offsets = [0, 0], sizes = [8, 32], strides = [1, 1]} : vector<8x48xf32> to vector<8x32xf32>
    %102 = vector.extract_strided_slice %100 {offsets = [0, 0], sizes = [8, 32], strides = [1, 1]} : vector<8x48xf32> to vector<8x32xf32>
    %103 = arith.addf %101, %102 : vector<8x32xf32>
    %104 = arith.negf %103 : vector<8x32xf32>
    %105 = math.exp %104 : vector<8x32xf32>
    %cst_41 = arith.constant 1.000000e+00 : f32
    %106 = vector.broadcast %cst_41 : f32 to vector<8x32xf32>
    %107 = arith.addf %106, %105 : vector<8x32xf32>
    %108 = arith.divf %106, %107 : vector<8x32xf32>
    %109 = vector.extract_strided_slice %108 {offsets = [0, 0], sizes = [8, 16], strides = [1, 1]} : vector<8x32xf32> to vector<8x16xf32>
    %110 = vector.extract_strided_slice %108 {offsets = [0, 16], sizes = [8, 16], strides = [1, 1]} : vector<8x32xf32> to vector<8x16xf32>
    %111 = vector.extract_strided_slice %97 {offsets = [0, 32], sizes = [8, 16], strides = [1, 1]} : vector<8x48xf32> to vector<8x16xf32>
    %112 = vector.extract_strided_slice %100 {offsets = [0, 32], sizes = [8, 16], strides = [1, 1]} : vector<8x48xf32> to vector<8x16xf32>
    %113 = arith.mulf %109, %112 : vector<8x16xf32>
    %114 = arith.addf %111, %113 : vector<8x16xf32>
    %115 = math.tanh %114 : vector<8x16xf32>
    %cst_42 = arith.constant 1.000000e+00 : f32
    %116 = vector.broadcast %cst_42 : f32 to vector<8x16xf32>
    %117 = arith.subf %116, %110 : vector<8x16xf32>
    %118 = arith.mulf %117, %115 : vector<8x16xf32>
    %119 = arith.mulf %110, %50 : vector<8x16xf32>
    %120 = arith.addf %118, %119 : vector<8x16xf32>
    %121 = tpu.concatenate %120, %73 in 1 : vector<8x16xf32>, vector<8x16xf32> -> vector<8x32xf32>
    %c0_43 = arith.constant 0 : index
    %c0_44 = arith.constant 0 : index
    %c0_45 = arith.constant 0 : index
    %122 = vector.load %arg7[%c0_43, %c0_44, %c0_45] : memref<2x32x64xf32, #tpu.memory_space<vmem>>, vector<1x32x64xf32>
    %123 = vector.shape_cast %122 : vector<1x32x64xf32> to vector<32x64xf32>
    %cst_46 = arith.constant dense<0.000000e+00> : vector<8x64xf32>
    %124 = tpu.matmul %121, %123, %cst_46 {dimension_numbers = #tpu.dot_dimension_numbers<[1], [0], [0], [1], [0, 0, 1, 1], [], []>} : vector<8x32xf32>, vector<32x64xf32>, vector<8x64xf32> -> vector<8x64xf32>
    %125 = arith.addf %124, %19 : vector<8x64xf32>
    %126 = vector.extract_strided_slice %125 {offsets = [0, 0], sizes = [8, 32], strides = [1, 1]} : vector<8x64xf32> to vector<8x32xf32>
    %127 = arith.negf %126 : vector<8x32xf32>
    %128 = math.exp %127 : vector<8x32xf32>
    %cst_47 = arith.constant 1.000000e+00 : f32
    %129 = vector.broadcast %cst_47 : f32 to vector<8x32xf32>
    %130 = arith.addf %129, %128 : vector<8x32xf32>
    %131 = arith.divf %129, %130 : vector<8x32xf32>
    %132 = vector.extract_strided_slice %131 {offsets = [0, 0], sizes = [8, 16], strides = [1, 1]} : vector<8x32xf32> to vector<8x16xf32>
    %133 = vector.extract_strided_slice %131 {offsets = [0, 16], sizes = [8, 16], strides = [1, 1]} : vector<8x32xf32> to vector<8x16xf32>
    %134 = vector.extract_strided_slice %125 {offsets = [0, 32], sizes = [8, 16], strides = [1, 1]} : vector<8x64xf32> to vector<8x16xf32>
    %135 = vector.extract_strided_slice %125 {offsets = [0, 48], sizes = [8, 16], strides = [1, 1]} : vector<8x64xf32> to vector<8x16xf32>
    %136 = arith.mulf %132, %135 : vector<8x16xf32>
    %137 = arith.addf %134, %136 : vector<8x16xf32>
    %138 = math.tanh %137 : vector<8x16xf32>
    %cst_48 = arith.constant 1.000000e+00 : f32
    %139 = vector.broadcast %cst_48 : f32 to vector<8x16xf32>
    %140 = arith.subf %139, %133 : vector<8x16xf32>
    %141 = arith.mulf %140, %138 : vector<8x16xf32>
    %142 = arith.mulf %133, %73 : vector<8x16xf32>
    %143 = arith.addf %141, %142 : vector<8x16xf32>
    %144 = tpu.concatenate %143, %96 in 1 : vector<8x16xf32>, vector<8x16xf32> -> vector<8x32xf32>
    %c1_49 = arith.constant 1 : index
    %c0_50 = arith.constant 0 : index
    %c0_51 = arith.constant 0 : index
    %145 = vector.load %arg7[%c1_49, %c0_50, %c0_51] : memref<2x32x64xf32, #tpu.memory_space<vmem>>, vector<1x32x64xf32>
    %146 = vector.shape_cast %145 : vector<1x32x64xf32> to vector<32x64xf32>
    %cst_52 = arith.constant dense<0.000000e+00> : vector<8x64xf32>
    %147 = tpu.matmul %144, %146, %cst_52 {dimension_numbers = #tpu.dot_dimension_numbers<[1], [0], [0], [1], [0, 0, 1, 1], [], []>} : vector<8x32xf32>, vector<32x64xf32>, vector<8x64xf32> -> vector<8x64xf32>
    %148 = arith.addf %147, %23 : vector<8x64xf32>
    %149 = vector.extract_strided_slice %148 {offsets = [0, 0], sizes = [8, 32], strides = [1, 1]} : vector<8x64xf32> to vector<8x32xf32>
    %150 = arith.negf %149 : vector<8x32xf32>
    %151 = math.exp %150 : vector<8x32xf32>
    %cst_53 = arith.constant 1.000000e+00 : f32
    %152 = vector.broadcast %cst_53 : f32 to vector<8x32xf32>
    %153 = arith.addf %152, %151 : vector<8x32xf32>
    %154 = arith.divf %152, %153 : vector<8x32xf32>
    %155 = vector.extract_strided_slice %154 {offsets = [0, 0], sizes = [8, 16], strides = [1, 1]} : vector<8x32xf32> to vector<8x16xf32>
    %156 = vector.extract_strided_slice %154 {offsets = [0, 16], sizes = [8, 16], strides = [1, 1]} : vector<8x32xf32> to vector<8x16xf32>
    %157 = vector.extract_strided_slice %148 {offsets = [0, 32], sizes = [8, 16], strides = [1, 1]} : vector<8x64xf32> to vector<8x16xf32>
    %158 = vector.extract_strided_slice %148 {offsets = [0, 48], sizes = [8, 16], strides = [1, 1]} : vector<8x64xf32> to vector<8x16xf32>
    %159 = arith.mulf %155, %158 : vector<8x16xf32>
    %160 = arith.addf %157, %159 : vector<8x16xf32>
    %161 = math.tanh %160 : vector<8x16xf32>
    %cst_54 = arith.constant 1.000000e+00 : f32
    %162 = vector.broadcast %cst_54 : f32 to vector<8x16xf32>
    %163 = arith.subf %162, %156 : vector<8x16xf32>
    %164 = arith.mulf %163, %161 : vector<8x16xf32>
    %165 = arith.mulf %156, %96 : vector<8x16xf32>
    %166 = arith.addf %164, %165 : vector<8x16xf32>
    %167 = vector.extract_strided_slice %12 {offsets = [16, 0], sizes = [8, 48], strides = [1, 1]} : vector<64x48xf32> to vector<8x48xf32>
    %c0_55 = arith.constant 0 : index
    %c0_56 = arith.constant 0 : index
    %168 = vector.load %arg5[%c0_55, %c0_56] : memref<16x48xf32, #tpu.memory_space<vmem>>, vector<16x48xf32>
    %cst_57 = arith.constant dense<0.000000e+00> : vector<8x48xf32>
    %169 = tpu.matmul %120, %168, %cst_57 {dimension_numbers = #tpu.dot_dimension_numbers<[1], [0], [0], [1], [0, 0, 1, 1], [], []>} : vector<8x16xf32>, vector<16x48xf32>, vector<8x48xf32> -> vector<8x48xf32>
    %170 = arith.addf %169, %15 : vector<8x48xf32>
    %171 = vector.extract_strided_slice %167 {offsets = [0, 0], sizes = [8, 32], strides = [1, 1]} : vector<8x48xf32> to vector<8x32xf32>
    %172 = vector.extract_strided_slice %170 {offsets = [0, 0], sizes = [8, 32], strides = [1, 1]} : vector<8x48xf32> to vector<8x32xf32>
    %173 = arith.addf %171, %172 : vector<8x32xf32>
    %174 = arith.negf %173 : vector<8x32xf32>
    %175 = math.exp %174 : vector<8x32xf32>
    %cst_58 = arith.constant 1.000000e+00 : f32
    %176 = vector.broadcast %cst_58 : f32 to vector<8x32xf32>
    %177 = arith.addf %176, %175 : vector<8x32xf32>
    %178 = arith.divf %176, %177 : vector<8x32xf32>
    %179 = vector.extract_strided_slice %178 {offsets = [0, 0], sizes = [8, 16], strides = [1, 1]} : vector<8x32xf32> to vector<8x16xf32>
    %180 = vector.extract_strided_slice %178 {offsets = [0, 16], sizes = [8, 16], strides = [1, 1]} : vector<8x32xf32> to vector<8x16xf32>
    %181 = vector.extract_strided_slice %167 {offsets = [0, 32], sizes = [8, 16], strides = [1, 1]} : vector<8x48xf32> to vector<8x16xf32>
    %182 = vector.extract_strided_slice %170 {offsets = [0, 32], sizes = [8, 16], strides = [1, 1]} : vector<8x48xf32> to vector<8x16xf32>
    %183 = arith.mulf %179, %182 : vector<8x16xf32>
    %184 = arith.addf %181, %183 : vector<8x16xf32>
    %185 = math.tanh %184 : vector<8x16xf32>
    %cst_59 = arith.constant 1.000000e+00 : f32
    %186 = vector.broadcast %cst_59 : f32 to vector<8x16xf32>
    %187 = arith.subf %186, %180 : vector<8x16xf32>
    %188 = arith.mulf %187, %185 : vector<8x16xf32>
    %189 = arith.mulf %180, %120 : vector<8x16xf32>
    %190 = arith.addf %188, %189 : vector<8x16xf32>
    %191 = tpu.concatenate %190, %143 in 1 : vector<8x16xf32>, vector<8x16xf32> -> vector<8x32xf32>
    %c0_60 = arith.constant 0 : index
    %c0_61 = arith.constant 0 : index
    %c0_62 = arith.constant 0 : index
    %192 = vector.load %arg7[%c0_60, %c0_61, %c0_62] : memref<2x32x64xf32, #tpu.memory_space<vmem>>, vector<1x32x64xf32>
    %193 = vector.shape_cast %192 : vector<1x32x64xf32> to vector<32x64xf32>
    %cst_63 = arith.constant dense<0.000000e+00> : vector<8x64xf32>
    %194 = tpu.matmul %191, %193, %cst_63 {dimension_numbers = #tpu.dot_dimension_numbers<[1], [0], [0], [1], [0, 0, 1, 1], [], []>} : vector<8x32xf32>, vector<32x64xf32>, vector<8x64xf32> -> vector<8x64xf32>
    %195 = arith.addf %194, %19 : vector<8x64xf32>
    %196 = vector.extract_strided_slice %195 {offsets = [0, 0], sizes = [8, 32], strides = [1, 1]} : vector<8x64xf32> to vector<8x32xf32>
    %197 = arith.negf %196 : vector<8x32xf32>
    %198 = math.exp %197 : vector<8x32xf32>
    %cst_64 = arith.constant 1.000000e+00 : f32
    %199 = vector.broadcast %cst_64 : f32 to vector<8x32xf32>
    %200 = arith.addf %199, %198 : vector<8x32xf32>
    %201 = arith.divf %199, %200 : vector<8x32xf32>
    %202 = vector.extract_strided_slice %201 {offsets = [0, 0], sizes = [8, 16], strides = [1, 1]} : vector<8x32xf32> to vector<8x16xf32>
    %203 = vector.extract_strided_slice %201 {offsets = [0, 16], sizes = [8, 16], strides = [1, 1]} : vector<8x32xf32> to vector<8x16xf32>
    %204 = vector.extract_strided_slice %195 {offsets = [0, 32], sizes = [8, 16], strides = [1, 1]} : vector<8x64xf32> to vector<8x16xf32>
    %205 = vector.extract_strided_slice %195 {offsets = [0, 48], sizes = [8, 16], strides = [1, 1]} : vector<8x64xf32> to vector<8x16xf32>
    %206 = arith.mulf %202, %205 : vector<8x16xf32>
    %207 = arith.addf %204, %206 : vector<8x16xf32>
    %208 = math.tanh %207 : vector<8x16xf32>
    %cst_65 = arith.constant 1.000000e+00 : f32
    %209 = vector.broadcast %cst_65 : f32 to vector<8x16xf32>
    %210 = arith.subf %209, %203 : vector<8x16xf32>
    %211 = arith.mulf %210, %208 : vector<8x16xf32>
    %212 = arith.mulf %203, %143 : vector<8x16xf32>
    %213 = arith.addf %211, %212 : vector<8x16xf32>
    %214 = tpu.concatenate %213, %166 in 1 : vector<8x16xf32>, vector<8x16xf32> -> vector<8x32xf32>
    %c1_66 = arith.constant 1 : index
    %c0_67 = arith.constant 0 : index
    %c0_68 = arith.constant 0 : index
    %215 = vector.load %arg7[%c1_66, %c0_67, %c0_68] : memref<2x32x64xf32, #tpu.memory_space<vmem>>, vector<1x32x64xf32>
    %216 = vector.shape_cast %215 : vector<1x32x64xf32> to vector<32x64xf32>
    %cst_69 = arith.constant dense<0.000000e+00> : vector<8x64xf32>
    %217 = tpu.matmul %214, %216, %cst_69 {dimension_numbers = #tpu.dot_dimension_numbers<[1], [0], [0], [1], [0, 0, 1, 1], [], []>} : vector<8x32xf32>, vector<32x64xf32>, vector<8x64xf32> -> vector<8x64xf32>
    %218 = arith.addf %217, %23 : vector<8x64xf32>
    %219 = vector.extract_strided_slice %218 {offsets = [0, 0], sizes = [8, 32], strides = [1, 1]} : vector<8x64xf32> to vector<8x32xf32>
    %220 = arith.negf %219 : vector<8x32xf32>
    %221 = math.exp %220 : vector<8x32xf32>
    %cst_70 = arith.constant 1.000000e+00 : f32
    %222 = vector.broadcast %cst_70 : f32 to vector<8x32xf32>
    %223 = arith.addf %222, %221 : vector<8x32xf32>
    %224 = arith.divf %222, %223 : vector<8x32xf32>
    %225 = vector.extract_strided_slice %224 {offsets = [0, 0], sizes = [8, 16], strides = [1, 1]} : vector<8x32xf32> to vector<8x16xf32>
    %226 = vector.extract_strided_slice %224 {offsets = [0, 16], sizes = [8, 16], strides = [1, 1]} : vector<8x32xf32> to vector<8x16xf32>
    %227 = vector.extract_strided_slice %218 {offsets = [0, 32], sizes = [8, 16], strides = [1, 1]} : vector<8x64xf32> to vector<8x16xf32>
    %228 = vector.extract_strided_slice %218 {offsets = [0, 48], sizes = [8, 16], strides = [1, 1]} : vector<8x64xf32> to vector<8x16xf32>
    %229 = arith.mulf %225, %228 : vector<8x16xf32>
    %230 = arith.addf %227, %229 : vector<8x16xf32>
    %231 = math.tanh %230 : vector<8x16xf32>
    %cst_71 = arith.constant 1.000000e+00 : f32
    %232 = vector.broadcast %cst_71 : f32 to vector<8x16xf32>
    %233 = arith.subf %232, %226 : vector<8x16xf32>
    %234 = arith.mulf %233, %231 : vector<8x16xf32>
    %235 = arith.mulf %226, %166 : vector<8x16xf32>
    %236 = arith.addf %234, %235 : vector<8x16xf32>
    %237 = vector.extract_strided_slice %12 {offsets = [24, 0], sizes = [8, 48], strides = [1, 1]} : vector<64x48xf32> to vector<8x48xf32>
    %c0_72 = arith.constant 0 : index
    %c0_73 = arith.constant 0 : index
    %238 = vector.load %arg5[%c0_72, %c0_73] : memref<16x48xf32, #tpu.memory_space<vmem>>, vector<16x48xf32>
    %cst_74 = arith.constant dense<0.000000e+00> : vector<8x48xf32>
    %239 = tpu.matmul %190, %238, %cst_74 {dimension_numbers = #tpu.dot_dimension_numbers<[1], [0], [0], [1], [0, 0, 1, 1], [], []>} : vector<8x16xf32>, vector<16x48xf32>, vector<8x48xf32> -> vector<8x48xf32>
    %240 = arith.addf %239, %15 : vector<8x48xf32>
    %241 = vector.extract_strided_slice %237 {offsets = [0, 0], sizes = [8, 32], strides = [1, 1]} : vector<8x48xf32> to vector<8x32xf32>
    %242 = vector.extract_strided_slice %240 {offsets = [0, 0], sizes = [8, 32], strides = [1, 1]} : vector<8x48xf32> to vector<8x32xf32>
    %243 = arith.addf %241, %242 : vector<8x32xf32>
    %244 = arith.negf %243 : vector<8x32xf32>
    %245 = math.exp %244 : vector<8x32xf32>
    %cst_75 = arith.constant 1.000000e+00 : f32
    %246 = vector.broadcast %cst_75 : f32 to vector<8x32xf32>
    %247 = arith.addf %246, %245 : vector<8x32xf32>
    %248 = arith.divf %246, %247 : vector<8x32xf32>
    %249 = vector.extract_strided_slice %248 {offsets = [0, 0], sizes = [8, 16], strides = [1, 1]} : vector<8x32xf32> to vector<8x16xf32>
    %250 = vector.extract_strided_slice %248 {offsets = [0, 16], sizes = [8, 16], strides = [1, 1]} : vector<8x32xf32> to vector<8x16xf32>
    %251 = vector.extract_strided_slice %237 {offsets = [0, 32], sizes = [8, 16], strides = [1, 1]} : vector<8x48xf32> to vector<8x16xf32>
    %252 = vector.extract_strided_slice %240 {offsets = [0, 32], sizes = [8, 16], strides = [1, 1]} : vector<8x48xf32> to vector<8x16xf32>
    %253 = arith.mulf %249, %252 : vector<8x16xf32>
    %254 = arith.addf %251, %253 : vector<8x16xf32>
    %255 = math.tanh %254 : vector<8x16xf32>
    %cst_76 = arith.constant 1.000000e+00 : f32
    %256 = vector.broadcast %cst_76 : f32 to vector<8x16xf32>
    %257 = arith.subf %256, %250 : vector<8x16xf32>
    %258 = arith.mulf %257, %255 : vector<8x16xf32>
    %259 = arith.mulf %250, %190 : vector<8x16xf32>
    %260 = arith.addf %258, %259 : vector<8x16xf32>
    %261 = tpu.concatenate %260, %213 in 1 : vector<8x16xf32>, vector<8x16xf32> -> vector<8x32xf32>
    %c0_77 = arith.constant 0 : index
    %c0_78 = arith.constant 0 : index
    %c0_79 = arith.constant 0 : index
    %262 = vector.load %arg7[%c0_77, %c0_78, %c0_79] : memref<2x32x64xf32, #tpu.memory_space<vmem>>, vector<1x32x64xf32>
    %263 = vector.shape_cast %262 : vector<1x32x64xf32> to vector<32x64xf32>
    %cst_80 = arith.constant dense<0.000000e+00> : vector<8x64xf32>
    %264 = tpu.matmul %261, %263, %cst_80 {dimension_numbers = #tpu.dot_dimension_numbers<[1], [0], [0], [1], [0, 0, 1, 1], [], []>} : vector<8x32xf32>, vector<32x64xf32>, vector<8x64xf32> -> vector<8x64xf32>
    %265 = arith.addf %264, %19 : vector<8x64xf32>
    %266 = vector.extract_strided_slice %265 {offsets = [0, 0], sizes = [8, 32], strides = [1, 1]} : vector<8x64xf32> to vector<8x32xf32>
    %267 = arith.negf %266 : vector<8x32xf32>
    %268 = math.exp %267 : vector<8x32xf32>
    %cst_81 = arith.constant 1.000000e+00 : f32
    %269 = vector.broadcast %cst_81 : f32 to vector<8x32xf32>
    %270 = arith.addf %269, %268 : vector<8x32xf32>
    %271 = arith.divf %269, %270 : vector<8x32xf32>
    %272 = vector.extract_strided_slice %271 {offsets = [0, 0], sizes = [8, 16], strides = [1, 1]} : vector<8x32xf32> to vector<8x16xf32>
    %273 = vector.extract_strided_slice %271 {offsets = [0, 16], sizes = [8, 16], strides = [1, 1]} : vector<8x32xf32> to vector<8x16xf32>
    %274 = vector.extract_strided_slice %265 {offsets = [0, 32], sizes = [8, 16], strides = [1, 1]} : vector<8x64xf32> to vector<8x16xf32>
    %275 = vector.extract_strided_slice %265 {offsets = [0, 48], sizes = [8, 16], strides = [1, 1]} : vector<8x64xf32> to vector<8x16xf32>
    %276 = arith.mulf %272, %275 : vector<8x16xf32>
    %277 = arith.addf %274, %276 : vector<8x16xf32>
    %278 = math.tanh %277 : vector<8x16xf32>
    %cst_82 = arith.constant 1.000000e+00 : f32
    %279 = vector.broadcast %cst_82 : f32 to vector<8x16xf32>
    %280 = arith.subf %279, %273 : vector<8x16xf32>
    %281 = arith.mulf %280, %278 : vector<8x16xf32>
    %282 = arith.mulf %273, %213 : vector<8x16xf32>
    %283 = arith.addf %281, %282 : vector<8x16xf32>
    %284 = tpu.concatenate %283, %236 in 1 : vector<8x16xf32>, vector<8x16xf32> -> vector<8x32xf32>
    %c1_83 = arith.constant 1 : index
    %c0_84 = arith.constant 0 : index
    %c0_85 = arith.constant 0 : index
    %285 = vector.load %arg7[%c1_83, %c0_84, %c0_85] : memref<2x32x64xf32, #tpu.memory_space<vmem>>, vector<1x32x64xf32>
    %286 = vector.shape_cast %285 : vector<1x32x64xf32> to vector<32x64xf32>
    %cst_86 = arith.constant dense<0.000000e+00> : vector<8x64xf32>
    %287 = tpu.matmul %284, %286, %cst_86 {dimension_numbers = #tpu.dot_dimension_numbers<[1], [0], [0], [1], [0, 0, 1, 1], [], []>} : vector<8x32xf32>, vector<32x64xf32>, vector<8x64xf32> -> vector<8x64xf32>
    %288 = arith.addf %287, %23 : vector<8x64xf32>
    %289 = vector.extract_strided_slice %288 {offsets = [0, 0], sizes = [8, 32], strides = [1, 1]} : vector<8x64xf32> to vector<8x32xf32>
    %290 = arith.negf %289 : vector<8x32xf32>
    %291 = math.exp %290 : vector<8x32xf32>
    %cst_87 = arith.constant 1.000000e+00 : f32
    %292 = vector.broadcast %cst_87 : f32 to vector<8x32xf32>
    %293 = arith.addf %292, %291 : vector<8x32xf32>
    %294 = arith.divf %292, %293 : vector<8x32xf32>
    %295 = vector.extract_strided_slice %294 {offsets = [0, 0], sizes = [8, 16], strides = [1, 1]} : vector<8x32xf32> to vector<8x16xf32>
    %296 = vector.extract_strided_slice %294 {offsets = [0, 16], sizes = [8, 16], strides = [1, 1]} : vector<8x32xf32> to vector<8x16xf32>
    %297 = vector.extract_strided_slice %288 {offsets = [0, 32], sizes = [8, 16], strides = [1, 1]} : vector<8x64xf32> to vector<8x16xf32>
    %298 = vector.extract_strided_slice %288 {offsets = [0, 48], sizes = [8, 16], strides = [1, 1]} : vector<8x64xf32> to vector<8x16xf32>
    %299 = arith.mulf %295, %298 : vector<8x16xf32>
    %300 = arith.addf %297, %299 : vector<8x16xf32>
    %301 = math.tanh %300 : vector<8x16xf32>
    %cst_88 = arith.constant 1.000000e+00 : f32
    %302 = vector.broadcast %cst_88 : f32 to vector<8x16xf32>
    %303 = arith.subf %302, %296 : vector<8x16xf32>
    %304 = arith.mulf %303, %301 : vector<8x16xf32>
    %305 = arith.mulf %296, %236 : vector<8x16xf32>
    %306 = arith.addf %304, %305 : vector<8x16xf32>
    %307 = vector.extract_strided_slice %12 {offsets = [32, 0], sizes = [8, 48], strides = [1, 1]} : vector<64x48xf32> to vector<8x48xf32>
    %c0_89 = arith.constant 0 : index
    %c0_90 = arith.constant 0 : index
    %308 = vector.load %arg5[%c0_89, %c0_90] : memref<16x48xf32, #tpu.memory_space<vmem>>, vector<16x48xf32>
    %cst_91 = arith.constant dense<0.000000e+00> : vector<8x48xf32>
    %309 = tpu.matmul %260, %308, %cst_91 {dimension_numbers = #tpu.dot_dimension_numbers<[1], [0], [0], [1], [0, 0, 1, 1], [], []>} : vector<8x16xf32>, vector<16x48xf32>, vector<8x48xf32> -> vector<8x48xf32>
    %310 = arith.addf %309, %15 : vector<8x48xf32>
    %311 = vector.extract_strided_slice %307 {offsets = [0, 0], sizes = [8, 32], strides = [1, 1]} : vector<8x48xf32> to vector<8x32xf32>
    %312 = vector.extract_strided_slice %310 {offsets = [0, 0], sizes = [8, 32], strides = [1, 1]} : vector<8x48xf32> to vector<8x32xf32>
    %313 = arith.addf %311, %312 : vector<8x32xf32>
    %314 = arith.negf %313 : vector<8x32xf32>
    %315 = math.exp %314 : vector<8x32xf32>
    %cst_92 = arith.constant 1.000000e+00 : f32
    %316 = vector.broadcast %cst_92 : f32 to vector<8x32xf32>
    %317 = arith.addf %316, %315 : vector<8x32xf32>
    %318 = arith.divf %316, %317 : vector<8x32xf32>
    %319 = vector.extract_strided_slice %318 {offsets = [0, 0], sizes = [8, 16], strides = [1, 1]} : vector<8x32xf32> to vector<8x16xf32>
    %320 = vector.extract_strided_slice %318 {offsets = [0, 16], sizes = [8, 16], strides = [1, 1]} : vector<8x32xf32> to vector<8x16xf32>
    %321 = vector.extract_strided_slice %307 {offsets = [0, 32], sizes = [8, 16], strides = [1, 1]} : vector<8x48xf32> to vector<8x16xf32>
    %322 = vector.extract_strided_slice %310 {offsets = [0, 32], sizes = [8, 16], strides = [1, 1]} : vector<8x48xf32> to vector<8x16xf32>
    %323 = arith.mulf %319, %322 : vector<8x16xf32>
    %324 = arith.addf %321, %323 : vector<8x16xf32>
    %325 = math.tanh %324 : vector<8x16xf32>
    %cst_93 = arith.constant 1.000000e+00 : f32
    %326 = vector.broadcast %cst_93 : f32 to vector<8x16xf32>
    %327 = arith.subf %326, %320 : vector<8x16xf32>
    %328 = arith.mulf %327, %325 : vector<8x16xf32>
    %329 = arith.mulf %320, %260 : vector<8x16xf32>
    %330 = arith.addf %328, %329 : vector<8x16xf32>
    %331 = tpu.concatenate %330, %283 in 1 : vector<8x16xf32>, vector<8x16xf32> -> vector<8x32xf32>
    %c0_94 = arith.constant 0 : index
    %c0_95 = arith.constant 0 : index
    %c0_96 = arith.constant 0 : index
    %332 = vector.load %arg7[%c0_94, %c0_95, %c0_96] : memref<2x32x64xf32, #tpu.memory_space<vmem>>, vector<1x32x64xf32>
    %333 = vector.shape_cast %332 : vector<1x32x64xf32> to vector<32x64xf32>
    %cst_97 = arith.constant dense<0.000000e+00> : vector<8x64xf32>
    %334 = tpu.matmul %331, %333, %cst_97 {dimension_numbers = #tpu.dot_dimension_numbers<[1], [0], [0], [1], [0, 0, 1, 1], [], []>} : vector<8x32xf32>, vector<32x64xf32>, vector<8x64xf32> -> vector<8x64xf32>
    %335 = arith.addf %334, %19 : vector<8x64xf32>
    %336 = vector.extract_strided_slice %335 {offsets = [0, 0], sizes = [8, 32], strides = [1, 1]} : vector<8x64xf32> to vector<8x32xf32>
    %337 = arith.negf %336 : vector<8x32xf32>
    %338 = math.exp %337 : vector<8x32xf32>
    %cst_98 = arith.constant 1.000000e+00 : f32
    %339 = vector.broadcast %cst_98 : f32 to vector<8x32xf32>
    %340 = arith.addf %339, %338 : vector<8x32xf32>
    %341 = arith.divf %339, %340 : vector<8x32xf32>
    %342 = vector.extract_strided_slice %341 {offsets = [0, 0], sizes = [8, 16], strides = [1, 1]} : vector<8x32xf32> to vector<8x16xf32>
    %343 = vector.extract_strided_slice %341 {offsets = [0, 16], sizes = [8, 16], strides = [1, 1]} : vector<8x32xf32> to vector<8x16xf32>
    %344 = vector.extract_strided_slice %335 {offsets = [0, 32], sizes = [8, 16], strides = [1, 1]} : vector<8x64xf32> to vector<8x16xf32>
    %345 = vector.extract_strided_slice %335 {offsets = [0, 48], sizes = [8, 16], strides = [1, 1]} : vector<8x64xf32> to vector<8x16xf32>
    %346 = arith.mulf %342, %345 : vector<8x16xf32>
    %347 = arith.addf %344, %346 : vector<8x16xf32>
    %348 = math.tanh %347 : vector<8x16xf32>
    %cst_99 = arith.constant 1.000000e+00 : f32
    %349 = vector.broadcast %cst_99 : f32 to vector<8x16xf32>
    %350 = arith.subf %349, %343 : vector<8x16xf32>
    %351 = arith.mulf %350, %348 : vector<8x16xf32>
    %352 = arith.mulf %343, %283 : vector<8x16xf32>
    %353 = arith.addf %351, %352 : vector<8x16xf32>
    %354 = tpu.concatenate %353, %306 in 1 : vector<8x16xf32>, vector<8x16xf32> -> vector<8x32xf32>
    %c1_100 = arith.constant 1 : index
    %c0_101 = arith.constant 0 : index
    %c0_102 = arith.constant 0 : index
    %355 = vector.load %arg7[%c1_100, %c0_101, %c0_102] : memref<2x32x64xf32, #tpu.memory_space<vmem>>, vector<1x32x64xf32>
    %356 = vector.shape_cast %355 : vector<1x32x64xf32> to vector<32x64xf32>
    %cst_103 = arith.constant dense<0.000000e+00> : vector<8x64xf32>
    %357 = tpu.matmul %354, %356, %cst_103 {dimension_numbers = #tpu.dot_dimension_numbers<[1], [0], [0], [1], [0, 0, 1, 1], [], []>} : vector<8x32xf32>, vector<32x64xf32>, vector<8x64xf32> -> vector<8x64xf32>
    %358 = arith.addf %357, %23 : vector<8x64xf32>
    %359 = vector.extract_strided_slice %358 {offsets = [0, 0], sizes = [8, 32], strides = [1, 1]} : vector<8x64xf32> to vector<8x32xf32>
    %360 = arith.negf %359 : vector<8x32xf32>
    %361 = math.exp %360 : vector<8x32xf32>
    %cst_104 = arith.constant 1.000000e+00 : f32
    %362 = vector.broadcast %cst_104 : f32 to vector<8x32xf32>
    %363 = arith.addf %362, %361 : vector<8x32xf32>
    %364 = arith.divf %362, %363 : vector<8x32xf32>
    %365 = vector.extract_strided_slice %364 {offsets = [0, 0], sizes = [8, 16], strides = [1, 1]} : vector<8x32xf32> to vector<8x16xf32>
    %366 = vector.extract_strided_slice %364 {offsets = [0, 16], sizes = [8, 16], strides = [1, 1]} : vector<8x32xf32> to vector<8x16xf32>
    %367 = vector.extract_strided_slice %358 {offsets = [0, 32], sizes = [8, 16], strides = [1, 1]} : vector<8x64xf32> to vector<8x16xf32>
    %368 = vector.extract_strided_slice %358 {offsets = [0, 48], sizes = [8, 16], strides = [1, 1]} : vector<8x64xf32> to vector<8x16xf32>
    %369 = arith.mulf %365, %368 : vector<8x16xf32>
    %370 = arith.addf %367, %369 : vector<8x16xf32>
    %371 = math.tanh %370 : vector<8x16xf32>
    %cst_105 = arith.constant 1.000000e+00 : f32
    %372 = vector.broadcast %cst_105 : f32 to vector<8x16xf32>
    %373 = arith.subf %372, %366 : vector<8x16xf32>
    %374 = arith.mulf %373, %371 : vector<8x16xf32>
    %375 = arith.mulf %366, %306 : vector<8x16xf32>
    %376 = arith.addf %374, %375 : vector<8x16xf32>
    %377 = vector.extract_strided_slice %12 {offsets = [40, 0], sizes = [8, 48], strides = [1, 1]} : vector<64x48xf32> to vector<8x48xf32>
    %c0_106 = arith.constant 0 : index
    %c0_107 = arith.constant 0 : index
    %378 = vector.load %arg5[%c0_106, %c0_107] : memref<16x48xf32, #tpu.memory_space<vmem>>, vector<16x48xf32>
    %cst_108 = arith.constant dense<0.000000e+00> : vector<8x48xf32>
    %379 = tpu.matmul %330, %378, %cst_108 {dimension_numbers = #tpu.dot_dimension_numbers<[1], [0], [0], [1], [0, 0, 1, 1], [], []>} : vector<8x16xf32>, vector<16x48xf32>, vector<8x48xf32> -> vector<8x48xf32>
    %380 = arith.addf %379, %15 : vector<8x48xf32>
    %381 = vector.extract_strided_slice %377 {offsets = [0, 0], sizes = [8, 32], strides = [1, 1]} : vector<8x48xf32> to vector<8x32xf32>
    %382 = vector.extract_strided_slice %380 {offsets = [0, 0], sizes = [8, 32], strides = [1, 1]} : vector<8x48xf32> to vector<8x32xf32>
    %383 = arith.addf %381, %382 : vector<8x32xf32>
    %384 = arith.negf %383 : vector<8x32xf32>
    %385 = math.exp %384 : vector<8x32xf32>
    %cst_109 = arith.constant 1.000000e+00 : f32
    %386 = vector.broadcast %cst_109 : f32 to vector<8x32xf32>
    %387 = arith.addf %386, %385 : vector<8x32xf32>
    %388 = arith.divf %386, %387 : vector<8x32xf32>
    %389 = vector.extract_strided_slice %388 {offsets = [0, 0], sizes = [8, 16], strides = [1, 1]} : vector<8x32xf32> to vector<8x16xf32>
    %390 = vector.extract_strided_slice %388 {offsets = [0, 16], sizes = [8, 16], strides = [1, 1]} : vector<8x32xf32> to vector<8x16xf32>
    %391 = vector.extract_strided_slice %377 {offsets = [0, 32], sizes = [8, 16], strides = [1, 1]} : vector<8x48xf32> to vector<8x16xf32>
    %392 = vector.extract_strided_slice %380 {offsets = [0, 32], sizes = [8, 16], strides = [1, 1]} : vector<8x48xf32> to vector<8x16xf32>
    %393 = arith.mulf %389, %392 : vector<8x16xf32>
    %394 = arith.addf %391, %393 : vector<8x16xf32>
    %395 = math.tanh %394 : vector<8x16xf32>
    %cst_110 = arith.constant 1.000000e+00 : f32
    %396 = vector.broadcast %cst_110 : f32 to vector<8x16xf32>
    %397 = arith.subf %396, %390 : vector<8x16xf32>
    %398 = arith.mulf %397, %395 : vector<8x16xf32>
    %399 = arith.mulf %390, %330 : vector<8x16xf32>
    %400 = arith.addf %398, %399 : vector<8x16xf32>
    %401 = tpu.concatenate %400, %353 in 1 : vector<8x16xf32>, vector<8x16xf32> -> vector<8x32xf32>
    %c0_111 = arith.constant 0 : index
    %c0_112 = arith.constant 0 : index
    %c0_113 = arith.constant 0 : index
    %402 = vector.load %arg7[%c0_111, %c0_112, %c0_113] : memref<2x32x64xf32, #tpu.memory_space<vmem>>, vector<1x32x64xf32>
    %403 = vector.shape_cast %402 : vector<1x32x64xf32> to vector<32x64xf32>
    %cst_114 = arith.constant dense<0.000000e+00> : vector<8x64xf32>
    %404 = tpu.matmul %401, %403, %cst_114 {dimension_numbers = #tpu.dot_dimension_numbers<[1], [0], [0], [1], [0, 0, 1, 1], [], []>} : vector<8x32xf32>, vector<32x64xf32>, vector<8x64xf32> -> vector<8x64xf32>
    %405 = arith.addf %404, %19 : vector<8x64xf32>
    %406 = vector.extract_strided_slice %405 {offsets = [0, 0], sizes = [8, 32], strides = [1, 1]} : vector<8x64xf32> to vector<8x32xf32>
    %407 = arith.negf %406 : vector<8x32xf32>
    %408 = math.exp %407 : vector<8x32xf32>
    %cst_115 = arith.constant 1.000000e+00 : f32
    %409 = vector.broadcast %cst_115 : f32 to vector<8x32xf32>
    %410 = arith.addf %409, %408 : vector<8x32xf32>
    %411 = arith.divf %409, %410 : vector<8x32xf32>
    %412 = vector.extract_strided_slice %411 {offsets = [0, 0], sizes = [8, 16], strides = [1, 1]} : vector<8x32xf32> to vector<8x16xf32>
    %413 = vector.extract_strided_slice %411 {offsets = [0, 16], sizes = [8, 16], strides = [1, 1]} : vector<8x32xf32> to vector<8x16xf32>
    %414 = vector.extract_strided_slice %405 {offsets = [0, 32], sizes = [8, 16], strides = [1, 1]} : vector<8x64xf32> to vector<8x16xf32>
    %415 = vector.extract_strided_slice %405 {offsets = [0, 48], sizes = [8, 16], strides = [1, 1]} : vector<8x64xf32> to vector<8x16xf32>
    %416 = arith.mulf %412, %415 : vector<8x16xf32>
    %417 = arith.addf %414, %416 : vector<8x16xf32>
    %418 = math.tanh %417 : vector<8x16xf32>
    %cst_116 = arith.constant 1.000000e+00 : f32
    %419 = vector.broadcast %cst_116 : f32 to vector<8x16xf32>
    %420 = arith.subf %419, %413 : vector<8x16xf32>
    %421 = arith.mulf %420, %418 : vector<8x16xf32>
    %422 = arith.mulf %413, %353 : vector<8x16xf32>
    %423 = arith.addf %421, %422 : vector<8x16xf32>
    %424 = tpu.concatenate %423, %376 in 1 : vector<8x16xf32>, vector<8x16xf32> -> vector<8x32xf32>
    %c1_117 = arith.constant 1 : index
    %c0_118 = arith.constant 0 : index
    %c0_119 = arith.constant 0 : index
    %425 = vector.load %arg7[%c1_117, %c0_118, %c0_119] : memref<2x32x64xf32, #tpu.memory_space<vmem>>, vector<1x32x64xf32>
    %426 = vector.shape_cast %425 : vector<1x32x64xf32> to vector<32x64xf32>
    %cst_120 = arith.constant dense<0.000000e+00> : vector<8x64xf32>
    %427 = tpu.matmul %424, %426, %cst_120 {dimension_numbers = #tpu.dot_dimension_numbers<[1], [0], [0], [1], [0, 0, 1, 1], [], []>} : vector<8x32xf32>, vector<32x64xf32>, vector<8x64xf32> -> vector<8x64xf32>
    %428 = arith.addf %427, %23 : vector<8x64xf32>
    %429 = vector.extract_strided_slice %428 {offsets = [0, 0], sizes = [8, 32], strides = [1, 1]} : vector<8x64xf32> to vector<8x32xf32>
    %430 = arith.negf %429 : vector<8x32xf32>
    %431 = math.exp %430 : vector<8x32xf32>
    %cst_121 = arith.constant 1.000000e+00 : f32
    %432 = vector.broadcast %cst_121 : f32 to vector<8x32xf32>
    %433 = arith.addf %432, %431 : vector<8x32xf32>
    %434 = arith.divf %432, %433 : vector<8x32xf32>
    %435 = vector.extract_strided_slice %434 {offsets = [0, 0], sizes = [8, 16], strides = [1, 1]} : vector<8x32xf32> to vector<8x16xf32>
    %436 = vector.extract_strided_slice %434 {offsets = [0, 16], sizes = [8, 16], strides = [1, 1]} : vector<8x32xf32> to vector<8x16xf32>
    %437 = vector.extract_strided_slice %428 {offsets = [0, 32], sizes = [8, 16], strides = [1, 1]} : vector<8x64xf32> to vector<8x16xf32>
    %438 = vector.extract_strided_slice %428 {offsets = [0, 48], sizes = [8, 16], strides = [1, 1]} : vector<8x64xf32> to vector<8x16xf32>
    %439 = arith.mulf %435, %438 : vector<8x16xf32>
    %440 = arith.addf %437, %439 : vector<8x16xf32>
    %441 = math.tanh %440 : vector<8x16xf32>
    %cst_122 = arith.constant 1.000000e+00 : f32
    %442 = vector.broadcast %cst_122 : f32 to vector<8x16xf32>
    %443 = arith.subf %442, %436 : vector<8x16xf32>
    %444 = arith.mulf %443, %441 : vector<8x16xf32>
    %445 = arith.mulf %436, %376 : vector<8x16xf32>
    %446 = arith.addf %444, %445 : vector<8x16xf32>
    %447 = vector.extract_strided_slice %12 {offsets = [48, 0], sizes = [8, 48], strides = [1, 1]} : vector<64x48xf32> to vector<8x48xf32>
    %c0_123 = arith.constant 0 : index
    %c0_124 = arith.constant 0 : index
    %448 = vector.load %arg5[%c0_123, %c0_124] : memref<16x48xf32, #tpu.memory_space<vmem>>, vector<16x48xf32>
    %cst_125 = arith.constant dense<0.000000e+00> : vector<8x48xf32>
    %449 = tpu.matmul %400, %448, %cst_125 {dimension_numbers = #tpu.dot_dimension_numbers<[1], [0], [0], [1], [0, 0, 1, 1], [], []>} : vector<8x16xf32>, vector<16x48xf32>, vector<8x48xf32> -> vector<8x48xf32>
    %450 = arith.addf %449, %15 : vector<8x48xf32>
    %451 = vector.extract_strided_slice %447 {offsets = [0, 0], sizes = [8, 32], strides = [1, 1]} : vector<8x48xf32> to vector<8x32xf32>
    %452 = vector.extract_strided_slice %450 {offsets = [0, 0], sizes = [8, 32], strides = [1, 1]} : vector<8x48xf32> to vector<8x32xf32>
    %453 = arith.addf %451, %452 : vector<8x32xf32>
    %454 = arith.negf %453 : vector<8x32xf32>
    %455 = math.exp %454 : vector<8x32xf32>
    %cst_126 = arith.constant 1.000000e+00 : f32
    %456 = vector.broadcast %cst_126 : f32 to vector<8x32xf32>
    %457 = arith.addf %456, %455 : vector<8x32xf32>
    %458 = arith.divf %456, %457 : vector<8x32xf32>
    %459 = vector.extract_strided_slice %458 {offsets = [0, 0], sizes = [8, 16], strides = [1, 1]} : vector<8x32xf32> to vector<8x16xf32>
    %460 = vector.extract_strided_slice %458 {offsets = [0, 16], sizes = [8, 16], strides = [1, 1]} : vector<8x32xf32> to vector<8x16xf32>
    %461 = vector.extract_strided_slice %447 {offsets = [0, 32], sizes = [8, 16], strides = [1, 1]} : vector<8x48xf32> to vector<8x16xf32>
    %462 = vector.extract_strided_slice %450 {offsets = [0, 32], sizes = [8, 16], strides = [1, 1]} : vector<8x48xf32> to vector<8x16xf32>
    %463 = arith.mulf %459, %462 : vector<8x16xf32>
    %464 = arith.addf %461, %463 : vector<8x16xf32>
    %465 = math.tanh %464 : vector<8x16xf32>
    %cst_127 = arith.constant 1.000000e+00 : f32
    %466 = vector.broadcast %cst_127 : f32 to vector<8x16xf32>
    %467 = arith.subf %466, %460 : vector<8x16xf32>
    %468 = arith.mulf %467, %465 : vector<8x16xf32>
    %469 = arith.mulf %460, %400 : vector<8x16xf32>
    %470 = arith.addf %468, %469 : vector<8x16xf32>
    %471 = tpu.concatenate %470, %423 in 1 : vector<8x16xf32>, vector<8x16xf32> -> vector<8x32xf32>
    %c0_128 = arith.constant 0 : index
    %c0_129 = arith.constant 0 : index
    %c0_130 = arith.constant 0 : index
    %472 = vector.load %arg7[%c0_128, %c0_129, %c0_130] : memref<2x32x64xf32, #tpu.memory_space<vmem>>, vector<1x32x64xf32>
    %473 = vector.shape_cast %472 : vector<1x32x64xf32> to vector<32x64xf32>
    %cst_131 = arith.constant dense<0.000000e+00> : vector<8x64xf32>
    %474 = tpu.matmul %471, %473, %cst_131 {dimension_numbers = #tpu.dot_dimension_numbers<[1], [0], [0], [1], [0, 0, 1, 1], [], []>} : vector<8x32xf32>, vector<32x64xf32>, vector<8x64xf32> -> vector<8x64xf32>
    %475 = arith.addf %474, %19 : vector<8x64xf32>
    %476 = vector.extract_strided_slice %475 {offsets = [0, 0], sizes = [8, 32], strides = [1, 1]} : vector<8x64xf32> to vector<8x32xf32>
    %477 = arith.negf %476 : vector<8x32xf32>
    %478 = math.exp %477 : vector<8x32xf32>
    %cst_132 = arith.constant 1.000000e+00 : f32
    %479 = vector.broadcast %cst_132 : f32 to vector<8x32xf32>
    %480 = arith.addf %479, %478 : vector<8x32xf32>
    %481 = arith.divf %479, %480 : vector<8x32xf32>
    %482 = vector.extract_strided_slice %481 {offsets = [0, 0], sizes = [8, 16], strides = [1, 1]} : vector<8x32xf32> to vector<8x16xf32>
    %483 = vector.extract_strided_slice %481 {offsets = [0, 16], sizes = [8, 16], strides = [1, 1]} : vector<8x32xf32> to vector<8x16xf32>
    %484 = vector.extract_strided_slice %475 {offsets = [0, 32], sizes = [8, 16], strides = [1, 1]} : vector<8x64xf32> to vector<8x16xf32>
    %485 = vector.extract_strided_slice %475 {offsets = [0, 48], sizes = [8, 16], strides = [1, 1]} : vector<8x64xf32> to vector<8x16xf32>
    %486 = arith.mulf %482, %485 : vector<8x16xf32>
    %487 = arith.addf %484, %486 : vector<8x16xf32>
    %488 = math.tanh %487 : vector<8x16xf32>
    %cst_133 = arith.constant 1.000000e+00 : f32
    %489 = vector.broadcast %cst_133 : f32 to vector<8x16xf32>
    %490 = arith.subf %489, %483 : vector<8x16xf32>
    %491 = arith.mulf %490, %488 : vector<8x16xf32>
    %492 = arith.mulf %483, %423 : vector<8x16xf32>
    %493 = arith.addf %491, %492 : vector<8x16xf32>
    %494 = tpu.concatenate %493, %446 in 1 : vector<8x16xf32>, vector<8x16xf32> -> vector<8x32xf32>
    %c1_134 = arith.constant 1 : index
    %c0_135 = arith.constant 0 : index
    %c0_136 = arith.constant 0 : index
    %495 = vector.load %arg7[%c1_134, %c0_135, %c0_136] : memref<2x32x64xf32, #tpu.memory_space<vmem>>, vector<1x32x64xf32>
    %496 = vector.shape_cast %495 : vector<1x32x64xf32> to vector<32x64xf32>
    %cst_137 = arith.constant dense<0.000000e+00> : vector<8x64xf32>
    %497 = tpu.matmul %494, %496, %cst_137 {dimension_numbers = #tpu.dot_dimension_numbers<[1], [0], [0], [1], [0, 0, 1, 1], [], []>} : vector<8x32xf32>, vector<32x64xf32>, vector<8x64xf32> -> vector<8x64xf32>
    %498 = arith.addf %497, %23 : vector<8x64xf32>
    %499 = vector.extract_strided_slice %498 {offsets = [0, 0], sizes = [8, 32], strides = [1, 1]} : vector<8x64xf32> to vector<8x32xf32>
    %500 = arith.negf %499 : vector<8x32xf32>
    %501 = math.exp %500 : vector<8x32xf32>
    %cst_138 = arith.constant 1.000000e+00 : f32
    %502 = vector.broadcast %cst_138 : f32 to vector<8x32xf32>
    %503 = arith.addf %502, %501 : vector<8x32xf32>
    %504 = arith.divf %502, %503 : vector<8x32xf32>
    %505 = vector.extract_strided_slice %504 {offsets = [0, 0], sizes = [8, 16], strides = [1, 1]} : vector<8x32xf32> to vector<8x16xf32>
    %506 = vector.extract_strided_slice %504 {offsets = [0, 16], sizes = [8, 16], strides = [1, 1]} : vector<8x32xf32> to vector<8x16xf32>
    %507 = vector.extract_strided_slice %498 {offsets = [0, 32], sizes = [8, 16], strides = [1, 1]} : vector<8x64xf32> to vector<8x16xf32>
    %508 = vector.extract_strided_slice %498 {offsets = [0, 48], sizes = [8, 16], strides = [1, 1]} : vector<8x64xf32> to vector<8x16xf32>
    %509 = arith.mulf %505, %508 : vector<8x16xf32>
    %510 = arith.addf %507, %509 : vector<8x16xf32>
    %511 = math.tanh %510 : vector<8x16xf32>
    %cst_139 = arith.constant 1.000000e+00 : f32
    %512 = vector.broadcast %cst_139 : f32 to vector<8x16xf32>
    %513 = arith.subf %512, %506 : vector<8x16xf32>
    %514 = arith.mulf %513, %511 : vector<8x16xf32>
    %515 = arith.mulf %506, %446 : vector<8x16xf32>
    %516 = arith.addf %514, %515 : vector<8x16xf32>
    %517 = vector.extract_strided_slice %12 {offsets = [56, 0], sizes = [8, 48], strides = [1, 1]} : vector<64x48xf32> to vector<8x48xf32>
    %c0_140 = arith.constant 0 : index
    %c0_141 = arith.constant 0 : index
    %518 = vector.load %arg5[%c0_140, %c0_141] : memref<16x48xf32, #tpu.memory_space<vmem>>, vector<16x48xf32>
    %cst_142 = arith.constant dense<0.000000e+00> : vector<8x48xf32>
    %519 = tpu.matmul %470, %518, %cst_142 {dimension_numbers = #tpu.dot_dimension_numbers<[1], [0], [0], [1], [0, 0, 1, 1], [], []>} : vector<8x16xf32>, vector<16x48xf32>, vector<8x48xf32> -> vector<8x48xf32>
    %520 = arith.addf %519, %15 : vector<8x48xf32>
    %521 = vector.extract_strided_slice %517 {offsets = [0, 0], sizes = [8, 32], strides = [1, 1]} : vector<8x48xf32> to vector<8x32xf32>
    %522 = vector.extract_strided_slice %520 {offsets = [0, 0], sizes = [8, 32], strides = [1, 1]} : vector<8x48xf32> to vector<8x32xf32>
    %523 = arith.addf %521, %522 : vector<8x32xf32>
    %524 = arith.negf %523 : vector<8x32xf32>
    %525 = math.exp %524 : vector<8x32xf32>
    %cst_143 = arith.constant 1.000000e+00 : f32
    %526 = vector.broadcast %cst_143 : f32 to vector<8x32xf32>
    %527 = arith.addf %526, %525 : vector<8x32xf32>
    %528 = arith.divf %526, %527 : vector<8x32xf32>
    %529 = vector.extract_strided_slice %528 {offsets = [0, 0], sizes = [8, 16], strides = [1, 1]} : vector<8x32xf32> to vector<8x16xf32>
    %530 = vector.extract_strided_slice %528 {offsets = [0, 16], sizes = [8, 16], strides = [1, 1]} : vector<8x32xf32> to vector<8x16xf32>
    %531 = vector.extract_strided_slice %517 {offsets = [0, 32], sizes = [8, 16], strides = [1, 1]} : vector<8x48xf32> to vector<8x16xf32>
    %532 = vector.extract_strided_slice %520 {offsets = [0, 32], sizes = [8, 16], strides = [1, 1]} : vector<8x48xf32> to vector<8x16xf32>
    %533 = arith.mulf %529, %532 : vector<8x16xf32>
    %534 = arith.addf %531, %533 : vector<8x16xf32>
    %535 = math.tanh %534 : vector<8x16xf32>
    %cst_144 = arith.constant 1.000000e+00 : f32
    %536 = vector.broadcast %cst_144 : f32 to vector<8x16xf32>
    %537 = arith.subf %536, %530 : vector<8x16xf32>
    %538 = arith.mulf %537, %535 : vector<8x16xf32>
    %539 = arith.mulf %530, %470 : vector<8x16xf32>
    %540 = arith.addf %538, %539 : vector<8x16xf32>
    %541 = tpu.concatenate %540, %493 in 1 : vector<8x16xf32>, vector<8x16xf32> -> vector<8x32xf32>
    %c0_145 = arith.constant 0 : index
    %c0_146 = arith.constant 0 : index
    %c0_147 = arith.constant 0 : index
    %542 = vector.load %arg7[%c0_145, %c0_146, %c0_147] : memref<2x32x64xf32, #tpu.memory_space<vmem>>, vector<1x32x64xf32>
    %543 = vector.shape_cast %542 : vector<1x32x64xf32> to vector<32x64xf32>
    %cst_148 = arith.constant dense<0.000000e+00> : vector<8x64xf32>
    %544 = tpu.matmul %541, %543, %cst_148 {dimension_numbers = #tpu.dot_dimension_numbers<[1], [0], [0], [1], [0, 0, 1, 1], [], []>} : vector<8x32xf32>, vector<32x64xf32>, vector<8x64xf32> -> vector<8x64xf32>
    %545 = arith.addf %544, %19 : vector<8x64xf32>
    %546 = vector.extract_strided_slice %545 {offsets = [0, 0], sizes = [8, 32], strides = [1, 1]} : vector<8x64xf32> to vector<8x32xf32>
    %547 = arith.negf %546 : vector<8x32xf32>
    %548 = math.exp %547 : vector<8x32xf32>
    %cst_149 = arith.constant 1.000000e+00 : f32
    %549 = vector.broadcast %cst_149 : f32 to vector<8x32xf32>
    %550 = arith.addf %549, %548 : vector<8x32xf32>
    %551 = arith.divf %549, %550 : vector<8x32xf32>
    %552 = vector.extract_strided_slice %551 {offsets = [0, 0], sizes = [8, 16], strides = [1, 1]} : vector<8x32xf32> to vector<8x16xf32>
    %553 = vector.extract_strided_slice %551 {offsets = [0, 16], sizes = [8, 16], strides = [1, 1]} : vector<8x32xf32> to vector<8x16xf32>
    %554 = vector.extract_strided_slice %545 {offsets = [0, 32], sizes = [8, 16], strides = [1, 1]} : vector<8x64xf32> to vector<8x16xf32>
    %555 = vector.extract_strided_slice %545 {offsets = [0, 48], sizes = [8, 16], strides = [1, 1]} : vector<8x64xf32> to vector<8x16xf32>
    %556 = arith.mulf %552, %555 : vector<8x16xf32>
    %557 = arith.addf %554, %556 : vector<8x16xf32>
    %558 = math.tanh %557 : vector<8x16xf32>
    %cst_150 = arith.constant 1.000000e+00 : f32
    %559 = vector.broadcast %cst_150 : f32 to vector<8x16xf32>
    %560 = arith.subf %559, %553 : vector<8x16xf32>
    %561 = arith.mulf %560, %558 : vector<8x16xf32>
    %562 = arith.mulf %553, %493 : vector<8x16xf32>
    %563 = arith.addf %561, %562 : vector<8x16xf32>
    %564 = tpu.concatenate %563, %516 in 1 : vector<8x16xf32>, vector<8x16xf32> -> vector<8x32xf32>
    %c1_151 = arith.constant 1 : index
    %c0_152 = arith.constant 0 : index
    %c0_153 = arith.constant 0 : index
    %565 = vector.load %arg7[%c1_151, %c0_152, %c0_153] : memref<2x32x64xf32, #tpu.memory_space<vmem>>, vector<1x32x64xf32>
    %566 = vector.shape_cast %565 : vector<1x32x64xf32> to vector<32x64xf32>
    %cst_154 = arith.constant dense<0.000000e+00> : vector<8x64xf32>
    %567 = tpu.matmul %564, %566, %cst_154 {dimension_numbers = #tpu.dot_dimension_numbers<[1], [0], [0], [1], [0, 0, 1, 1], [], []>} : vector<8x32xf32>, vector<32x64xf32>, vector<8x64xf32> -> vector<8x64xf32>
    %568 = arith.addf %567, %23 : vector<8x64xf32>
    %569 = vector.extract_strided_slice %568 {offsets = [0, 0], sizes = [8, 32], strides = [1, 1]} : vector<8x64xf32> to vector<8x32xf32>
    %570 = arith.negf %569 : vector<8x32xf32>
    %571 = math.exp %570 : vector<8x32xf32>
    %cst_155 = arith.constant 1.000000e+00 : f32
    %572 = vector.broadcast %cst_155 : f32 to vector<8x32xf32>
    %573 = arith.addf %572, %571 : vector<8x32xf32>
    %574 = arith.divf %572, %573 : vector<8x32xf32>
    %575 = vector.extract_strided_slice %574 {offsets = [0, 0], sizes = [8, 16], strides = [1, 1]} : vector<8x32xf32> to vector<8x16xf32>
    %576 = vector.extract_strided_slice %574 {offsets = [0, 16], sizes = [8, 16], strides = [1, 1]} : vector<8x32xf32> to vector<8x16xf32>
    %577 = vector.extract_strided_slice %568 {offsets = [0, 32], sizes = [8, 16], strides = [1, 1]} : vector<8x64xf32> to vector<8x16xf32>
    %578 = vector.extract_strided_slice %568 {offsets = [0, 48], sizes = [8, 16], strides = [1, 1]} : vector<8x64xf32> to vector<8x16xf32>
    %579 = arith.mulf %575, %578 : vector<8x16xf32>
    %580 = arith.addf %577, %579 : vector<8x16xf32>
    %581 = math.tanh %580 : vector<8x16xf32>
    %cst_156 = arith.constant 1.000000e+00 : f32
    %582 = vector.broadcast %cst_156 : f32 to vector<8x16xf32>
    %583 = arith.subf %582, %576 : vector<8x16xf32>
    %584 = arith.mulf %583, %581 : vector<8x16xf32>
    %585 = arith.mulf %576, %516 : vector<8x16xf32>
    %586 = arith.addf %584, %585 : vector<8x16xf32>
    %c0_157 = arith.constant 0 : index
    %c0_158 = arith.constant 0 : index
    %c0_159 = arith.constant 0 : index
    %587 = vector.load %arg12[%c0_157, %c0_158, %c0_159] : memref<3x8x16xf32, #tpu.memory_space<vmem>>, vector<1x8x16xf32>
    %588 = vector.shape_cast %587 : vector<1x8x16xf32> to vector<8x16xf32>
    %589 = vector.shape_cast %540 : vector<8x16xf32> to vector<1x8x16xf32>
    tpu.vector_store %arg12[%c0_157, %c0_158, %c0_159], %589 {strides = array<i32>} : memref<3x8x16xf32, #tpu.memory_space<vmem>>, vector<1x8x16xf32>,
    %c1_160 = arith.constant 1 : index
    %c0_161 = arith.constant 0 : index
    %c0_162 = arith.constant 0 : index
    %590 = vector.load %arg12[%c1_160, %c0_161, %c0_162] : memref<3x8x16xf32, #tpu.memory_space<vmem>>, vector<1x8x16xf32>
    %591 = vector.shape_cast %590 : vector<1x8x16xf32> to vector<8x16xf32>
    %592 = vector.shape_cast %563 : vector<8x16xf32> to vector<1x8x16xf32>
    tpu.vector_store %arg12[%c1_160, %c0_161, %c0_162], %592 {strides = array<i32>} : memref<3x8x16xf32, #tpu.memory_space<vmem>>, vector<1x8x16xf32>,
    %c2 = arith.constant 2 : index
    %c0_163 = arith.constant 0 : index
    %c0_164 = arith.constant 0 : index
    %593 = vector.load %arg12[%c2, %c0_163, %c0_164] : memref<3x8x16xf32, #tpu.memory_space<vmem>>, vector<1x8x16xf32>
    %594 = vector.shape_cast %593 : vector<1x8x16xf32> to vector<8x16xf32>
    %595 = vector.shape_cast %586 : vector<8x16xf32> to vector<1x8x16xf32>
    tpu.vector_store %arg12[%c2, %c0_163, %c0_164], %595 {strides = array<i32>} : memref<3x8x16xf32, #tpu.memory_space<vmem>>, vector<1x8x16xf32>,
    %c0_165 = arith.constant 0 : index
    %c0_166 = arith.constant 0 : index
    %596 = vector.load %arg9[%c0_165, %c0_166] : memref<16x16xf32, #tpu.memory_space<vmem>>, vector<16x16xf32>
    %cst_167 = arith.constant dense<0.000000e+00> : vector<8x16xf32>
    %597 = tpu.matmul %586, %596, %cst_167 {dimension_numbers = #tpu.dot_dimension_numbers<[1], [0], [0], [1], [0, 0, 1, 1], [], []>} : vector<8x16xf32>, vector<16x16xf32>, vector<8x16xf32> -> vector<8x16xf32>
    %c0_168 = arith.constant 0 : index
    %c0_169 = arith.constant 0 : index
    %598 = vector.load %arg10[%c0_168, %c0_169] : memref<1x16xf32, #tpu.memory_space<vmem>>, vector<1x16xf32>
    %599 = vector.broadcast %598 : vector<1x16xf32> to vector<8x16xf32>
    %600 = arith.addf %597, %599 : vector<8x16xf32>
    %c0_170 = arith.constant 0 : index
    %c0_171 = arith.constant 0 : index
    %601 = vector.load %arg11[%c0_170, %c0_171] : memref<8x16xf32, #tpu.memory_space<vmem>>, vector<8x16xf32>
    tpu.vector_store %arg11[%c0_170, %c0_171], %600 {strides = array<i32>} : memref<8x16xf32, #tpu.memory_space<vmem>>, vector<8x16xf32>,
    return
  }
}

</mosaic_0001>

<llo_original>
// kernel: rnn_forward.1
$region0: #{rnn_forward.1}
  #allocation0 [shape = 'u32[]', space=smem, size = 0x4, offset = 0x4, fixed_abs, tag = 'smem constant byte address 0x4 - core index']
  #allocation1 [shape = 'u32[144,128]{1,0:T(1,128)}', space=vmem, size = 0x12000, scoped, tag = 'internal scratch']
  %s0 = inlined_call_operand.vmem [shape: f32[64,2], index: 0, kind: input, shape index: {}]
  %s1 = inlined_call_operand.vmem [shape: f32[2,16], index: 1, kind: input, shape index: {}]
  %s2 = inlined_call_operand.hbm [shape: f32[1,16], index: 2, kind: input, shape index: {}]
  %s3 = inlined_call_operand.vmem [shape: f32[16,48], index: 3, kind: input, shape index: {}]
  %s4 = inlined_call_operand.hbm [shape: f32[1,48], index: 4, kind: input, shape index: {}]
  %s5 = inlined_call_operand.vmem [shape: f32[16,48], index: 5, kind: input, shape index: {}]
  %s6 = inlined_call_operand.hbm [shape: f32[1,48], index: 6, kind: input, shape index: {}]
  %s7 = inlined_call_operand.vmem [shape: f32[2,32,64], index: 7, kind: input, shape index: {}]
  %s8 = inlined_call_operand.hbm [shape: f32[2,1,64], index: 8, kind: input, shape index: {}]
  %s9 = inlined_call_operand.vmem [shape: f32[16,16], index: 9, kind: input, shape index: {}]
  %s10 = inlined_call_operand.hbm [shape: f32[1,16], index: 10, kind: input, shape index: {}]
  %s11 = inlined_call_operand.vmem [shape: f32[8,16], index: 11, kind: output, shape index: {0}]
  %s12 = inlined_call_operand.vmem [shape: f32[3,8,16], index: 12, kind: output, shape index: {1}]
  %13 = xla_tuple %s11, %s12
  %s14 = sld [smem:[#allocation0]]
  $region82: #{rnn_forward.1} parent=0
    _
  %s16 = ssub.s32 1, %s14
  %s17 = scalar_select 0, %s16, %s14
  $region1: #{rnn_forward.1} parent=0
    #allocation2 [shape = 'u8[512]{0}', space=vmem, size = 0x400, scoped, tag = 'input window, operand 2, single buffered']
    #allocation3 [shape = 's32[1]{0}', space=sflag, size = 0x4, scoped, tag = 'scoped memory for rnn_forward.1']
    #allocation4 [shape = 'u8[512]{0}', space=vmem, size = 0x400, scoped, tag = 'input window, operand 4, single buffered']
    #allocation5 [shape = 's32[1]{0}', space=sflag, size = 0x4, scoped, tag = 'scoped memory for rnn_forward.1']
    #allocation6 [shape = 'u8[512]{0}', space=vmem, size = 0x400, scoped, tag = 'input window, operand 6, single buffered']
    #allocation7 [shape = 'u8[1024]{0}', space=vmem, size = 0x400, scoped, tag = 'input window, operand 8, single buffered']
    #allocation8 [shape = 's32[1]{0}', space=sflag, size = 0x4, scoped, tag = 'scoped memory for rnn_forward.1']
    #allocation9 [shape = 'u8[512]{0}', space=vmem, size = 0x400, scoped, tag = 'input window, operand 10, single buffered']
    %18 = vsyncpa [#allocation3], 0
    %19 = vsyncpa [#allocation5], 0
    %20 = vsyncpa [#allocation8], 0
    // Predicated region
    $region2: #{rnn_forward.1} parent=1 // pred_check
      _
    $region3: #{rnn_forward.1} parent=1 // pred_check_branch
      %22 = sbr.rel (0) target = $region5
    $region4: #{rnn_forward.1} parent=1 // pred_region
      _
    $region5: #{rnn_forward.1} parent=1 // pred_fallthru
      _
    // Predicated region
    $region6: #{rnn_forward.1} parent=1 // pred_check
      _
    $region7: #{rnn_forward.1} parent=1 // pred_check_branch
      %24 = sbr.rel (0) target = $region9
    $region8: #{rnn_forward.1} parent=1 // pred_region
      _
    $region9: #{rnn_forward.1} parent=1 // pred_fallthru
      _
    // Predicated region
    $region10: #{rnn_forward.1} parent=1 // pred_check
      _
    $region11: #{rnn_forward.1} parent=1 // pred_check_branch
      %26 = sbr.rel (0) target = $region13
    $region12: #{rnn_forward.1} parent=1 // pred_region
      %s28 = ssub.s32 16, 16
      %29 = vsyncadd [#allocation3], %s28
      %s31 = sshll.u32 [#allocation2], 4
      %s32 = int_to_ptr.vmem [resolvable:$true] %s31
      %34 = dma.hbm_to_vmem [thread:$0]  %s2, 16, %s32, [#allocation3]
    $region13: #{rnn_forward.1} parent=1 // pred_fallthru
      _
    // Predicated region
    $region14: #{rnn_forward.1} parent=1 // pred_check
      _
    $region15: #{rnn_forward.1} parent=1 // pred_check_branch
      %36 = sbr.rel (0) target = $region17
    $region16: #{rnn_forward.1} parent=1 // pred_region
      _
    $region17: #{rnn_forward.1} parent=1 // pred_fallthru
      _
    // Predicated region
    $region18: #{rnn_forward.1} parent=1 // pred_check
      _
    $region19: #{rnn_forward.1} parent=1 // pred_check_branch
      %38 = sbr.rel (0) target = $region21
    $region20: #{rnn_forward.1} parent=1 // pred_region
      %s40 = ssub.s32 16, 16
      %41 = vsyncadd [#allocation5], %s40
      %s43 = sshll.u32 [#allocation4], 4
      %s44 = int_to_ptr.vmem [resolvable:$true] %s43
      %46 = dma.hbm_to_vmem [thread:$0]  %s4, 16, %s44, [#allocation5]
    $region21: #{rnn_forward.1} parent=1 // pred_fallthru
      _
    // Predicated region
    $region22: #{rnn_forward.1} parent=1 // pred_check
      _
    $region23: #{rnn_forward.1} parent=1 // pred_check_branch
      %48 = sbr.rel (0) target = $region25
    $region24: #{rnn_forward.1} parent=1 // pred_region
      _
    $region25: #{rnn_forward.1} parent=1 // pred_fallthru
      _
    // Predicated region
    $region26: #{rnn_forward.1} parent=1 // pred_check
      _
    $region27: #{rnn_forward.1} parent=1 // pred_check_branch
      %50 = sbr.rel (0) target = $region29
    $region28: #{rnn_forward.1} parent=1 // pred_region
      %s52 = ssub.s32 16, 16
      %53 = vsyncadd [#allocation5], %s52
      %s55 = sshll.u32 [#allocation6], 4
      %s56 = int_to_ptr.vmem [resolvable:$true] %s55
      %58 = dma.hbm_to_vmem [thread:$0]  %s6, 16, %s56, [#allocation5]
    $region29: #{rnn_forward.1} parent=1 // pred_fallthru
      _
    // Predicated region
    $region30: #{rnn_forward.1} parent=1 // pred_check
      _
    $region31: #{rnn_forward.1} parent=1 // pred_check_branch
      %60 = sbr.rel (0) target = $region33
    $region32: #{rnn_forward.1} parent=1 // pred_region
      _
    $region33: #{rnn_forward.1} parent=1 // pred_fallthru
      _
    // Predicated region
    $region34: #{rnn_forward.1} parent=1 // pred_check
      _
    $region35: #{rnn_forward.1} parent=1 // pred_check_branch
      %62 = sbr.rel (0) target = $region37
    $region36: #{rnn_forward.1} parent=1 // pred_region
      %s64 = ssub.s32 32, 32
      %65 = vsyncadd [#allocation8], %s64
      %s66 = sshll.u32 [#allocation7], 4
      %s67 = int_to_ptr.vmem [resolvable:$true] %s66
      %72 = dma.hbm_to_vmem [thread:$0]  %s8, 32, %s67, [#allocation8], 16, 16, 1
    $region37: #{rnn_forward.1} parent=1 // pred_fallthru
      _
    // Predicated region
    $region38: #{rnn_forward.1} parent=1 // pred_check
      _
    $region39: #{rnn_forward.1} parent=1 // pred_check_branch
      %74 = sbr.rel (0) target = $region41
    $region40: #{rnn_forward.1} parent=1 // pred_region
      _
    $region41: #{rnn_forward.1} parent=1 // pred_fallthru
      _
    // Predicated region
    $region42: #{rnn_forward.1} parent=1 // pred_check
      _
    $region43: #{rnn_forward.1} parent=1 // pred_check_branch
      %76 = sbr.rel (0) target = $region45
    $region44: #{rnn_forward.1} parent=1 // pred_region
      %s78 = ssub.s32 16, 16
      %79 = vsyncadd [#allocation8], %s78
      %s81 = sshll.u32 [#allocation9], 4
      %s82 = int_to_ptr.vmem [resolvable:$true] %s81
      %84 = dma.hbm_to_vmem [thread:$0]  %s10, 16, %s82, [#allocation8]
    $region45: #{rnn_forward.1} parent=1 // pred_fallthru
      _
    // Predicated region
    $region46: #{rnn_forward.1} parent=1 // pred_check
      _
    $region47: #{rnn_forward.1} parent=1 // pred_check_branch
      %86 = sbr.rel (0) target = $region49
    $region48: #{rnn_forward.1} parent=1 // pred_region
      %87 = dma.done [#allocation3], 16
    $region49: #{rnn_forward.1} parent=1 // pred_fallthru
      _
    // Predicated region
    $region50: #{rnn_forward.1} parent=1 // pred_check
      _
    $region51: #{rnn_forward.1} parent=1 // pred_check_branch
      %89 = sbr.rel (0) target = $region53
    $region52: #{rnn_forward.1} parent=1 // pred_region
      %90 = dma.done [#allocation5], 16
    $region53: #{rnn_forward.1} parent=1 // pred_fallthru
      _
    // Predicated region
    $region54: #{rnn_forward.1} parent=1 // pred_check
      _
    $region55: #{rnn_forward.1} parent=1 // pred_check_branch
      %92 = sbr.rel (0) target = $region57
    $region56: #{rnn_forward.1} parent=1 // pred_region
      %93 = dma.done [#allocation5], 16
    $region57: #{rnn_forward.1} parent=1 // pred_fallthru
      _
    // Predicated region
    $region58: #{rnn_forward.1} parent=1 // pred_check
      _
    $region59: #{rnn_forward.1} parent=1 // pred_check_branch
      %95 = sbr.rel (0) target = $region61
    $region60: #{rnn_forward.1} parent=1 // pred_region
      %96 = dma.done [#allocation8], 32
    $region61: #{rnn_forward.1} parent=1 // pred_fallthru
      _
    // Predicated region
    $region62: #{rnn_forward.1} parent=1 // pred_check
      _
    $region63: #{rnn_forward.1} parent=1 // pred_check_branch
      %98 = sbr.rel (0) target = $region65
    $region64: #{rnn_forward.1} parent=1 // pred_region
      %99 = dma.done [#allocation8], 16
    $region65: #{rnn_forward.1} parent=1 // pred_fallthru
      _
    %v100 = vld [vmem:[%s0] sm:$0xff]
    %v101 = vld [vmem:[%s0 + $0x8] sm:$0xff]
    %v102 = vld [vmem:[%s0 + $0x10] sm:$0xff]
    %v103 = vld [vmem:[%s0 + $0x18] sm:$0xff]
    %v104 = vld [vmem:[%s0 + $0x20] sm:$0xff]
    %v105 = vld [vmem:[%s0 + $0x28] sm:$0xff]
    %v106 = vld [vmem:[%s0 + $0x30] sm:$0xff]
    %v107 = vld [vmem:[%s0 + $0x38] sm:$0xff]
    %v108 = vld [vmem:[%s1] sm:$0x3]
    %v109 = vld [vmem:[#allocation2] sm:$0x1]
    %v111 = vlaneseq
    %v112 = vshrl.u32 %v111, 7
    %v113 = vsub.s32 0, %v112
    %v114 = vrot.slane %v109, %v113
    %vm116 = vcmask 15360
    %v118 = vsel %vm116, %v100, 0
    %v121 = vsel %vm116, %v101, 0
    %v124 = vsel %vm116, %v102, 0
    %v127 = vsel %vm116, %v103, 0
    %v130 = vsel %vm116, %v104, 0
    %v133 = vsel %vm116, %v105, 0
    %v136 = vsel %vm116, %v106, 0
    %v139 = vsel %vm116, %v107, 0
    %vm141 = vcmask 1041408
    %v143 = vsel %vm141, %v108, 0
    %145 = vmatprep.subr.mxu0 0.0
    %146 = vmatpush1.msra.mxu0 0.0
    %147 = vmatprep.subr.mxu0 0.0
    %148 = vmatpush1.msra.mxu0 0.0
    %149 = vmatprep.subr.mxu0 0.0
    %150 = vmatpush1.msra.mxu0 0.0
    %151 = vmatprep.subr.mxu0 0.0
    %152 = vmatpush1.msra.mxu0 0.0
    %153 = vmatprep.subr.mxu0 0.0
    %154 = vmatpush1.msra.mxu0 0.0
    %155 = vmatprep.subr.mxu0 0.0
    %156 = vmatpush1.msra.mxu0 0.0
    %157 = vmatprep.subr.mxu0 0.0
    %158 = vmatpush1.msra.mxu0 0.0
    %159 = vmatprep.subr.mxu0 0.0
    %160 = vmatpush1.msra.mxu0 0.0
    %161 = vmatprep.subr.mxu0 0.0
    %162 = vmatpush1.msra.mxu0 0.0
    %163 = vmatprep.subr.mxu0 0.0
    %164 = vmatpush1.msra.mxu0 0.0
    %165 = vmatprep.subr.mxu0 0.0
    %166 = vmatpush1.msra.mxu0 0.0
    %167 = vmatprep.subr.mxu0 0.0
    %168 = vmatpush1.msra.mxu0 0.0
    %169 = vmatprep.subr.mxu0 0.0
    %170 = vmatpush1.msra.mxu0 0.0
    %171 = vmatprep.subr.mxu0 0.0
    %172 = vmatpush1.msra.mxu0 0.0
    %173 = vmatprep.subr.mxu0 0.0
    %174 = vmatpush1.msra.mxu0 0.0
    %175 = vmatprep.subr.mxu0 0.0
    %176 = vmatpush1.msra.mxu0 %v143
    %177 = vmatprep.subr.mxu0 0.0
    %178 = vmatpush2.msra.mxu0 0.0
    %179 = vmatprep.subr.mxu0 0.0
    %180 = vmatpush2.msra.mxu0 0.0
    %181 = vmatprep.subr.mxu0 0.0
    %182 = vmatpush2.msra.mxu0 0.0
    %183 = vmatprep.subr.mxu0 0.0
    %184 = vmatpush2.msra.mxu0 0.0
    %185 = vmatprep.subr.mxu0 0.0
    %186 = vmatpush2.msra.mxu0 0.0
    %187 = vmatprep.subr.mxu0 0.0
    %188 = vmatpush2.msra.mxu0 0.0
    %189 = vmatprep.subr.mxu0 0.0
    %190 = vmatpush2.msra.mxu0 0.0
    %191 = vmatprep.subr.mxu0 0.0
    %192 = vmatpush2.msra.mxu0 0.0
    %193 = vmatprep.subr.mxu0 0.0
    %194 = vmatpush2.msra.mxu0 0.0
    %195 = vmatprep.subr.mxu0 0.0
    %196 = vmatpush2.msra.mxu0 0.0
    %197 = vmatprep.subr.mxu0 0.0
    %198 = vmatpush2.msra.mxu0 0.0
    %199 = vmatprep.subr.mxu0 0.0
    %200 = vmatpush2.msra.mxu0 0.0
    %201 = vmatprep.subr.mxu0 0.0
    %202 = vmatpush2.msra.mxu0 0.0
    %203 = vmatprep.subr.mxu0 0.0
    %204 = vmatpush2.msra.mxu0 0.0
    %205 = vmatprep.subr.mxu0 0.0
    %206 = vmatpush2.msra.mxu0 0.0
    %207 = vmatprep.subr.mxu0 0.0
    %208 = vmatpush2.msra.mxu0 0.0
    %209 = vmatprep.mubr.f32.mxu0 0.0
    %210 = vmatmul.mubr.f32.gmra.mxu0 %v118
    %v211 = vpop.f32.mrf.mxu0
    %v212 = vadd.f32 %v114, %v211
    %v213 = vpop.f32.mrf.mxu0
    %214 = vmatprep.mubr.f32.mxu0 0.0
    %215 = vmatmul.mubr.f32.gmra.mxu0 %v121
    %v216 = vpop.f32.mrf.mxu0
    %v217 = vadd.f32 %v114, %v216
    %v218 = vpop.f32.mrf.mxu0
    %219 = vmatprep.mubr.f32.mxu0 0.0
    %220 = vmatmul.mubr.f32.gmra.mxu0 %v124
    %v221 = vpop.f32.mrf.mxu0
    %v222 = vadd.f32 %v114, %v221
    %v223 = vpop.f32.mrf.mxu0
    %224 = vmatprep.mubr.f32.mxu0 0.0
    %225 = vmatmul.mubr.f32.gmra.mxu0 %v127
    %v226 = vpop.f32.mrf.mxu0
    %v227 = vadd.f32 %v114, %v226
    %v228 = vpop.f32.mrf.mxu0
    %229 = vmatprep.mubr.f32.mxu0 0.0
    %230 = vmatmul.mubr.f32.gmra.mxu0 %v130
    %v231 = vpop.f32.mrf.mxu0
    %v232 = vadd.f32 %v114, %v231
    %v233 = vpop.f32.mrf.mxu0
    %234 = vmatprep.mubr.f32.mxu0 0.0
    %235 = vmatmul.mubr.f32.gmra.mxu0 %v133
    %v236 = vpop.f32.mrf.mxu0
    %v237 = vadd.f32 %v114, %v236
    %v238 = vpop.f32.mrf.mxu0
    %239 = vmatprep.mubr.f32.mxu0 0.0
    %240 = vmatmul.mubr.f32.gmra.mxu0 %v136
    %v241 = vpop.f32.mrf.mxu0
    %v242 = vadd.f32 %v114, %v241
    %v243 = vpop.f32.mrf.mxu0
    %244 = vmatprep.mubr.f32.mxu0 0.0
    %245 = vmatmul.mubr.f32.gmra.mxu0 %v139
    %v246 = vpop.f32.mrf.mxu0
    %v247 = vadd.f32 %v114, %v246
    %v248 = vpop.f32.mrf.mxu0
    %249 = vdwg.mxu0
    %v250 = vmax.f32 %v212, 0.0
    %v251 = vmax.f32 %v217, 0.0
    %v252 = vmax.f32 %v222, 0.0
    %v253 = vmax.f32 %v227, 0.0
    %v254 = vmax.f32 %v232, 0.0
    %v255 = vmax.f32 %v237, 0.0
    %v256 = vmax.f32 %v242, 0.0
    %v257 = vmax.f32 %v247, 0.0
    %v258 = vld [vmem:[%s3] sm:$0xff]
    %v259 = vld [vmem:[%s3 + $0x8] sm:$0xff]
    %v260 = vld [vmem:[#allocation4] sm:$0x1]
    %v262 = vlaneseq
    %v263 = vshrl.u32 %v262, 7
    %v264 = vsub.s32 0, %v263
    %v265 = vrot.slane %v260, %v264
    %vm267 = vcmask 130048
    %v269 = vsel %vm267, %v250, 0
    %v272 = vsel %vm267, %v251, 0
    %v275 = vsel %vm267, %v252, 0
    %v278 = vsel %vm267, %v253, 0
    %v281 = vsel %vm267, %v254, 0
    %v284 = vsel %vm267, %v255, 0
    %v287 = vsel %vm267, %v256, 0
    %v290 = vsel %vm267, %v257, 0
    %292 = vmatprep.subr.mxu0 0.0
    %293 = vmatpush1.msra.mxu0 0.0
    %294 = vmatprep.subr.mxu0 0.0
    %295 = vmatpush1.msra.mxu0 0.0
    %296 = vmatprep.subr.mxu0 0.0
    %297 = vmatpush1.msra.mxu0 0.0
    %298 = vmatprep.subr.mxu0 0.0
    %299 = vmatpush1.msra.mxu0 0.0
    %300 = vmatprep.subr.mxu0 0.0
    %301 = vmatpush1.msra.mxu0 0.0
    %302 = vmatprep.subr.mxu0 0.0
    %303 = vmatpush1.msra.mxu0 0.0
    %304 = vmatprep.subr.mxu0 0.0
    %305 = vmatpush1.msra.mxu0 0.0
    %306 = vmatprep.subr.mxu0 0.0
    %307 = vmatpush1.msra.mxu0 0.0
    %308 = vmatprep.subr.mxu0 0.0
    %309 = vmatpush1.msra.mxu0 0.0
    %310 = vmatprep.subr.mxu0 0.0
    %311 = vmatpush1.msra.mxu0 0.0
    %312 = vmatprep.subr.mxu0 0.0
    %313 = vmatpush1.msra.mxu0 0.0
    %314 = vmatprep.subr.mxu0 0.0
    %315 = vmatpush1.msra.mxu0 0.0
    %316 = vmatprep.subr.mxu0 0.0
    %317 = vmatpush1.msra.mxu0 0.0
    %318 = vmatprep.subr.mxu0 0.0
    %319 = vmatpush1.msra.mxu0 0.0
    %320 = vmatprep.subr.mxu0 0.0
    %321 = vmatpush1.msra.mxu0 %v259
    %322 = vmatprep.subr.mxu0 0.0
    %323 = vmatpush1.msra.mxu0 %v258
    %324 = vmatprep.subr.mxu0 0.0
    %325 = vmatpush2.msra.mxu0 0.0
    %326 = vmatprep.subr.mxu0 0.0
    %327 = vmatpush2.msra.mxu0 0.0
    %328 = vmatprep.subr.mxu0 0.0
    %329 = vmatpush2.msra.mxu0 0.0
    %330 = vmatprep.subr.mxu0 0.0
    %331 = vmatpush2.msra.mxu0 0.0
    %332 = vmatprep.subr.mxu0 0.0
    %333 = vmatpush2.msra.mxu0 0.0
    %334 = vmatprep.subr.mxu0 0.0
    %335 = vmatpush2.msra.mxu0 0.0
    %336 = vmatprep.subr.mxu0 0.0
    %337 = vmatpush2.msra.mxu0 0.0
    %338 = vmatprep.subr.mxu0 0.0
    %339 = vmatpush2.msra.mxu0 0.0
    %340 = vmatprep.subr.mxu0 0.0
    %341 = vmatpush2.msra.mxu0 0.0
    %342 = vmatprep.subr.mxu0 0.0
    %343 = vmatpush2.msra.mxu0 0.0
    %344 = vmatprep.subr.mxu0 0.0
    %345 = vmatpush2.msra.mxu0 0.0
    %346 = vmatprep.subr.mxu0 0.0
    %347 = vmatpush2.msra.mxu0 0.0
    %348 = vmatprep.subr.mxu0 0.0
    %349 = vmatpush2.msra.mxu0 0.0
    %350 = vmatprep.subr.mxu0 0.0
    %351 = vmatpush2.msra.mxu0 0.0
    %352 = vmatprep.subr.mxu0 0.0
    %353 = vmatpush2.msra.mxu0 0.0
    %354 = vmatprep.subr.mxu0 0.0
    %355 = vmatpush2.msra.mxu0 0.0
    %356 = vmatprep.mubr.f32.mxu0 0.0
    %357 = vmatmul.mubr.f32.gmra.mxu0 %v269
    %v358 = vpop.f32.mrf.mxu0
    %v359 = vadd.f32 %v265, %v358
    %v360 = vpop.f32.mrf.mxu0
    %361 = vmatprep.mubr.f32.mxu0 0.0
    %362 = vmatmul.mubr.f32.gmra.mxu0 %v272
    %v363 = vpop.f32.mrf.mxu0
    %v364 = vadd.f32 %v265, %v363
    %v365 = vpop.f32.mrf.mxu0
    %366 = vmatprep.mubr.f32.mxu0 0.0
    %367 = vmatmul.mubr.f32.gmra.mxu0 %v275
    %v368 = vpop.f32.mrf.mxu0
    %v369 = vadd.f32 %v265, %v368
    %v370 = vpop.f32.mrf.mxu0
    %371 = vmatprep.mubr.f32.mxu0 0.0
    %372 = vmatmul.mubr.f32.gmra.mxu0 %v278
    %v373 = vpop.f32.mrf.mxu0
    %v374 = vadd.f32 %v265, %v373
    %v375 = vpop.f32.mrf.mxu0
    %376 = vmatprep.mubr.f32.mxu0 0.0
    %377 = vmatmul.mubr.f32.gmra.mxu0 %v281
    %v378 = vpop.f32.mrf.mxu0
    %v379 = vadd.f32 %v265, %v378
    %v380 = vpop.f32.mrf.mxu0
    %381 = vmatprep.mubr.f32.mxu0 0.0
    %382 = vmatmul.mubr.f32.gmra.mxu0 %v284
    %v383 = vpop.f32.mrf.mxu0
    %v384 = vadd.f32 %v265, %v383
    %v385 = vpop.f32.mrf.mxu0
    %386 = vmatprep.mubr.f32.mxu0 0.0
    %387 = vmatmul.mubr.f32.gmra.mxu0 %v287
    %v388 = vpop.f32.mrf.mxu0
    %v389 = vadd.f32 %v265, %v388
    %v390 = vpop.f32.mrf.mxu0
    %391 = vmatprep.mubr.f32.mxu0 0.0
    %392 = vmatmul.mubr.f32.gmra.mxu0 %v290
    %v393 = vpop.f32.mrf.mxu0
    %v394 = vadd.f32 %v265, %v393
    %v395 = vpop.f32.mrf.mxu0
    %396 = vdwg.mxu0
    %v397 = vld [vmem:[#allocation6] sm:$0x1]
    %v399 = vlaneseq
    %v400 = vshrl.u32 %v399, 7
    %v401 = vsub.s32 0, %v400
    %v402 = vrot.slane %v397, %v401
    %v404 = vld [vmem:[#allocation7] sm:$0x1]
    %v406 = vlaneseq
    %v407 = vshrl.u32 %v406, 7
    %v408 = vsub.s32 0, %v407
    %v409 = vrot.slane %v404, %v408
    %s411 = scalar_lea.vmem [#allocation7], 1
    %v412 = vld [vmem:[%s411] sm:$0x1]
    %v414 = vlaneseq
    %v415 = vshrl.u32 %v414, 7
    %v416 = vsub.s32 0, %v415
    %v417 = vrot.slane %v412, %v416
    %v419 = vld [vmem:[%s5] sm:$0xff]
    %v420 = vld [vmem:[%s5 + $0x8] sm:$0xff]
    %v422 = vsel %vm267, 0.0, 0
    %424 = vmatprep.subr.mxu0 0.0
    %425 = vmatpush1.msra.mxu0 0.0
    %426 = vmatprep.subr.mxu0 0.0
    %427 = vmatpush1.msra.mxu0 0.0
    %428 = vmatprep.subr.mxu0 0.0
    %429 = vmatpush1.msra.mxu0 0.0
    %430 = vmatprep.subr.mxu0 0.0
    %431 = vmatpush1.msra.mxu0 0.0
    %432 = vmatprep.subr.mxu0 0.0
    %433 = vmatpush1.msra.mxu0 0.0
    %434 = vmatprep.subr.mxu0 0.0
    %435 = vmatpush1.msra.mxu0 0.0
    %436 = vmatprep.subr.mxu0 0.0
    %437 = vmatpush1.msra.mxu0 0.0
    %438 = vmatprep.subr.mxu0 0.0
    %439 = vmatpush1.msra.mxu0 0.0
    %440 = vmatprep.subr.mxu0 0.0
    %441 = vmatpush1.msra.mxu0 0.0
    %442 = vmatprep.subr.mxu0 0.0
    %443 = vmatpush1.msra.mxu0 0.0
    %444 = vmatprep.subr.mxu0 0.0
    %445 = vmatpush1.msra.mxu0 0.0
    %446 = vmatprep.subr.mxu0 0.0
    %447 = vmatpush1.msra.mxu0 0.0
    %448 = vmatprep.subr.mxu0 0.0
    %449 = vmatpush1.msra.mxu0 0.0
    %450 = vmatprep.subr.mxu0 0.0
    %451 = vmatpush1.msra.mxu0 0.0
    %452 = vmatprep.subr.mxu0 0.0
    %453 = vmatpush1.msra.mxu0 %v420
    %454 = vmatprep.subr.mxu0 0.0
    %455 = vmatpush1.msra.mxu0 %v419
    %456 = vmatprep.subr.mxu0 0.0
    %457 = vmatpush2.msra.mxu0 0.0
    %458 = vmatprep.subr.mxu0 0.0
    %459 = vmatpush2.msra.mxu0 0.0
    %460 = vmatprep.subr.mxu0 0.0
    %461 = vmatpush2.msra.mxu0 0.0
    %462 = vmatprep.subr.mxu0 0.0
    %463 = vmatpush2.msra.mxu0 0.0
    %464 = vmatprep.subr.mxu0 0.0
    %465 = vmatpush2.msra.mxu0 0.0
    %466 = vmatprep.subr.mxu0 0.0
    %467 = vmatpush2.msra.mxu0 0.0
    %468 = vmatprep.subr.mxu0 0.0
    %469 = vmatpush2.msra.mxu0 0.0
    %470 = vmatprep.subr.mxu0 0.0
    %471 = vmatpush2.msra.mxu0 0.0
    %472 = vmatprep.subr.mxu0 0.0
    %473 = vmatpush2.msra.mxu0 0.0
    %474 = vmatprep.subr.mxu0 0.0
    %475 = vmatpush2.msra.mxu0 0.0
    %476 = vmatprep.subr.mxu0 0.0
    %477 = vmatpush2.msra.mxu0 0.0
    %478 = vmatprep.subr.mxu0 0.0
    %479 = vmatpush2.msra.mxu0 0.0
    %480 = vmatprep.subr.mxu0 0.0
    %481 = vmatpush2.msra.mxu0 0.0
    %482 = vmatprep.subr.mxu0 0.0
    %483 = vmatpush2.msra.mxu0 0.0
    %484 = vmatprep.subr.mxu0 0.0
    %485 = vmatpush2.msra.mxu0 0.0
    %486 = vmatprep.subr.mxu0 0.0
    %487 = vmatpush2.msra.mxu0 0.0
    %488 = vmatprep.mubr.f32.mxu0 0.0
    %489 = vmatmul.mubr.f32.gmra.mxu0 %v422
    %v490 = vpop.f32.mrf.mxu0
    %v491 = vadd.f32 %v402, %v490
    %v492 = vpop.f32.mrf.mxu0
    %493 = vdwg.mxu0
    %v494 = vadd.f32 %v359, %v491
    %v495 = vxor.u32 %v494, 2147483648
    %v496 = vmul.f32 %v495, 1.442695
    %v497 = vpow.pop %v496
    %v498 = vadd.f32 %v497, 1.0
    %v499 = vrcp.pop %v498
    %v500 = vmul.f32 1.0, %v499
    %502 = vrot.lane.b32.xlu0 %v491, 96
    %v503 = vpop.permute.xlu0 %502
    %v505 = vmul.f32 %v500, %v503
    %507 = vrot.lane.b32.xlu0 %v505, 32
    %v508 = vpop.permute.xlu0 %507
    %v510 = vadd.f32 %v359, %v508
    %v511 = vtanh.pop %v510
    %v512 = vsub.f32 1.0, %v500
    %514 = vrot.lane.b32.xlu0 %v511, 112
    %v515 = vpop.permute.xlu0 %514
    %v517 = vmul.f32 %v512, %v515
    %v518 = vmul.f32 %v500, 0.0
    %v519 = vadd.f32 %v517, %v518
    %521 = vrot.lane.b32.xlu0 %v519, 112
    %v522 = vpop.permute.xlu0 %521
    %v524 = vsel %vm267, %v522, 0.0
    %v525 = vld [vmem:[%s7] sm:$0xff]
    %v526 = vld [vmem:[%s7 + $0x8] sm:$0xff]
    %v527 = vld [vmem:[%s7 + $0x10] sm:$0xff]
    %v528 = vld [vmem:[%s7 + $0x18] sm:$0xff]
    %vm529 = vcmask 261120
    %v531 = vsel %vm529, %v524, 0
    %533 = vmatprep.subr.mxu0 0.0
    %534 = vmatpush1.msra.mxu0 0.0
    %535 = vmatprep.subr.mxu0 0.0
    %536 = vmatpush1.msra.mxu0 0.0
    %537 = vmatprep.subr.mxu0 0.0
    %538 = vmatpush1.msra.mxu0 0.0
    %539 = vmatprep.subr.mxu0 0.0
    %540 = vmatpush1.msra.mxu0 0.0
    %541 = vmatprep.subr.mxu0 0.0
    %542 = vmatpush1.msra.mxu0 0.0
    %543 = vmatprep.subr.mxu0 0.0
    %544 = vmatpush1.msra.mxu0 0.0
    %545 = vmatprep.subr.mxu0 0.0
    %546 = vmatpush1.msra.mxu0 0.0
    %547 = vmatprep.subr.mxu0 0.0
    %548 = vmatpush1.msra.mxu0 0.0
    %549 = vmatprep.subr.mxu0 0.0
    %550 = vmatpush1.msra.mxu0 0.0
    %551 = vmatprep.subr.mxu0 0.0
    %552 = vmatpush1.msra.mxu0 0.0
    %553 = vmatprep.subr.mxu0 0.0
    %554 = vmatpush1.msra.mxu0 0.0
    %555 = vmatprep.subr.mxu0 0.0
    %556 = vmatpush1.msra.mxu0 0.0
    %557 = vmatprep.subr.mxu0 0.0
    %558 = vmatpush1.msra.mxu0 %v528
    %559 = vmatprep.subr.mxu0 0.0
    %560 = vmatpush1.msra.mxu0 %v527
    %561 = vmatprep.subr.mxu0 0.0
    %562 = vmatpush1.msra.mxu0 %v526
    %563 = vmatprep.subr.mxu0 0.0
    %564 = vmatpush1.msra.mxu0 %v525
    %565 = vmatprep.subr.mxu0 0.0
    %566 = vmatpush2.msra.mxu0 0.0
    %567 = vmatprep.subr.mxu0 0.0
    %568 = vmatpush2.msra.mxu0 0.0
    %569 = vmatprep.subr.mxu0 0.0
    %570 = vmatpush2.msra.mxu0 0.0
    %571 = vmatprep.subr.mxu0 0.0
    %572 = vmatpush2.msra.mxu0 0.0
    %573 = vmatprep.subr.mxu0 0.0
    %574 = vmatpush2.msra.mxu0 0.0
    %575 = vmatprep.subr.mxu0 0.0
    %576 = vmatpush2.msra.mxu0 0.0
    %577 = vmatprep.subr.mxu0 0.0
    %578 = vmatpush2.msra.mxu0 0.0
    %579 = vmatprep.subr.mxu0 0.0
    %580 = vmatpush2.msra.mxu0 0.0
    %581 = vmatprep.subr.mxu0 0.0
    %582 = vmatpush2.msra.mxu0 0.0
    %583 = vmatprep.subr.mxu0 0.0
    %584 = vmatpush2.msra.mxu0 0.0
    %585 = vmatprep.subr.mxu0 0.0
    %586 = vmatpush2.msra.mxu0 0.0
    %587 = vmatprep.subr.mxu0 0.0
    %588 = vmatpush2.msra.mxu0 0.0
    %589 = vmatprep.subr.mxu0 0.0
    %590 = vmatpush2.msra.mxu0 0.0
    %591 = vmatprep.subr.mxu0 0.0
    %592 = vmatpush2.msra.mxu0 0.0
    %593 = vmatprep.subr.mxu0 0.0
    %594 = vmatpush2.msra.mxu0 0.0
    %595 = vmatprep.subr.mxu0 0.0
    %596 = vmatpush2.msra.mxu0 0.0
    %597 = vmatprep.mubr.f32.mxu0 0.0
    %598 = vmatmul.mubr.f32.gmra.mxu0 %v531
    %v599 = vpop.f32.mrf.mxu0
    %v600 = vadd.f32 %v409, %v599
    %v601 = vpop.f32.mrf.mxu0
    %602 = vdwg.mxu0
    %v603 = vxor.u32 %v600, 2147483648
    %v604 = vmul.f32 %v603, 1.442695
    %v605 = vpow.pop %v604
    %v606 = vadd.f32 %v605, 1.0
    %v607 = vrcp.pop %v606
    %v608 = vmul.f32 1.0, %v607
    %610 = vrot.lane.b32.xlu0 %v600, 80
    %v611 = vpop.permute.xlu0 %610
    %v613 = vmul.f32 %v608, %v611
    %615 = vrot.lane.b32.xlu0 %v613, 32
    %v616 = vpop.permute.xlu0 %615
    %v618 = vadd.f32 %v600, %v616
    %v619 = vtanh.pop %v618
    %v620 = vsub.f32 1.0, %v608
    %622 = vrot.lane.b32.xlu0 %v619, 112
    %v623 = vpop.permute.xlu0 %622
    %v625 = vmul.f32 %v620, %v623
    %v626 = vmul.f32 %v608, 0.0
    %v627 = vadd.f32 %v625, %v626
    %629 = vrot.lane.b32.xlu0 %v627, 112
    %v630 = vpop.permute.xlu0 %629
    %v632 = vsel %vm267, %v630, 0.0
    %s633 = scalar_lea.vmem %s7, 32
    %v634 = vld [vmem:[%s633] sm:$0xff]
    %v635 = vld [vmem:[%s633 + $0x8] sm:$0xff]
    %v636 = vld [vmem:[%s633 + $0x10] sm:$0xff]
    %v637 = vld [vmem:[%s633 + $0x18] sm:$0xff]
    %v639 = vsel %vm529, %v632, 0
    %641 = vmatprep.subr.mxu0 0.0
    %642 = vmatpush1.msra.mxu0 0.0
    %643 = vmatprep.subr.mxu0 0.0
    %644 = vmatpush1.msra.mxu0 0.0
    %645 = vmatprep.subr.mxu0 0.0
    %646 = vmatpush1.msra.mxu0 0.0
    %647 = vmatprep.subr.mxu0 0.0
    %648 = vmatpush1.msra.mxu0 0.0
    %649 = vmatprep.subr.mxu0 0.0
    %650 = vmatpush1.msra.mxu0 0.0
    %651 = vmatprep.subr.mxu0 0.0
    %652 = vmatpush1.msra.mxu0 0.0
    %653 = vmatprep.subr.mxu0 0.0
    %654 = vmatpush1.msra.mxu0 0.0
    %655 = vmatprep.subr.mxu0 0.0
    %656 = vmatpush1.msra.mxu0 0.0
    %657 = vmatprep.subr.mxu0 0.0
    %658 = vmatpush1.msra.mxu0 0.0
    %659 = vmatprep.subr.mxu0 0.0
    %660 = vmatpush1.msra.mxu0 0.0
    %661 = vmatprep.subr.mxu0 0.0
    %662 = vmatpush1.msra.mxu0 0.0
    %663 = vmatprep.subr.mxu0 0.0
    %664 = vmatpush1.msra.mxu0 0.0
    %665 = vmatprep.subr.mxu0 0.0
    %666 = vmatpush1.msra.mxu0 %v637
    %667 = vmatprep.subr.mxu0 0.0
    %668 = vmatpush1.msra.mxu0 %v636
    %669 = vmatprep.subr.mxu0 0.0
    %670 = vmatpush1.msra.mxu0 %v635
    %671 = vmatprep.subr.mxu0 0.0
    %672 = vmatpush1.msra.mxu0 %v634
    %673 = vmatprep.subr.mxu0 0.0
    %674 = vmatpush2.msra.mxu0 0.0
    %675 = vmatprep.subr.mxu0 0.0
    %676 = vmatpush2.msra.mxu0 0.0
    %677 = vmatprep.subr.mxu0 0.0
    %678 = vmatpush2.msra.mxu0 0.0
    %679 = vmatprep.subr.mxu0 0.0
    %680 = vmatpush2.msra.mxu0 0.0
    %681 = vmatprep.subr.mxu0 0.0
    %682 = vmatpush2.msra.mxu0 0.0
    %683 = vmatprep.subr.mxu0 0.0
    %684 = vmatpush2.msra.mxu0 0.0
    %685 = vmatprep.subr.mxu0 0.0
    %686 = vmatpush2.msra.mxu0 0.0
    %687 = vmatprep.subr.mxu0 0.0
    %688 = vmatpush2.msra.mxu0 0.0
    %689 = vmatprep.subr.mxu0 0.0
    %690 = vmatpush2.msra.mxu0 0.0
    %691 = vmatprep.subr.mxu0 0.0
    %692 = vmatpush2.msra.mxu0 0.0
    %693 = vmatprep.subr.mxu0 0.0
    %694 = vmatpush2.msra.mxu0 0.0
    %695 = vmatprep.subr.mxu0 0.0
    %696 = vmatpush2.msra.mxu0 0.0
    %697 = vmatprep.subr.mxu0 0.0
    %698 = vmatpush2.msra.mxu0 0.0
    %699 = vmatprep.subr.mxu0 0.0
    %700 = vmatpush2.msra.mxu0 0.0
    %701 = vmatprep.subr.mxu0 0.0
    %702 = vmatpush2.msra.mxu0 0.0
    %703 = vmatprep.subr.mxu0 0.0
    %704 = vmatpush2.msra.mxu0 0.0
    %705 = vmatprep.mubr.f32.mxu0 0.0
    %706 = vmatmul.mubr.f32.gmra.mxu0 %v639
    %v707 = vpop.f32.mrf.mxu0
    %v708 = vadd.f32 %v417, %v707
    %v709 = vpop.f32.mrf.mxu0
    %710 = vdwg.mxu0
    %v711 = vxor.u32 %v708, 2147483648
    %v712 = vmul.f32 %v711, 1.442695
    %v713 = vpow.pop %v712
    %v714 = vadd.f32 %v713, 1.0
    %v715 = vrcp.pop %v714
    %v716 = vmul.f32 1.0, %v715
    %718 = vrot.lane.b32.xlu0 %v708, 80
    %v719 = vpop.permute.xlu0 %718
    %v721 = vmul.f32 %v716, %v719
    %723 = vrot.lane.b32.xlu0 %v721, 32
    %v724 = vpop.permute.xlu0 %723
    %v726 = vadd.f32 %v708, %v724
    %v727 = vtanh.pop %v726
    %v728 = vsub.f32 1.0, %v716
    %730 = vrot.lane.b32.xlu0 %v727, 112
    %v731 = vpop.permute.xlu0 %730
    %v733 = vmul.f32 %v728, %v731
    %v734 = vmul.f32 %v716, 0.0
    %v735 = vadd.f32 %v733, %v734
    %v736 = vsel %vm267, %v522, 0
    %738 = vmatprep.subr.mxu0 0.0
    %739 = vmatpush1.msra.mxu0 0.0
    %740 = vmatprep.subr.mxu0 0.0
    %741 = vmatpush1.msra.mxu0 0.0
    %742 = vmatprep.subr.mxu0 0.0
    %743 = vmatpush1.msra.mxu0 0.0
    %744 = vmatprep.subr.mxu0 0.0
    %745 = vmatpush1.msra.mxu0 0.0
    %746 = vmatprep.subr.mxu0 0.0
    %747 = vmatpush1.msra.mxu0 0.0
    %748 = vmatprep.subr.mxu0 0.0
    %749 = vmatpush1.msra.mxu0 0.0
    %750 = vmatprep.subr.mxu0 0.0
    %751 = vmatpush1.msra.mxu0 0.0
    %752 = vmatprep.subr.mxu0 0.0
    %753 = vmatpush1.msra.mxu0 0.0
    %754 = vmatprep.subr.mxu0 0.0
    %755 = vmatpush1.msra.mxu0 0.0
    %756 = vmatprep.subr.mxu0 0.0
    %757 = vmatpush1.msra.mxu0 0.0
    %758 = vmatprep.subr.mxu0 0.0
    %759 = vmatpush1.msra.mxu0 0.0
    %760 = vmatprep.subr.mxu0 0.0
    %761 = vmatpush1.msra.mxu0 0.0
    %762 = vmatprep.subr.mxu0 0.0
    %763 = vmatpush1.msra.mxu0 0.0
    %764 = vmatprep.subr.mxu0 0.0
    %765 = vmatpush1.msra.mxu0 0.0
    %766 = vmatprep.subr.mxu0 0.0
    %767 = vmatpush1.msra.mxu0 %v420
    %768 = vmatprep.subr.mxu0 0.0
    %769 = vmatpush1.msra.mxu0 %v419
    %770 = vmatprep.subr.mxu0 0.0
    %771 = vmatpush2.msra.mxu0 0.0
    %772 = vmatprep.subr.mxu0 0.0
    %773 = vmatpush2.msra.mxu0 0.0
    %774 = vmatprep.subr.mxu0 0.0
    %775 = vmatpush2.msra.mxu0 0.0
    %776 = vmatprep.subr.mxu0 0.0
    %777 = vmatpush2.msra.mxu0 0.0
    %778 = vmatprep.subr.mxu0 0.0
    %779 = vmatpush2.msra.mxu0 0.0
    %780 = vmatprep.subr.mxu0 0.0
    %781 = vmatpush2.msra.mxu0 0.0
    %782 = vmatprep.subr.mxu0 0.0
    %783 = vmatpush2.msra.mxu0 0.0
    %784 = vmatprep.subr.mxu0 0.0
    %785 = vmatpush2.msra.mxu0 0.0
    %786 = vmatprep.subr.mxu0 0.0
    %787 = vmatpush2.msra.mxu0 0.0
    %788 = vmatprep.subr.mxu0 0.0
    %789 = vmatpush2.msra.mxu0 0.0
    %790 = vmatprep.subr.mxu0 0.0
    %791 = vmatpush2.msra.mxu0 0.0
    %792 = vmatprep.subr.mxu0 0.0
    %793 = vmatpush2.msra.mxu0 0.0
    %794 = vmatprep.subr.mxu0 0.0
    %795 = vmatpush2.msra.mxu0 0.0
    %796 = vmatprep.subr.mxu0 0.0
    %797 = vmatpush2.msra.mxu0 0.0
    %798 = vmatprep.subr.mxu0 0.0
    %799 = vmatpush2.msra.mxu0 0.0
    %800 = vmatprep.subr.mxu0 0.0
    %801 = vmatpush2.msra.mxu0 0.0
    %802 = vmatprep.mubr.f32.mxu0 0.0
    %803 = vmatmul.mubr.f32.gmra.mxu0 %v736
    %v804 = vpop.f32.mrf.mxu0
    %v805 = vadd.f32 %v402, %v804
    %v806 = vpop.f32.mrf.mxu0
    %807 = vdwg.mxu0
    %v808 = vadd.f32 %v364, %v805
    %v809 = vxor.u32 %v808, 2147483648
    %v810 = vmul.f32 %v809, 1.442695
    %v811 = vpow.pop %v810
    %v812 = vadd.f32 %v811, 1.0
    %v813 = vrcp.pop %v812
    %v814 = vmul.f32 1.0, %v813
    %816 = vrot.lane.b32.xlu0 %v805, 96
    %v817 = vpop.permute.xlu0 %816
    %v819 = vmul.f32 %v814, %v817
    %821 = vrot.lane.b32.xlu0 %v819, 32
    %v822 = vpop.permute.xlu0 %821
    %v824 = vadd.f32 %v364, %v822
    %v825 = vtanh.pop %v824
    %v826 = vsub.f32 1.0, %v814
    %828 = vrot.lane.b32.xlu0 %v825, 112
    %v829 = vpop.permute.xlu0 %828
    %v831 = vmul.f32 %v826, %v829
    %v832 = vmul.f32 %v814, %v519
    %v833 = vadd.f32 %v831, %v832
    %835 = vrot.lane.b32.xlu0 %v833, 112
    %v836 = vpop.permute.xlu0 %835
    %v838 = vsel %vm267, %v836, %v627
    %v840 = vsel %vm529, %v838, 0
    %842 = vmatprep.subr.mxu0 0.0
    %843 = vmatpush1.msra.mxu0 0.0
    %844 = vmatprep.subr.mxu0 0.0
    %845 = vmatpush1.msra.mxu0 0.0
    %846 = vmatprep.subr.mxu0 0.0
    %847 = vmatpush1.msra.mxu0 0.0
    %848 = vmatprep.subr.mxu0 0.0
    %849 = vmatpush1.msra.mxu0 0.0
    %850 = vmatprep.subr.mxu0 0.0
    %851 = vmatpush1.msra.mxu0 0.0
    %852 = vmatprep.subr.mxu0 0.0
    %853 = vmatpush1.msra.mxu0 0.0
    %854 = vmatprep.subr.mxu0 0.0
    %855 = vmatpush1.msra.mxu0 0.0
    %856 = vmatprep.subr.mxu0 0.0
    %857 = vmatpush1.msra.mxu0 0.0
    %858 = vmatprep.subr.mxu0 0.0
    %859 = vmatpush1.msra.mxu0 0.0
    %860 = vmatprep.subr.mxu0 0.0
    %861 = vmatpush1.msra.mxu0 0.0
    %862 = vmatprep.subr.mxu0 0.0
    %863 = vmatpush1.msra.mxu0 0.0
    %864 = vmatprep.subr.mxu0 0.0
    %865 = vmatpush1.msra.mxu0 0.0
    %866 = vmatprep.subr.mxu0 0.0
    %867 = vmatpush1.msra.mxu0 %v528
    %868 = vmatprep.subr.mxu0 0.0
    %869 = vmatpush1.msra.mxu0 %v527
    %870 = vmatprep.subr.mxu0 0.0
    %871 = vmatpush1.msra.mxu0 %v526
    %872 = vmatprep.subr.mxu0 0.0
    %873 = vmatpush1.msra.mxu0 %v525
    %874 = vmatprep.subr.mxu0 0.0
    %875 = vmatpush2.msra.mxu0 0.0
    %876 = vmatprep.subr.mxu0 0.0
    %877 = vmatpush2.msra.mxu0 0.0
    %878 = vmatprep.subr.mxu0 0.0
    %879 = vmatpush2.msra.mxu0 0.0
    %880 = vmatprep.subr.mxu0 0.0
    %881 = vmatpush2.msra.mxu0 0.0
    %882 = vmatprep.subr.mxu0 0.0
    %883 = vmatpush2.msra.mxu0 0.0
    %884 = vmatprep.subr.mxu0 0.0
    %885 = vmatpush2.msra.mxu0 0.0
    %886 = vmatprep.subr.mxu0 0.0
    %887 = vmatpush2.msra.mxu0 0.0
    %888 = vmatprep.subr.mxu0 0.0
    %889 = vmatpush2.msra.mxu0 0.0
    %890 = vmatprep.subr.mxu0 0.0
    %891 = vmatpush2.msra.mxu0 0.0
    %892 = vmatprep.subr.mxu0 0.0
    %893 = vmatpush2.msra.mxu0 0.0
    %894 = vmatprep.subr.mxu0 0.0
    %895 = vmatpush2.msra.mxu0 0.0
    %896 = vmatprep.subr.mxu0 0.0
    %897 = vmatpush2.msra.mxu0 0.0
    %898 = vmatprep.subr.mxu0 0.0
    %899 = vmatpush2.msra.mxu0 0.0
    %900 = vmatprep.subr.mxu0 0.0
    %901 = vmatpush2.msra.mxu0 0.0
    %902 = vmatprep.subr.mxu0 0.0
    %903 = vmatpush2.msra.mxu0 0.0
    %904 = vmatprep.subr.mxu0 0.0
    %905 = vmatpush2.msra.mxu0 0.0
    %906 = vmatprep.mubr.f32.mxu0 0.0
    %907 = vmatmul.mubr.f32.gmra.mxu0 %v840
    %v908 = vpop.f32.mrf.mxu0
    %v909 = vadd.f32 %v409, %v908
    %v910 = vpop.f32.mrf.mxu0
    %911 = vdwg.mxu0
    %v912 = vxor.u32 %v909, 2147483648
    %v913 = vmul.f32 %v912, 1.442695
    %v914 = vpow.pop %v913
    %v915 = vadd.f32 %v914, 1.0
    %v916 = vrcp.pop %v915
    %v917 = vmul.f32 1.0, %v916
    %919 = vrot.lane.b32.xlu0 %v909, 80
    %v920 = vpop.permute.xlu0 %919
    %v922 = vmul.f32 %v917, %v920
    %924 = vrot.lane.b32.xlu0 %v922, 32
    %v925 = vpop.permute.xlu0 %924
    %v927 = vadd.f32 %v909, %v925
    %v928 = vtanh.pop %v927
    %v929 = vsub.f32 1.0, %v917
    %931 = vrot.lane.b32.xlu0 %v928, 112
    %v932 = vpop.permute.xlu0 %931
    %v934 = vmul.f32 %v929, %v932
    %v935 = vmul.f32 %v917, %v627
    %v936 = vadd.f32 %v934, %v935
    %938 = vrot.lane.b32.xlu0 %v936, 112
    %v939 = vpop.permute.xlu0 %938
    %v941 = vsel %vm267, %v939, %v735
    %v943 = vsel %vm529, %v941, 0
    %945 = vmatprep.subr.mxu0 0.0
    %946 = vmatpush1.msra.mxu0 0.0
    %947 = vmatprep.subr.mxu0 0.0
    %948 = vmatpush1.msra.mxu0 0.0
    %949 = vmatprep.subr.mxu0 0.0
    %950 = vmatpush1.msra.mxu0 0.0
    %951 = vmatprep.subr.mxu0 0.0
    %952 = vmatpush1.msra.mxu0 0.0
    %953 = vmatprep.subr.mxu0 0.0
    %954 = vmatpush1.msra.mxu0 0.0
    %955 = vmatprep.subr.mxu0 0.0
    %956 = vmatpush1.msra.mxu0 0.0
    %957 = vmatprep.subr.mxu0 0.0
    %958 = vmatpush1.msra.mxu0 0.0
    %959 = vmatprep.subr.mxu0 0.0
    %960 = vmatpush1.msra.mxu0 0.0
    %961 = vmatprep.subr.mxu0 0.0
    %962 = vmatpush1.msra.mxu0 0.0
    %963 = vmatprep.subr.mxu0 0.0
    %964 = vmatpush1.msra.mxu0 0.0
    %965 = vmatprep.subr.mxu0 0.0
    %966 = vmatpush1.msra.mxu0 0.0
    %967 = vmatprep.subr.mxu0 0.0
    %968 = vmatpush1.msra.mxu0 0.0
    %969 = vmatprep.subr.mxu0 0.0
    %970 = vmatpush1.msra.mxu0 %v637
    %971 = vmatprep.subr.mxu0 0.0
    %972 = vmatpush1.msra.mxu0 %v636
    %973 = vmatprep.subr.mxu0 0.0
    %974 = vmatpush1.msra.mxu0 %v635
    %975 = vmatprep.subr.mxu0 0.0
    %976 = vmatpush1.msra.mxu0 %v634
    %977 = vmatprep.subr.mxu0 0.0
    %978 = vmatpush2.msra.mxu0 0.0
    %979 = vmatprep.subr.mxu0 0.0
    %980 = vmatpush2.msra.mxu0 0.0
    %981 = vmatprep.subr.mxu0 0.0
    %982 = vmatpush2.msra.mxu0 0.0
    %983 = vmatprep.subr.mxu0 0.0
    %984 = vmatpush2.msra.mxu0 0.0
    %985 = vmatprep.subr.mxu0 0.0
    %986 = vmatpush2.msra.mxu0 0.0
    %987 = vmatprep.subr.mxu0 0.0
    %988 = vmatpush2.msra.mxu0 0.0
    %989 = vmatprep.subr.mxu0 0.0
    %990 = vmatpush2.msra.mxu0 0.0
    %991 = vmatprep.subr.mxu0 0.0
    %992 = vmatpush2.msra.mxu0 0.0
    %993 = vmatprep.subr.mxu0 0.0
    %994 = vmatpush2.msra.mxu0 0.0
    %995 = vmatprep.subr.mxu0 0.0
    %996 = vmatpush2.msra.mxu0 0.0
    %997 = vmatprep.subr.mxu0 0.0
    %998 = vmatpush2.msra.mxu0 0.0
    %999 = vmatprep.subr.mxu0 0.0
    %1000 = vmatpush2.msra.mxu0 0.0
    %1001 = vmatprep.subr.mxu0 0.0
    %1002 = vmatpush2.msra.mxu0 0.0
    %1003 = vmatprep.subr.mxu0 0.0
    %1004 = vmatpush2.msra.mxu0 0.0
    %1005 = vmatprep.subr.mxu0 0.0
    %1006 = vmatpush2.msra.mxu0 0.0
    %1007 = vmatprep.subr.mxu0 0.0
    %1008 = vmatpush2.msra.mxu0 0.0
    %1009 = vmatprep.mubr.f32.mxu0 0.0
    %1010 = vmatmul.mubr.f32.gmra.mxu0 %v943
    %v1011 = vpop.f32.mrf.mxu0
    %v1012 = vadd.f32 %v417, %v1011
    %v1013 = vpop.f32.mrf.mxu0
    %1014 = vdwg.mxu0
    %v1015 = vxor.u32 %v1012, 2147483648
    %v1016 = vmul.f32 %v1015, 1.442695
    %v1017 = vpow.pop %v1016
    %v1018 = vadd.f32 %v1017, 1.0
    %v1019 = vrcp.pop %v1018
    %v1020 = vmul.f32 1.0, %v1019
    %1022 = vrot.lane.b32.xlu0 %v1012, 80
    %v1023 = vpop.permute.xlu0 %1022
    %v1025 = vmul.f32 %v1020, %v1023
    %1027 = vrot.lane.b32.xlu0 %v1025, 32
    %v1028 = vpop.permute.xlu0 %1027
    %v1030 = vadd.f32 %v1012, %v1028
    %v1031 = vtanh.pop %v1030
    %v1032 = vsub.f32 1.0, %v1020
    %1034 = vrot.lane.b32.xlu0 %v1031, 112
    %v1035 = vpop.permute.xlu0 %1034
    %v1037 = vmul.f32 %v1032, %v1035
    %v1038 = vmul.f32 %v1020, %v735
    %v1039 = vadd.f32 %v1037, %v1038
    %v1040 = vsel %vm267, %v836, 0
    %1042 = vmatprep.subr.mxu0 0.0
    %1043 = vmatpush1.msra.mxu0 0.0
    %1044 = vmatprep.subr.mxu0 0.0
    %1045 = vmatpush1.msra.mxu0 0.0
    %1046 = vmatprep.subr.mxu0 0.0
    %1047 = vmatpush1.msra.mxu0 0.0
    %1048 = vmatprep.subr.mxu0 0.0
    %1049 = vmatpush1.msra.mxu0 0.0
    %1050 = vmatprep.subr.mxu0 0.0
    %1051 = vmatpush1.msra.mxu0 0.0
    %1052 = vmatprep.subr.mxu0 0.0
    %1053 = vmatpush1.msra.mxu0 0.0
    %1054 = vmatprep.subr.mxu0 0.0
    %1055 = vmatpush1.msra.mxu0 0.0
    %1056 = vmatprep.subr.mxu0 0.0
    %1057 = vmatpush1.msra.mxu0 0.0
    %1058 = vmatprep.subr.mxu0 0.0
    %1059 = vmatpush1.msra.mxu0 0.0
    %1060 = vmatprep.subr.mxu0 0.0
    %1061 = vmatpush1.msra.mxu0 0.0
    %1062 = vmatprep.subr.mxu0 0.0
    %1063 = vmatpush1.msra.mxu0 0.0
    %1064 = vmatprep.subr.mxu0 0.0
    %1065 = vmatpush1.msra.mxu0 0.0
    %1066 = vmatprep.subr.mxu0 0.0
    %1067 = vmatpush1.msra.mxu0 0.0
    %1068 = vmatprep.subr.mxu0 0.0
    %1069 = vmatpush1.msra.mxu0 0.0
    %1070 = vmatprep.subr.mxu0 0.0
    %1071 = vmatpush1.msra.mxu0 %v420
    %1072 = vmatprep.subr.mxu0 0.0
    %1073 = vmatpush1.msra.mxu0 %v419
    %1074 = vmatprep.subr.mxu0 0.0
    %1075 = vmatpush2.msra.mxu0 0.0
    %1076 = vmatprep.subr.mxu0 0.0
    %1077 = vmatpush2.msra.mxu0 0.0
    %1078 = vmatprep.subr.mxu0 0.0
    %1079 = vmatpush2.msra.mxu0 0.0
    %1080 = vmatprep.subr.mxu0 0.0
    %1081 = vmatpush2.msra.mxu0 0.0
    %1082 = vmatprep.subr.mxu0 0.0
    %1083 = vmatpush2.msra.mxu0 0.0
    %1084 = vmatprep.subr.mxu0 0.0
    %1085 = vmatpush2.msra.mxu0 0.0
    %1086 = vmatprep.subr.mxu0 0.0
    %1087 = vmatpush2.msra.mxu0 0.0
    %1088 = vmatprep.subr.mxu0 0.0
    %1089 = vmatpush2.msra.mxu0 0.0
    %1090 = vmatprep.subr.mxu0 0.0
    %1091 = vmatpush2.msra.mxu0 0.0
    %1092 = vmatprep.subr.mxu0 0.0
    %1093 = vmatpush2.msra.mxu0 0.0
    %1094 = vmatprep.subr.mxu0 0.0
    %1095 = vmatpush2.msra.mxu0 0.0
    %1096 = vmatprep.subr.mxu0 0.0
    %1097 = vmatpush2.msra.mxu0 0.0
    %1098 = vmatprep.subr.mxu0 0.0
    %1099 = vmatpush2.msra.mxu0 0.0
    %1100 = vmatprep.subr.mxu0 0.0
    %1101 = vmatpush2.msra.mxu0 0.0
    %1102 = vmatprep.subr.mxu0 0.0
    %1103 = vmatpush2.msra.mxu0 0.0
    %1104 = vmatprep.subr.mxu0 0.0
    %1105 = vmatpush2.msra.mxu0 0.0
    %1106 = vmatprep.mubr.f32.mxu0 0.0
    %1107 = vmatmul.mubr.f32.gmra.mxu0 %v1040
    %v1108 = vpop.f32.mrf.mxu0
    %v1109 = vadd.f32 %v402, %v1108
    %v1110 = vpop.f32.mrf.mxu0
    %1111 = vdwg.mxu0
    %v1112 = vadd.f32 %v369, %v1109
    %v1113 = vxor.u32 %v1112, 2147483648
    %v1114 = vmul.f32 %v1113, 1.442695
    %v1115 = vpow.pop %v1114
    %v1116 = vadd.f32 %v1115, 1.0
    %v1117 = vrcp.pop %v1116
    %v1118 = vmul.f32 1.0, %v1117
    %1120 = vrot.lane.b32.xlu0 %v1109, 96
    %v1121 = vpop.permute.xlu0 %1120
    %v1123 = vmul.f32 %v1118, %v1121
    %1125 = vrot.lane.b32.xlu0 %v1123, 32
    %v1126 = vpop.permute.xlu0 %1125
    %v1128 = vadd.f32 %v369, %v1126
    %v1129 = vtanh.pop %v1128
    %v1130 = vsub.f32 1.0, %v1118
    %1132 = vrot.lane.b32.xlu0 %v1129, 112
    %v1133 = vpop.permute.xlu0 %1132
    %v1135 = vmul.f32 %v1130, %v1133
    %v1136 = vmul.f32 %v1118, %v833
    %v1137 = vadd.f32 %v1135, %v1136
    %1139 = vrot.lane.b32.xlu0 %v1137, 112
    %v1140 = vpop.permute.xlu0 %1139
    %v1142 = vsel %vm267, %v1140, %v936
    %v1144 = vsel %vm529, %v1142, 0
    %1146 = vmatprep.subr.mxu0 0.0
    %1147 = vmatpush1.msra.mxu0 0.0
    %1148 = vmatprep.subr.mxu0 0.0
    %1149 = vmatpush1.msra.mxu0 0.0
    %1150 = vmatprep.subr.mxu0 0.0
    %1151 = vmatpush1.msra.mxu0 0.0
    %1152 = vmatprep.subr.mxu0 0.0
    %1153 = vmatpush1.msra.mxu0 0.0
    %1154 = vmatprep.subr.mxu0 0.0
    %1155 = vmatpush1.msra.mxu0 0.0
    %1156 = vmatprep.subr.mxu0 0.0
    %1157 = vmatpush1.msra.mxu0 0.0
    %1158 = vmatprep.subr.mxu0 0.0
    %1159 = vmatpush1.msra.mxu0 0.0
    %1160 = vmatprep.subr.mxu0 0.0
    %1161 = vmatpush1.msra.mxu0 0.0
    %1162 = vmatprep.subr.mxu0 0.0
    %1163 = vmatpush1.msra.mxu0 0.0
    %1164 = vmatprep.subr.mxu0 0.0
    %1165 = vmatpush1.msra.mxu0 0.0
    %1166 = vmatprep.subr.mxu0 0.0
    %1167 = vmatpush1.msra.mxu0 0.0
    %1168 = vmatprep.subr.mxu0 0.0
    %1169 = vmatpush1.msra.mxu0 0.0
    %1170 = vmatprep.subr.mxu0 0.0
    %1171 = vmatpush1.msra.mxu0 %v528
    %1172 = vmatprep.subr.mxu0 0.0
    %1173 = vmatpush1.msra.mxu0 %v527
    %1174 = vmatprep.subr.mxu0 0.0
    %1175 = vmatpush1.msra.mxu0 %v526
    %1176 = vmatprep.subr.mxu0 0.0
    %1177 = vmatpush1.msra.mxu0 %v525
    %1178 = vmatprep.subr.mxu0 0.0
    %1179 = vmatpush2.msra.mxu0 0.0
    %1180 = vmatprep.subr.mxu0 0.0
    %1181 = vmatpush2.msra.mxu0 0.0
    %1182 = vmatprep.subr.mxu0 0.0
    %1183 = vmatpush2.msra.mxu0 0.0
    %1184 = vmatprep.subr.mxu0 0.0
    %1185 = vmatpush2.msra.mxu0 0.0
    %1186 = vmatprep.subr.mxu0 0.0
    %1187 = vmatpush2.msra.mxu0 0.0
    %1188 = vmatprep.subr.mxu0 0.0
    %1189 = vmatpush2.msra.mxu0 0.0
    %1190 = vmatprep.subr.mxu0 0.0
    %1191 = vmatpush2.msra.mxu0 0.0
    %1192 = vmatprep.subr.mxu0 0.0
    %1193 = vmatpush2.msra.mxu0 0.0
    %1194 = vmatprep.subr.mxu0 0.0
    %1195 = vmatpush2.msra.mxu0 0.0
    %1196 = vmatprep.subr.mxu0 0.0
    %1197 = vmatpush2.msra.mxu0 0.0
    %1198 = vmatprep.subr.mxu0 0.0
    %1199 = vmatpush2.msra.mxu0 0.0
    %1200 = vmatprep.subr.mxu0 0.0
    %1201 = vmatpush2.msra.mxu0 0.0
    %1202 = vmatprep.subr.mxu0 0.0
    %1203 = vmatpush2.msra.mxu0 0.0
    %1204 = vmatprep.subr.mxu0 0.0
    %1205 = vmatpush2.msra.mxu0 0.0
    %1206 = vmatprep.subr.mxu0 0.0
    %1207 = vmatpush2.msra.mxu0 0.0
    %1208 = vmatprep.subr.mxu0 0.0
    %1209 = vmatpush2.msra.mxu0 0.0
    %1210 = vmatprep.mubr.f32.mxu0 0.0
    %1211 = vmatmul.mubr.f32.gmra.mxu0 %v1144
    %v1212 = vpop.f32.mrf.mxu0
    %v1213 = vadd.f32 %v409, %v1212
    %v1214 = vpop.f32.mrf.mxu0
    %1215 = vdwg.mxu0
    %v1216 = vxor.u32 %v1213, 2147483648
    %v1217 = vmul.f32 %v1216, 1.442695
    %v1218 = vpow.pop %v1217
    %v1219 = vadd.f32 %v1218, 1.0
    %v1220 = vrcp.pop %v1219
    %v1221 = vmul.f32 1.0, %v1220
    %1223 = vrot.lane.b32.xlu0 %v1213, 80
    %v1224 = vpop.permute.xlu0 %1223
    %v1226 = vmul.f32 %v1221, %v1224
    %1228 = vrot.lane.b32.xlu0 %v1226, 32
    %v1229 = vpop.permute.xlu0 %1228
    %v1231 = vadd.f32 %v1213, %v1229
    %v1232 = vtanh.pop %v1231
    %v1233 = vsub.f32 1.0, %v1221
    %1235 = vrot.lane.b32.xlu0 %v1232, 112
    %v1236 = vpop.permute.xlu0 %1235
    %v1238 = vmul.f32 %v1233, %v1236
    %v1239 = vmul.f32 %v1221, %v936
    %v1240 = vadd.f32 %v1238, %v1239
    %1242 = vrot.lane.b32.xlu0 %v1240, 112
    %v1243 = vpop.permute.xlu0 %1242
    %v1245 = vsel %vm267, %v1243, %v1039
    %v1247 = vsel %vm529, %v1245, 0
    %1249 = vmatprep.subr.mxu0 0.0
    %1250 = vmatpush1.msra.mxu0 0.0
    %1251 = vmatprep.subr.mxu0 0.0
    %1252 = vmatpush1.msra.mxu0 0.0
    %1253 = vmatprep.subr.mxu0 0.0
    %1254 = vmatpush1.msra.mxu0 0.0
    %1255 = vmatprep.subr.mxu0 0.0
    %1256 = vmatpush1.msra.mxu0 0.0
    %1257 = vmatprep.subr.mxu0 0.0
    %1258 = vmatpush1.msra.mxu0 0.0
    %1259 = vmatprep.subr.mxu0 0.0
    %1260 = vmatpush1.msra.mxu0 0.0
    %1261 = vmatprep.subr.mxu0 0.0
    %1262 = vmatpush1.msra.mxu0 0.0
    %1263 = vmatprep.subr.mxu0 0.0
    %1264 = vmatpush1.msra.mxu0 0.0
    %1265 = vmatprep.subr.mxu0 0.0
    %1266 = vmatpush1.msra.mxu0 0.0
    %1267 = vmatprep.subr.mxu0 0.0
    %1268 = vmatpush1.msra.mxu0 0.0
    %1269 = vmatprep.subr.mxu0 0.0
    %1270 = vmatpush1.msra.mxu0 0.0
    %1271 = vmatprep.subr.mxu0 0.0
    %1272 = vmatpush1.msra.mxu0 0.0
    %1273 = vmatprep.subr.mxu0 0.0
    %1274 = vmatpush1.msra.mxu0 %v637
    %1275 = vmatprep.subr.mxu0 0.0
    %1276 = vmatpush1.msra.mxu0 %v636
    %1277 = vmatprep.subr.mxu0 0.0
    %1278 = vmatpush1.msra.mxu0 %v635
    %1279 = vmatprep.subr.mxu0 0.0
    %1280 = vmatpush1.msra.mxu0 %v634
    %1281 = vmatprep.subr.mxu0 0.0
    %1282 = vmatpush2.msra.mxu0 0.0
    %1283 = vmatprep.subr.mxu0 0.0
    %1284 = vmatpush2.msra.mxu0 0.0
    %1285 = vmatprep.subr.mxu0 0.0
    %1286 = vmatpush2.msra.mxu0 0.0
    %1287 = vmatprep.subr.mxu0 0.0
    %1288 = vmatpush2.msra.mxu0 0.0
    %1289 = vmatprep.subr.mxu0 0.0
    %1290 = vmatpush2.msra.mxu0 0.0
    %1291 = vmatprep.subr.mxu0 0.0
    %1292 = vmatpush2.msra.mxu0 0.0
    %1293 = vmatprep.subr.mxu0 0.0
    %1294 = vmatpush2.msra.mxu0 0.0
    %1295 = vmatprep.subr.mxu0 0.0
    %1296 = vmatpush2.msra.mxu0 0.0
    %1297 = vmatprep.subr.mxu0 0.0
    %1298 = vmatpush2.msra.mxu0 0.0
    %1299 = vmatprep.subr.mxu0 0.0
    %1300 = vmatpush2.msra.mxu0 0.0
    %1301 = vmatprep.subr.mxu0 0.0
    %1302 = vmatpush2.msra.mxu0 0.0
    %1303 = vmatprep.subr.mxu0 0.0
    %1304 = vmatpush2.msra.mxu0 0.0
    %1305 = vmatprep.subr.mxu0 0.0
    %1306 = vmatpush2.msra.mxu0 0.0
    %1307 = vmatprep.subr.mxu0 0.0
    %1308 = vmatpush2.msra.mxu0 0.0
    %1309 = vmatprep.subr.mxu0 0.0
    %1310 = vmatpush2.msra.mxu0 0.0
    %1311 = vmatprep.subr.mxu0 0.0
    %1312 = vmatpush2.msra.mxu0 0.0
    %1313 = vmatprep.mubr.f32.mxu0 0.0
    %1314 = vmatmul.mubr.f32.gmra.mxu0 %v1247
    %v1315 = vpop.f32.mrf.mxu0
    %v1316 = vadd.f32 %v417, %v1315
    %v1317 = vpop.f32.mrf.mxu0
    %1318 = vdwg.mxu0
    %v1319 = vxor.u32 %v1316, 2147483648
    %v1320 = vmul.f32 %v1319, 1.442695
    %v1321 = vpow.pop %v1320
    %v1322 = vadd.f32 %v1321, 1.0
    %v1323 = vrcp.pop %v1322
    %v1324 = vmul.f32 1.0, %v1323
    %1326 = vrot.lane.b32.xlu0 %v1316, 80
    %v1327 = vpop.permute.xlu0 %1326
    %v1329 = vmul.f32 %v1324, %v1327
    %1331 = vrot.lane.b32.xlu0 %v1329, 32
    %v1332 = vpop.permute.xlu0 %1331
    %v1334 = vadd.f32 %v1316, %v1332
    %v1335 = vtanh.pop %v1334
    %v1336 = vsub.f32 1.0, %v1324
    %1338 = vrot.lane.b32.xlu0 %v1335, 112
    %v1339 = vpop.permute.xlu0 %1338
    %v1341 = vmul.f32 %v1336, %v1339
    %v1342 = vmul.f32 %v1324, %v1039
    %v1343 = vadd.f32 %v1341, %v1342
    %v1344 = vsel %vm267, %v1140, 0
    %1346 = vmatprep.subr.mxu0 0.0
    %1347 = vmatpush1.msra.mxu0 0.0
    %1348 = vmatprep.subr.mxu0 0.0
    %1349 = vmatpush1.msra.mxu0 0.0
    %1350 = vmatprep.subr.mxu0 0.0
    %1351 = vmatpush1.msra.mxu0 0.0
    %1352 = vmatprep.subr.mxu0 0.0
    %1353 = vmatpush1.msra.mxu0 0.0
    %1354 = vmatprep.subr.mxu0 0.0
    %1355 = vmatpush1.msra.mxu0 0.0
    %1356 = vmatprep.subr.mxu0 0.0
    %1357 = vmatpush1.msra.mxu0 0.0
    %1358 = vmatprep.subr.mxu0 0.0
    %1359 = vmatpush1.msra.mxu0 0.0
    %1360 = vmatprep.subr.mxu0 0.0
    %1361 = vmatpush1.msra.mxu0 0.0
    %1362 = vmatprep.subr.mxu0 0.0
    %1363 = vmatpush1.msra.mxu0 0.0
    %1364 = vmatprep.subr.mxu0 0.0
    %1365 = vmatpush1.msra.mxu0 0.0
    %1366 = vmatprep.subr.mxu0 0.0
    %1367 = vmatpush1.msra.mxu0 0.0
    %1368 = vmatprep.subr.mxu0 0.0
    %1369 = vmatpush1.msra.mxu0 0.0
    %1370 = vmatprep.subr.mxu0 0.0
    %1371 = vmatpush1.msra.mxu0 0.0
    %1372 = vmatprep.subr.mxu0 0.0
    %1373 = vmatpush1.msra.mxu0 0.0
    %1374 = vmatprep.subr.mxu0 0.0
    %1375 = vmatpush1.msra.mxu0 %v420
    %1376 = vmatprep.subr.mxu0 0.0
    %1377 = vmatpush1.msra.mxu0 %v419
    %1378 = vmatprep.subr.mxu0 0.0
    %1379 = vmatpush2.msra.mxu0 0.0
    %1380 = vmatprep.subr.mxu0 0.0
    %1381 = vmatpush2.msra.mxu0 0.0
    %1382 = vmatprep.subr.mxu0 0.0
    %1383 = vmatpush2.msra.mxu0 0.0
    %1384 = vmatprep.subr.mxu0 0.0
    %1385 = vmatpush2.msra.mxu0 0.0
    %1386 = vmatprep.subr.mxu0 0.0
    %1387 = vmatpush2.msra.mxu0 0.0
    %1388 = vmatprep.subr.mxu0 0.0
    %1389 = vmatpush2.msra.mxu0 0.0
    %1390 = vmatprep.subr.mxu0 0.0
    %1391 = vmatpush2.msra.mxu0 0.0
    %1392 = vmatprep.subr.mxu0 0.0
    %1393 = vmatpush2.msra.mxu0 0.0
    %1394 = vmatprep.subr.mxu0 0.0
    %1395 = vmatpush2.msra.mxu0 0.0
    %1396 = vmatprep.subr.mxu0 0.0
    %1397 = vmatpush2.msra.mxu0 0.0
    %1398 = vmatprep.subr.mxu0 0.0
    %1399 = vmatpush2.msra.mxu0 0.0
    %1400 = vmatprep.subr.mxu0 0.0
    %1401 = vmatpush2.msra.mxu0 0.0
    %1402 = vmatprep.subr.mxu0 0.0
    %1403 = vmatpush2.msra.mxu0 0.0
    %1404 = vmatprep.subr.mxu0 0.0
    %1405 = vmatpush2.msra.mxu0 0.0
    %1406 = vmatprep.subr.mxu0 0.0
    %1407 = vmatpush2.msra.mxu0 0.0
    %1408 = vmatprep.subr.mxu0 0.0
    %1409 = vmatpush2.msra.mxu0 0.0
    %1410 = vmatprep.mubr.f32.mxu0 0.0
    %1411 = vmatmul.mubr.f32.gmra.mxu0 %v1344
    %v1412 = vpop.f32.mrf.mxu0
    %v1413 = vadd.f32 %v402, %v1412
    %v1414 = vpop.f32.mrf.mxu0
    %1415 = vdwg.mxu0
    %v1416 = vadd.f32 %v374, %v1413
    %v1417 = vxor.u32 %v1416, 2147483648
    %v1418 = vmul.f32 %v1417, 1.442695
    %v1419 = vpow.pop %v1418
    %v1420 = vadd.f32 %v1419, 1.0
    %v1421 = vrcp.pop %v1420
    %v1422 = vmul.f32 1.0, %v1421
    %1424 = vrot.lane.b32.xlu0 %v1413, 96
    %v1425 = vpop.permute.xlu0 %1424
    %v1427 = vmul.f32 %v1422, %v1425
    %1429 = vrot.lane.b32.xlu0 %v1427, 32
    %v1430 = vpop.permute.xlu0 %1429
    %v1432 = vadd.f32 %v374, %v1430
    %v1433 = vtanh.pop %v1432
    %v1434 = vsub.f32 1.0, %v1422
    %1436 = vrot.lane.b32.xlu0 %v1433, 112
    %v1437 = vpop.permute.xlu0 %1436
    %v1439 = vmul.f32 %v1434, %v1437
    %v1440 = vmul.f32 %v1422, %v1137
    %v1441 = vadd.f32 %v1439, %v1440
    %1443 = vrot.lane.b32.xlu0 %v1441, 112
    %v1444 = vpop.permute.xlu0 %1443
    %v1446 = vsel %vm267, %v1444, %v1240
    %v1448 = vsel %vm529, %v1446, 0
    %1450 = vmatprep.subr.mxu0 0.0
    %1451 = vmatpush1.msra.mxu0 0.0
    %1452 = vmatprep.subr.mxu0 0.0
    %1453 = vmatpush1.msra.mxu0 0.0
    %1454 = vmatprep.subr.mxu0 0.0
    %1455 = vmatpush1.msra.mxu0 0.0
    %1456 = vmatprep.subr.mxu0 0.0
    %1457 = vmatpush1.msra.mxu0 0.0
    %1458 = vmatprep.subr.mxu0 0.0
    %1459 = vmatpush1.msra.mxu0 0.0
    %1460 = vmatprep.subr.mxu0 0.0
    %1461 = vmatpush1.msra.mxu0 0.0
    %1462 = vmatprep.subr.mxu0 0.0
    %1463 = vmatpush1.msra.mxu0 0.0
    %1464 = vmatprep.subr.mxu0 0.0
    %1465 = vmatpush1.msra.mxu0 0.0
    %1466 = vmatprep.subr.mxu0 0.0
    %1467 = vmatpush1.msra.mxu0 0.0
    %1468 = vmatprep.subr.mxu0 0.0
    %1469 = vmatpush1.msra.mxu0 0.0
    %1470 = vmatprep.subr.mxu0 0.0
    %1471 = vmatpush1.msra.mxu0 0.0
    %1472 = vmatprep.subr.mxu0 0.0
    %1473 = vmatpush1.msra.mxu0 0.0
    %1474 = vmatprep.subr.mxu0 0.0
    %1475 = vmatpush1.msra.mxu0 %v528
    %1476 = vmatprep.subr.mxu0 0.0
    %1477 = vmatpush1.msra.mxu0 %v527
    %1478 = vmatprep.subr.mxu0 0.0
    %1479 = vmatpush1.msra.mxu0 %v526
    %1480 = vmatprep.subr.mxu0 0.0
    %1481 = vmatpush1.msra.mxu0 %v525
    %1482 = vmatprep.subr.mxu0 0.0
    %1483 = vmatpush2.msra.mxu0 0.0
    %1484 = vmatprep.subr.mxu0 0.0
    %1485 = vmatpush2.msra.mxu0 0.0
    %1486 = vmatprep.subr.mxu0 0.0
    %1487 = vmatpush2.msra.mxu0 0.0
    %1488 = vmatprep.subr.mxu0 0.0
    %1489 = vmatpush2.msra.mxu0 0.0
    %1490 = vmatprep.subr.mxu0 0.0
    %1491 = vmatpush2.msra.mxu0 0.0
    %1492 = vmatprep.subr.mxu0 0.0
    %1493 = vmatpush2.msra.mxu0 0.0
    %1494 = vmatprep.subr.mxu0 0.0
    %1495 = vmatpush2.msra.mxu0 0.0
    %1496 = vmatprep.subr.mxu0 0.0
    %1497 = vmatpush2.msra.mxu0 0.0
    %1498 = vmatprep.subr.mxu0 0.0
    %1499 = vmatpush2.msra.mxu0 0.0
    %1500 = vmatprep.subr.mxu0 0.0
    %1501 = vmatpush2.msra.mxu0 0.0
    %1502 = vmatprep.subr.mxu0 0.0
    %1503 = vmatpush2.msra.mxu0 0.0
    %1504 = vmatprep.subr.mxu0 0.0
    %1505 = vmatpush2.msra.mxu0 0.0
    %1506 = vmatprep.subr.mxu0 0.0
    %1507 = vmatpush2.msra.mxu0 0.0
    %1508 = vmatprep.subr.mxu0 0.0
    %1509 = vmatpush2.msra.mxu0 0.0
    %1510 = vmatprep.subr.mxu0 0.0
    %1511 = vmatpush2.msra.mxu0 0.0
    %1512 = vmatprep.subr.mxu0 0.0
    %1513 = vmatpush2.msra.mxu0 0.0
    %1514 = vmatprep.mubr.f32.mxu0 0.0
    %1515 = vmatmul.mubr.f32.gmra.mxu0 %v1448
    %v1516 = vpop.f32.mrf.mxu0
    %v1517 = vadd.f32 %v409, %v1516
    %v1518 = vpop.f32.mrf.mxu0
    %1519 = vdwg.mxu0
    %v1520 = vxor.u32 %v1517, 2147483648
    %v1521 = vmul.f32 %v1520, 1.442695
    %v1522 = vpow.pop %v1521
    %v1523 = vadd.f32 %v1522, 1.0
    %v1524 = vrcp.pop %v1523
    %v1525 = vmul.f32 1.0, %v1524
    %1527 = vrot.lane.b32.xlu0 %v1517, 80
    %v1528 = vpop.permute.xlu0 %1527
    %v1530 = vmul.f32 %v1525, %v1528
    %1532 = vrot.lane.b32.xlu0 %v1530, 32
    %v1533 = vpop.permute.xlu0 %1532
    %v1535 = vadd.f32 %v1517, %v1533
    %v1536 = vtanh.pop %v1535
    %v1537 = vsub.f32 1.0, %v1525
    %1539 = vrot.lane.b32.xlu0 %v1536, 112
    %v1540 = vpop.permute.xlu0 %1539
    %v1542 = vmul.f32 %v1537, %v1540
    %v1543 = vmul.f32 %v1525, %v1240
    %v1544 = vadd.f32 %v1542, %v1543
    %1546 = vrot.lane.b32.xlu0 %v1544, 112
    %v1547 = vpop.permute.xlu0 %1546
    %v1549 = vsel %vm267, %v1547, %v1343
    %v1551 = vsel %vm529, %v1549, 0
    %1553 = vmatprep.subr.mxu0 0.0
    %1554 = vmatpush1.msra.mxu0 0.0
    %1555 = vmatprep.subr.mxu0 0.0
    %1556 = vmatpush1.msra.mxu0 0.0
    %1557 = vmatprep.subr.mxu0 0.0
    %1558 = vmatpush1.msra.mxu0 0.0
    %1559 = vmatprep.subr.mxu0 0.0
    %1560 = vmatpush1.msra.mxu0 0.0
    %1561 = vmatprep.subr.mxu0 0.0
    %1562 = vmatpush1.msra.mxu0 0.0
    %1563 = vmatprep.subr.mxu0 0.0
    %1564 = vmatpush1.msra.mxu0 0.0
    %1565 = vmatprep.subr.mxu0 0.0
    %1566 = vmatpush1.msra.mxu0 0.0
    %1567 = vmatprep.subr.mxu0 0.0
    %1568 = vmatpush1.msra.mxu0 0.0
    %1569 = vmatprep.subr.mxu0 0.0
    %1570 = vmatpush1.msra.mxu0 0.0
    %1571 = vmatprep.subr.mxu0 0.0
    %1572 = vmatpush1.msra.mxu0 0.0
    %1573 = vmatprep.subr.mxu0 0.0
    %1574 = vmatpush1.msra.mxu0 0.0
    %1575 = vmatprep.subr.mxu0 0.0
    %1576 = vmatpush1.msra.mxu0 0.0
    %1577 = vmatprep.subr.mxu0 0.0
    %1578 = vmatpush1.msra.mxu0 %v637
    %1579 = vmatprep.subr.mxu0 0.0
    %1580 = vmatpush1.msra.mxu0 %v636
    %1581 = vmatprep.subr.mxu0 0.0
    %1582 = vmatpush1.msra.mxu0 %v635
    %1583 = vmatprep.subr.mxu0 0.0
    %1584 = vmatpush1.msra.mxu0 %v634
    %1585 = vmatprep.subr.mxu0 0.0
    %1586 = vmatpush2.msra.mxu0 0.0
    %1587 = vmatprep.subr.mxu0 0.0
    %1588 = vmatpush2.msra.mxu0 0.0
    %1589 = vmatprep.subr.mxu0 0.0
    %1590 = vmatpush2.msra.mxu0 0.0
    %1591 = vmatprep.subr.mxu0 0.0
    %1592 = vmatpush2.msra.mxu0 0.0
    %1593 = vmatprep.subr.mxu0 0.0
    %1594 = vmatpush2.msra.mxu0 0.0
    %1595 = vmatprep.subr.mxu0 0.0
    %1596 = vmatpush2.msra.mxu0 0.0
    %1597 = vmatprep.subr.mxu0 0.0
    %1598 = vmatpush2.msra.mxu0 0.0
    %1599 = vmatprep.subr.mxu0 0.0
    %1600 = vmatpush2.msra.mxu0 0.0
    %1601 = vmatprep.subr.mxu0 0.0
    %1602 = vmatpush2.msra.mxu0 0.0
    %1603 = vmatprep.subr.mxu0 0.0
    %1604 = vmatpush2.msra.mxu0 0.0
    %1605 = vmatprep.subr.mxu0 0.0
    %1606 = vmatpush2.msra.mxu0 0.0
    %1607 = vmatprep.subr.mxu0 0.0
    %1608 = vmatpush2.msra.mxu0 0.0
    %1609 = vmatprep.subr.mxu0 0.0
    %1610 = vmatpush2.msra.mxu0 0.0
    %1611 = vmatprep.subr.mxu0 0.0
    %1612 = vmatpush2.msra.mxu0 0.0
    %1613 = vmatprep.subr.mxu0 0.0
    %1614 = vmatpush2.msra.mxu0 0.0
    %1615 = vmatprep.subr.mxu0 0.0
    %1616 = vmatpush2.msra.mxu0 0.0
    %1617 = vmatprep.mubr.f32.mxu0 0.0
    %1618 = vmatmul.mubr.f32.gmra.mxu0 %v1551
    %v1619 = vpop.f32.mrf.mxu0
    %v1620 = vadd.f32 %v417, %v1619
    %v1621 = vpop.f32.mrf.mxu0
    %1622 = vdwg.mxu0
    %v1623 = vxor.u32 %v1620, 2147483648
    %v1624 = vmul.f32 %v1623, 1.442695
    %v1625 = vpow.pop %v1624
    %v1626 = vadd.f32 %v1625, 1.0
    %v1627 = vrcp.pop %v1626
    %v1628 = vmul.f32 1.0, %v1627
    %1630 = vrot.lane.b32.xlu0 %v1620, 80
    %v1631 = vpop.permute.xlu0 %1630
    %v1633 = vmul.f32 %v1628, %v1631
    %1635 = vrot.lane.b32.xlu0 %v1633, 32
    %v1636 = vpop.permute.xlu0 %1635
    %v1638 = vadd.f32 %v1620, %v1636
    %v1639 = vtanh.pop %v1638
    %v1640 = vsub.f32 1.0, %v1628
    %1642 = vrot.lane.b32.xlu0 %v1639, 112
    %v1643 = vpop.permute.xlu0 %1642
    %v1645 = vmul.f32 %v1640, %v1643
    %v1646 = vmul.f32 %v1628, %v1343
    %v1647 = vadd.f32 %v1645, %v1646
    %v1648 = vsel %vm267, %v1444, 0
    %1650 = vmatprep.subr.mxu0 0.0
    %1651 = vmatpush1.msra.mxu0 0.0
    %1652 = vmatprep.subr.mxu0 0.0
    %1653 = vmatpush1.msra.mxu0 0.0
    %1654 = vmatprep.subr.mxu0 0.0
    %1655 = vmatpush1.msra.mxu0 0.0
    %1656 = vmatprep.subr.mxu0 0.0
    %1657 = vmatpush1.msra.mxu0 0.0
    %1658 = vmatprep.subr.mxu0 0.0
    %1659 = vmatpush1.msra.mxu0 0.0
    %1660 = vmatprep.subr.mxu0 0.0
    %1661 = vmatpush1.msra.mxu0 0.0
    %1662 = vmatprep.subr.mxu0 0.0
    %1663 = vmatpush1.msra.mxu0 0.0
    %1664 = vmatprep.subr.mxu0 0.0
    %1665 = vmatpush1.msra.mxu0 0.0
    %1666 = vmatprep.subr.mxu0 0.0
    %1667 = vmatpush1.msra.mxu0 0.0
    %1668 = vmatprep.subr.mxu0 0.0
    %1669 = vmatpush1.msra.mxu0 0.0
    %1670 = vmatprep.subr.mxu0 0.0
    %1671 = vmatpush1.msra.mxu0 0.0
    %1672 = vmatprep.subr.mxu0 0.0
    %1673 = vmatpush1.msra.mxu0 0.0
    %1674 = vmatprep.subr.mxu0 0.0
    %1675 = vmatpush1.msra.mxu0 0.0
    %1676 = vmatprep.subr.mxu0 0.0
    %1677 = vmatpush1.msra.mxu0 0.0
    %1678 = vmatprep.subr.mxu0 0.0
    %1679 = vmatpush1.msra.mxu0 %v420
    %1680 = vmatprep.subr.mxu0 0.0
    %1681 = vmatpush1.msra.mxu0 %v419
    %1682 = vmatprep.subr.mxu0 0.0
    %1683 = vmatpush2.msra.mxu0 0.0
    %1684 = vmatprep.subr.mxu0 0.0
    %1685 = vmatpush2.msra.mxu0 0.0
    %1686 = vmatprep.subr.mxu0 0.0
    %1687 = vmatpush2.msra.mxu0 0.0
    %1688 = vmatprep.subr.mxu0 0.0
    %1689 = vmatpush2.msra.mxu0 0.0
    %1690 = vmatprep.subr.mxu0 0.0
    %1691 = vmatpush2.msra.mxu0 0.0
    %1692 = vmatprep.subr.mxu0 0.0
    %1693 = vmatpush2.msra.mxu0 0.0
    %1694 = vmatprep.subr.mxu0 0.0
    %1695 = vmatpush2.msra.mxu0 0.0
    %1696 = vmatprep.subr.mxu0 0.0
    %1697 = vmatpush2.msra.mxu0 0.0
    %1698 = vmatprep.subr.mxu0 0.0
    %1699 = vmatpush2.msra.mxu0 0.0
    %1700 = vmatprep.subr.mxu0 0.0
    %1701 = vmatpush2.msra.mxu0 0.0
    %1702 = vmatprep.subr.mxu0 0.0
    %1703 = vmatpush2.msra.mxu0 0.0
    %1704 = vmatprep.subr.mxu0 0.0
    %1705 = vmatpush2.msra.mxu0 0.0
    %1706 = vmatprep.subr.mxu0 0.0
    %1707 = vmatpush2.msra.mxu0 0.0
    %1708 = vmatprep.subr.mxu0 0.0
    %1709 = vmatpush2.msra.mxu0 0.0
    %1710 = vmatprep.subr.mxu0 0.0
    %1711 = vmatpush2.msra.mxu0 0.0
    %1712 = vmatprep.subr.mxu0 0.0
    %1713 = vmatpush2.msra.mxu0 0.0
    %1714 = vmatprep.mubr.f32.mxu0 0.0
    %1715 = vmatmul.mubr.f32.gmra.mxu0 %v1648
    %v1716 = vpop.f32.mrf.mxu0
    %v1717 = vadd.f32 %v402, %v1716
    %v1718 = vpop.f32.mrf.mxu0
    %1719 = vdwg.mxu0
    %v1720 = vadd.f32 %v379, %v1717
    %v1721 = vxor.u32 %v1720, 2147483648
    %v1722 = vmul.f32 %v1721, 1.442695
    %v1723 = vpow.pop %v1722
    %v1724 = vadd.f32 %v1723, 1.0
    %v1725 = vrcp.pop %v1724
    %v1726 = vmul.f32 1.0, %v1725
    %1728 = vrot.lane.b32.xlu0 %v1717, 96
    %v1729 = vpop.permute.xlu0 %1728
    %v1731 = vmul.f32 %v1726, %v1729
    %1733 = vrot.lane.b32.xlu0 %v1731, 32
    %v1734 = vpop.permute.xlu0 %1733
    %v1736 = vadd.f32 %v379, %v1734
    %v1737 = vtanh.pop %v1736
    %v1738 = vsub.f32 1.0, %v1726
    %1740 = vrot.lane.b32.xlu0 %v1737, 112
    %v1741 = vpop.permute.xlu0 %1740
    %v1743 = vmul.f32 %v1738, %v1741
    %v1744 = vmul.f32 %v1726, %v1441
    %v1745 = vadd.f32 %v1743, %v1744
    %1747 = vrot.lane.b32.xlu0 %v1745, 112
    %v1748 = vpop.permute.xlu0 %1747
    %v1750 = vsel %vm267, %v1748, %v1544
    %v1752 = vsel %vm529, %v1750, 0
    %1754 = vmatprep.subr.mxu0 0.0
    %1755 = vmatpush1.msra.mxu0 0.0
    %1756 = vmatprep.subr.mxu0 0.0
    %1757 = vmatpush1.msra.mxu0 0.0
    %1758 = vmatprep.subr.mxu0 0.0
    %1759 = vmatpush1.msra.mxu0 0.0
    %1760 = vmatprep.subr.mxu0 0.0
    %1761 = vmatpush1.msra.mxu0 0.0
    %1762 = vmatprep.subr.mxu0 0.0
    %1763 = vmatpush1.msra.mxu0 0.0
    %1764 = vmatprep.subr.mxu0 0.0
    %1765 = vmatpush1.msra.mxu0 0.0
    %1766 = vmatprep.subr.mxu0 0.0
    %1767 = vmatpush1.msra.mxu0 0.0
    %1768 = vmatprep.subr.mxu0 0.0
    %1769 = vmatpush1.msra.mxu0 0.0
    %1770 = vmatprep.subr.mxu0 0.0
    %1771 = vmatpush1.msra.mxu0 0.0
    %1772 = vmatprep.subr.mxu0 0.0
    %1773 = vmatpush1.msra.mxu0 0.0
    %1774 = vmatprep.subr.mxu0 0.0
    %1775 = vmatpush1.msra.mxu0 0.0
    %1776 = vmatprep.subr.mxu0 0.0
    %1777 = vmatpush1.msra.mxu0 0.0
    %1778 = vmatprep.subr.mxu0 0.0
    %1779 = vmatpush1.msra.mxu0 %v528
    %1780 = vmatprep.subr.mxu0 0.0
    %1781 = vmatpush1.msra.mxu0 %v527
    %1782 = vmatprep.subr.mxu0 0.0
    %1783 = vmatpush1.msra.mxu0 %v526
    %1784 = vmatprep.subr.mxu0 0.0
    %1785 = vmatpush1.msra.mxu0 %v525
    %1786 = vmatprep.subr.mxu0 0.0
    %1787 = vmatpush2.msra.mxu0 0.0
    %1788 = vmatprep.subr.mxu0 0.0
    %1789 = vmatpush2.msra.mxu0 0.0
    %1790 = vmatprep.subr.mxu0 0.0
    %1791 = vmatpush2.msra.mxu0 0.0
    %1792 = vmatprep.subr.mxu0 0.0
    %1793 = vmatpush2.msra.mxu0 0.0
    %1794 = vmatprep.subr.mxu0 0.0
    %1795 = vmatpush2.msra.mxu0 0.0
    %1796 = vmatprep.subr.mxu0 0.0
    %1797 = vmatpush2.msra.mxu0 0.0
    %1798 = vmatprep.subr.mxu0 0.0
    %1799 = vmatpush2.msra.mxu0 0.0
    %1800 = vmatprep.subr.mxu0 0.0
    %1801 = vmatpush2.msra.mxu0 0.0
    %1802 = vmatprep.subr.mxu0 0.0
    %1803 = vmatpush2.msra.mxu0 0.0
    %1804 = vmatprep.subr.mxu0 0.0
    %1805 = vmatpush2.msra.mxu0 0.0
    %1806 = vmatprep.subr.mxu0 0.0
    %1807 = vmatpush2.msra.mxu0 0.0
    %1808 = vmatprep.subr.mxu0 0.0
    %1809 = vmatpush2.msra.mxu0 0.0
    %1810 = vmatprep.subr.mxu0 0.0
    %1811 = vmatpush2.msra.mxu0 0.0
    %1812 = vmatprep.subr.mxu0 0.0
    %1813 = vmatpush2.msra.mxu0 0.0
    %1814 = vmatprep.subr.mxu0 0.0
    %1815 = vmatpush2.msra.mxu0 0.0
    %1816 = vmatprep.subr.mxu0 0.0
    %1817 = vmatpush2.msra.mxu0 0.0
    %1818 = vmatprep.mubr.f32.mxu0 0.0
    %1819 = vmatmul.mubr.f32.gmra.mxu0 %v1752
    %v1820 = vpop.f32.mrf.mxu0
    %v1821 = vadd.f32 %v409, %v1820
    %v1822 = vpop.f32.mrf.mxu0
    %1823 = vdwg.mxu0
    %v1824 = vxor.u32 %v1821, 2147483648
    %v1825 = vmul.f32 %v1824, 1.442695
    %v1826 = vpow.pop %v1825
    %v1827 = vadd.f32 %v1826, 1.0
    %v1828 = vrcp.pop %v1827
    %v1829 = vmul.f32 1.0, %v1828
    %1831 = vrot.lane.b32.xlu0 %v1821, 80
    %v1832 = vpop.permute.xlu0 %1831
    %v1834 = vmul.f32 %v1829, %v1832
    %1836 = vrot.lane.b32.xlu0 %v1834, 32
    %v1837 = vpop.permute.xlu0 %1836
    %v1839 = vadd.f32 %v1821, %v1837
    %v1840 = vtanh.pop %v1839
    %v1841 = vsub.f32 1.0, %v1829
    %1843 = vrot.lane.b32.xlu0 %v1840, 112
    %v1844 = vpop.permute.xlu0 %1843
    %v1846 = vmul.f32 %v1841, %v1844
    %v1847 = vmul.f32 %v1829, %v1544
    %v1848 = vadd.f32 %v1846, %v1847
    %1850 = vrot.lane.b32.xlu0 %v1848, 112
    %v1851 = vpop.permute.xlu0 %1850
    %v1853 = vsel %vm267, %v1851, %v1647
    %v1855 = vsel %vm529, %v1853, 0
    %1857 = vmatprep.subr.mxu0 0.0
    %1858 = vmatpush1.msra.mxu0 0.0
    %1859 = vmatprep.subr.mxu0 0.0
    %1860 = vmatpush1.msra.mxu0 0.0
    %1861 = vmatprep.subr.mxu0 0.0
    %1862 = vmatpush1.msra.mxu0 0.0
    %1863 = vmatprep.subr.mxu0 0.0
    %1864 = vmatpush1.msra.mxu0 0.0
    %1865 = vmatprep.subr.mxu0 0.0
    %1866 = vmatpush1.msra.mxu0 0.0
    %1867 = vmatprep.subr.mxu0 0.0
    %1868 = vmatpush1.msra.mxu0 0.0
    %1869 = vmatprep.subr.mxu0 0.0
    %1870 = vmatpush1.msra.mxu0 0.0
    %1871 = vmatprep.subr.mxu0 0.0
    %1872 = vmatpush1.msra.mxu0 0.0
    %1873 = vmatprep.subr.mxu0 0.0
    %1874 = vmatpush1.msra.mxu0 0.0
    %1875 = vmatprep.subr.mxu0 0.0
    %1876 = vmatpush1.msra.mxu0 0.0
    %1877 = vmatprep.subr.mxu0 0.0
    %1878 = vmatpush1.msra.mxu0 0.0
    %1879 = vmatprep.subr.mxu0 0.0
    %1880 = vmatpush1.msra.mxu0 0.0
    %1881 = vmatprep.subr.mxu0 0.0
    %1882 = vmatpush1.msra.mxu0 %v637
    %1883 = vmatprep.subr.mxu0 0.0
    %1884 = vmatpush1.msra.mxu0 %v636
    %1885 = vmatprep.subr.mxu0 0.0
    %1886 = vmatpush1.msra.mxu0 %v635
    %1887 = vmatprep.subr.mxu0 0.0
    %1888 = vmatpush1.msra.mxu0 %v634
    %1889 = vmatprep.subr.mxu0 0.0
    %1890 = vmatpush2.msra.mxu0 0.0
    %1891 = vmatprep.subr.mxu0 0.0
    %1892 = vmatpush2.msra.mxu0 0.0
    %1893 = vmatprep.subr.mxu0 0.0
    %1894 = vmatpush2.msra.mxu0 0.0
    %1895 = vmatprep.subr.mxu0 0.0
    %1896 = vmatpush2.msra.mxu0 0.0
    %1897 = vmatprep.subr.mxu0 0.0
    %1898 = vmatpush2.msra.mxu0 0.0
    %1899 = vmatprep.subr.mxu0 0.0
    %1900 = vmatpush2.msra.mxu0 0.0
    %1901 = vmatprep.subr.mxu0 0.0
    %1902 = vmatpush2.msra.mxu0 0.0
    %1903 = vmatprep.subr.mxu0 0.0
    %1904 = vmatpush2.msra.mxu0 0.0
    %1905 = vmatprep.subr.mxu0 0.0
    %1906 = vmatpush2.msra.mxu0 0.0
    %1907 = vmatprep.subr.mxu0 0.0
    %1908 = vmatpush2.msra.mxu0 0.0
    %1909 = vmatprep.subr.mxu0 0.0
    %1910 = vmatpush2.msra.mxu0 0.0
    %1911 = vmatprep.subr.mxu0 0.0
    %1912 = vmatpush2.msra.mxu0 0.0
    %1913 = vmatprep.subr.mxu0 0.0
    %1914 = vmatpush2.msra.mxu0 0.0
    %1915 = vmatprep.subr.mxu0 0.0
    %1916 = vmatpush2.msra.mxu0 0.0
    %1917 = vmatprep.subr.mxu0 0.0
    %1918 = vmatpush2.msra.mxu0 0.0
    %1919 = vmatprep.subr.mxu0 0.0
    %1920 = vmatpush2.msra.mxu0 0.0
    %1921 = vmatprep.mubr.f32.mxu0 0.0
    %1922 = vmatmul.mubr.f32.gmra.mxu0 %v1855
    %v1923 = vpop.f32.mrf.mxu0
    %v1924 = vadd.f32 %v417, %v1923
    %v1925 = vpop.f32.mrf.mxu0
    %1926 = vdwg.mxu0
    %v1927 = vxor.u32 %v1924, 2147483648
    %v1928 = vmul.f32 %v1927, 1.442695
    %v1929 = vpow.pop %v1928
    %v1930 = vadd.f32 %v1929, 1.0
    %v1931 = vrcp.pop %v1930
    %v1932 = vmul.f32 1.0, %v1931
    %1934 = vrot.lane.b32.xlu0 %v1924, 80
    %v1935 = vpop.permute.xlu0 %1934
    %v1937 = vmul.f32 %v1932, %v1935
    %1939 = vrot.lane.b32.xlu0 %v1937, 32
    %v1940 = vpop.permute.xlu0 %1939
    %v1942 = vadd.f32 %v1924, %v1940
    %v1943 = vtanh.pop %v1942
    %v1944 = vsub.f32 1.0, %v1932
    %1946 = vrot.lane.b32.xlu0 %v1943, 112
    %v1947 = vpop.permute.xlu0 %1946
    %v1949 = vmul.f32 %v1944, %v1947
    %v1950 = vmul.f32 %v1932, %v1647
    %v1951 = vadd.f32 %v1949, %v1950
    %v1952 = vsel %vm267, %v1748, 0
    %1954 = vmatprep.subr.mxu0 0.0
    %1955 = vmatpush1.msra.mxu0 0.0
    %1956 = vmatprep.subr.mxu0 0.0
    %1957 = vmatpush1.msra.mxu0 0.0
    %1958 = vmatprep.subr.mxu0 0.0
    %1959 = vmatpush1.msra.mxu0 0.0
    %1960 = vmatprep.subr.mxu0 0.0
    %1961 = vmatpush1.msra.mxu0 0.0
    %1962 = vmatprep.subr.mxu0 0.0
    %1963 = vmatpush1.msra.mxu0 0.0
    %1964 = vmatprep.subr.mxu0 0.0
    %1965 = vmatpush1.msra.mxu0 0.0
    %1966 = vmatprep.subr.mxu0 0.0
    %1967 = vmatpush1.msra.mxu0 0.0
    %1968 = vmatprep.subr.mxu0 0.0
    %1969 = vmatpush1.msra.mxu0 0.0
    %1970 = vmatprep.subr.mxu0 0.0
    %1971 = vmatpush1.msra.mxu0 0.0
    %1972 = vmatprep.subr.mxu0 0.0
    %1973 = vmatpush1.msra.mxu0 0.0
    %1974 = vmatprep.subr.mxu0 0.0
    %1975 = vmatpush1.msra.mxu0 0.0
    %1976 = vmatprep.subr.mxu0 0.0
    %1977 = vmatpush1.msra.mxu0 0.0
    %1978 = vmatprep.subr.mxu0 0.0
    %1979 = vmatpush1.msra.mxu0 0.0
    %1980 = vmatprep.subr.mxu0 0.0
    %1981 = vmatpush1.msra.mxu0 0.0
    %1982 = vmatprep.subr.mxu0 0.0
    %1983 = vmatpush1.msra.mxu0 %v420
    %1984 = vmatprep.subr.mxu0 0.0
    %1985 = vmatpush1.msra.mxu0 %v419
    %1986 = vmatprep.subr.mxu0 0.0
    %1987 = vmatpush2.msra.mxu0 0.0
    %1988 = vmatprep.subr.mxu0 0.0
    %1989 = vmatpush2.msra.mxu0 0.0
    %1990 = vmatprep.subr.mxu0 0.0
    %1991 = vmatpush2.msra.mxu0 0.0
    %1992 = vmatprep.subr.mxu0 0.0
    %1993 = vmatpush2.msra.mxu0 0.0
    %1994 = vmatprep.subr.mxu0 0.0
    %1995 = vmatpush2.msra.mxu0 0.0
    %1996 = vmatprep.subr.mxu0 0.0
    %1997 = vmatpush2.msra.mxu0 0.0
    %1998 = vmatprep.subr.mxu0 0.0
    %1999 = vmatpush2.msra.mxu0 0.0
    %2000 = vmatprep.subr.mxu0 0.0
    %2001 = vmatpush2.msra.mxu0 0.0
    %2002 = vmatprep.subr.mxu0 0.0
    %2003 = vmatpush2.msra.mxu0 0.0
    %2004 = vmatprep.subr.mxu0 0.0
    %2005 = vmatpush2.msra.mxu0 0.0
    %2006 = vmatprep.subr.mxu0 0.0
    %2007 = vmatpush2.msra.mxu0 0.0
    %2008 = vmatprep.subr.mxu0 0.0
    %2009 = vmatpush2.msra.mxu0 0.0
    %2010 = vmatprep.subr.mxu0 0.0
    %2011 = vmatpush2.msra.mxu0 0.0
    %2012 = vmatprep.subr.mxu0 0.0
    %2013 = vmatpush2.msra.mxu0 0.0
    %2014 = vmatprep.subr.mxu0 0.0
    %2015 = vmatpush2.msra.mxu0 0.0
    %2016 = vmatprep.subr.mxu0 0.0
    %2017 = vmatpush2.msra.mxu0 0.0
    %2018 = vmatprep.mubr.f32.mxu0 0.0
    %2019 = vmatmul.mubr.f32.gmra.mxu0 %v1952
    %v2020 = vpop.f32.mrf.mxu0
    %v2021 = vadd.f32 %v402, %v2020
    %v2022 = vpop.f32.mrf.mxu0
    %2023 = vdwg.mxu0
    %v2024 = vadd.f32 %v384, %v2021
    %v2025 = vxor.u32 %v2024, 2147483648
    %v2026 = vmul.f32 %v2025, 1.442695
    %v2027 = vpow.pop %v2026
    %v2028 = vadd.f32 %v2027, 1.0
    %v2029 = vrcp.pop %v2028
    %v2030 = vmul.f32 1.0, %v2029
    %2032 = vrot.lane.b32.xlu0 %v2021, 96
    %v2033 = vpop.permute.xlu0 %2032
    %v2035 = vmul.f32 %v2030, %v2033
    %2037 = vrot.lane.b32.xlu0 %v2035, 32
    %v2038 = vpop.permute.xlu0 %2037
    %v2040 = vadd.f32 %v384, %v2038
    %v2041 = vtanh.pop %v2040
    %v2042 = vsub.f32 1.0, %v2030
    %2044 = vrot.lane.b32.xlu0 %v2041, 112
    %v2045 = vpop.permute.xlu0 %2044
    %v2047 = vmul.f32 %v2042, %v2045
    %v2048 = vmul.f32 %v2030, %v1745
    %v2049 = vadd.f32 %v2047, %v2048
    %2051 = vrot.lane.b32.xlu0 %v2049, 112
    %v2052 = vpop.permute.xlu0 %2051
    %v2054 = vsel %vm267, %v2052, %v1848
    %v2056 = vsel %vm529, %v2054, 0
    %2058 = vmatprep.subr.mxu0 0.0
    %2059 = vmatpush1.msra.mxu0 0.0
    %2060 = vmatprep.subr.mxu0 0.0
    %2061 = vmatpush1.msra.mxu0 0.0
    %2062 = vmatprep.subr.mxu0 0.0
    %2063 = vmatpush1.msra.mxu0 0.0
    %2064 = vmatprep.subr.mxu0 0.0
    %2065 = vmatpush1.msra.mxu0 0.0
    %2066 = vmatprep.subr.mxu0 0.0
    %2067 = vmatpush1.msra.mxu0 0.0
    %2068 = vmatprep.subr.mxu0 0.0
    %2069 = vmatpush1.msra.mxu0 0.0
    %2070 = vmatprep.subr.mxu0 0.0
    %2071 = vmatpush1.msra.mxu0 0.0
    %2072 = vmatprep.subr.mxu0 0.0
    %2073 = vmatpush1.msra.mxu0 0.0
    %2074 = vmatprep.subr.mxu0 0.0
    %2075 = vmatpush1.msra.mxu0 0.0
    %2076 = vmatprep.subr.mxu0 0.0
    %2077 = vmatpush1.msra.mxu0 0.0
    %2078 = vmatprep.subr.mxu0 0.0
    %2079 = vmatpush1.msra.mxu0 0.0
    %2080 = vmatprep.subr.mxu0 0.0
    %2081 = vmatpush1.msra.mxu0 0.0
    %2082 = vmatprep.subr.mxu0 0.0
    %2083 = vmatpush1.msra.mxu0 %v528
    %2084 = vmatprep.subr.mxu0 0.0
    %2085 = vmatpush1.msra.mxu0 %v527
    %2086 = vmatprep.subr.mxu0 0.0
    %2087 = vmatpush1.msra.mxu0 %v526
    %2088 = vmatprep.subr.mxu0 0.0
    %2089 = vmatpush1.msra.mxu0 %v525
    %2090 = vmatprep.subr.mxu0 0.0
    %2091 = vmatpush2.msra.mxu0 0.0
    %2092 = vmatprep.subr.mxu0 0.0
    %2093 = vmatpush2.msra.mxu0 0.0
    %2094 = vmatprep.subr.mxu0 0.0
    %2095 = vmatpush2.msra.mxu0 0.0
    %2096 = vmatprep.subr.mxu0 0.0
    %2097 = vmatpush2.msra.mxu0 0.0
    %2098 = vmatprep.subr.mxu0 0.0
    %2099 = vmatpush2.msra.mxu0 0.0
    %2100 = vmatprep.subr.mxu0 0.0
    %2101 = vmatpush2.msra.mxu0 0.0
    %2102 = vmatprep.subr.mxu0 0.0
    %2103 = vmatpush2.msra.mxu0 0.0
    %2104 = vmatprep.subr.mxu0 0.0
    %2105 = vmatpush2.msra.mxu0 0.0
    %2106 = vmatprep.subr.mxu0 0.0
    %2107 = vmatpush2.msra.mxu0 0.0
    %2108 = vmatprep.subr.mxu0 0.0
    %2109 = vmatpush2.msra.mxu0 0.0
    %2110 = vmatprep.subr.mxu0 0.0
    %2111 = vmatpush2.msra.mxu0 0.0
    %2112 = vmatprep.subr.mxu0 0.0
    %2113 = vmatpush2.msra.mxu0 0.0
    %2114 = vmatprep.subr.mxu0 0.0
    %2115 = vmatpush2.msra.mxu0 0.0
    %2116 = vmatprep.subr.mxu0 0.0
    %2117 = vmatpush2.msra.mxu0 0.0
    %2118 = vmatprep.subr.mxu0 0.0
    %2119 = vmatpush2.msra.mxu0 0.0
    %2120 = vmatprep.subr.mxu0 0.0
    %2121 = vmatpush2.msra.mxu0 0.0
    %2122 = vmatprep.mubr.f32.mxu0 0.0
    %2123 = vmatmul.mubr.f32.gmra.mxu0 %v2056
    %v2124 = vpop.f32.mrf.mxu0
    %v2125 = vadd.f32 %v409, %v2124
    %v2126 = vpop.f32.mrf.mxu0
    %2127 = vdwg.mxu0
    %v2128 = vxor.u32 %v2125, 2147483648
    %v2129 = vmul.f32 %v2128, 1.442695
    %v2130 = vpow.pop %v2129
    %v2131 = vadd.f32 %v2130, 1.0
    %v2132 = vrcp.pop %v2131
    %v2133 = vmul.f32 1.0, %v2132
    %2135 = vrot.lane.b32.xlu0 %v2125, 80
    %v2136 = vpop.permute.xlu0 %2135
    %v2138 = vmul.f32 %v2133, %v2136
    %2140 = vrot.lane.b32.xlu0 %v2138, 32
    %v2141 = vpop.permute.xlu0 %2140
    %v2143 = vadd.f32 %v2125, %v2141
    %v2144 = vtanh.pop %v2143
    %v2145 = vsub.f32 1.0, %v2133
    %2147 = vrot.lane.b32.xlu0 %v2144, 112
    %v2148 = vpop.permute.xlu0 %2147
    %v2150 = vmul.f32 %v2145, %v2148
    %v2151 = vmul.f32 %v2133, %v1848
    %v2152 = vadd.f32 %v2150, %v2151
    %2154 = vrot.lane.b32.xlu0 %v2152, 112
    %v2155 = vpop.permute.xlu0 %2154
    %v2157 = vsel %vm267, %v2155, %v1951
    %v2159 = vsel %vm529, %v2157, 0
    %2161 = vmatprep.subr.mxu0 0.0
    %2162 = vmatpush1.msra.mxu0 0.0
    %2163 = vmatprep.subr.mxu0 0.0
    %2164 = vmatpush1.msra.mxu0 0.0
    %2165 = vmatprep.subr.mxu0 0.0
    %2166 = vmatpush1.msra.mxu0 0.0
    %2167 = vmatprep.subr.mxu0 0.0
    %2168 = vmatpush1.msra.mxu0 0.0
    %2169 = vmatprep.subr.mxu0 0.0
    %2170 = vmatpush1.msra.mxu0 0.0
    %2171 = vmatprep.subr.mxu0 0.0
    %2172 = vmatpush1.msra.mxu0 0.0
    %2173 = vmatprep.subr.mxu0 0.0
    %2174 = vmatpush1.msra.mxu0 0.0
    %2175 = vmatprep.subr.mxu0 0.0
    %2176 = vmatpush1.msra.mxu0 0.0
    %2177 = vmatprep.subr.mxu0 0.0
    %2178 = vmatpush1.msra.mxu0 0.0
    %2179 = vmatprep.subr.mxu0 0.0
    %2180 = vmatpush1.msra.mxu0 0.0
    %2181 = vmatprep.subr.mxu0 0.0
    %2182 = vmatpush1.msra.mxu0 0.0
    %2183 = vmatprep.subr.mxu0 0.0
    %2184 = vmatpush1.msra.mxu0 0.0
    %2185 = vmatprep.subr.mxu0 0.0
    %2186 = vmatpush1.msra.mxu0 %v637
    %2187 = vmatprep.subr.mxu0 0.0
    %2188 = vmatpush1.msra.mxu0 %v636
    %2189 = vmatprep.subr.mxu0 0.0
    %2190 = vmatpush1.msra.mxu0 %v635
    %2191 = vmatprep.subr.mxu0 0.0
    %2192 = vmatpush1.msra.mxu0 %v634
    %2193 = vmatprep.subr.mxu0 0.0
    %2194 = vmatpush2.msra.mxu0 0.0
    %2195 = vmatprep.subr.mxu0 0.0
    %2196 = vmatpush2.msra.mxu0 0.0
    %2197 = vmatprep.subr.mxu0 0.0
    %2198 = vmatpush2.msra.mxu0 0.0
    %2199 = vmatprep.subr.mxu0 0.0
    %2200 = vmatpush2.msra.mxu0 0.0
    %2201 = vmatprep.subr.mxu0 0.0
    %2202 = vmatpush2.msra.mxu0 0.0
    %2203 = vmatprep.subr.mxu0 0.0
    %2204 = vmatpush2.msra.mxu0 0.0
    %2205 = vmatprep.subr.mxu0 0.0
    %2206 = vmatpush2.msra.mxu0 0.0
    %2207 = vmatprep.subr.mxu0 0.0
    %2208 = vmatpush2.msra.mxu0 0.0
    %2209 = vmatprep.subr.mxu0 0.0
    %2210 = vmatpush2.msra.mxu0 0.0
    %2211 = vmatprep.subr.mxu0 0.0
    %2212 = vmatpush2.msra.mxu0 0.0
    %2213 = vmatprep.subr.mxu0 0.0
    %2214 = vmatpush2.msra.mxu0 0.0
    %2215 = vmatprep.subr.mxu0 0.0
    %2216 = vmatpush2.msra.mxu0 0.0
    %2217 = vmatprep.subr.mxu0 0.0
    %2218 = vmatpush2.msra.mxu0 0.0
    %2219 = vmatprep.subr.mxu0 0.0
    %2220 = vmatpush2.msra.mxu0 0.0
    %2221 = vmatprep.subr.mxu0 0.0
    %2222 = vmatpush2.msra.mxu0 0.0
    %2223 = vmatprep.subr.mxu0 0.0
    %2224 = vmatpush2.msra.mxu0 0.0
    %2225 = vmatprep.mubr.f32.mxu0 0.0
    %2226 = vmatmul.mubr.f32.gmra.mxu0 %v2159
    %v2227 = vpop.f32.mrf.mxu0
    %v2228 = vadd.f32 %v417, %v2227
    %v2229 = vpop.f32.mrf.mxu0
    %2230 = vdwg.mxu0
    %v2231 = vxor.u32 %v2228, 2147483648
    %v2232 = vmul.f32 %v2231, 1.442695
    %v2233 = vpow.pop %v2232
    %v2234 = vadd.f32 %v2233, 1.0
    %v2235 = vrcp.pop %v2234
    %v2236 = vmul.f32 1.0, %v2235
    %2238 = vrot.lane.b32.xlu0 %v2228, 80
    %v2239 = vpop.permute.xlu0 %2238
    %v2241 = vmul.f32 %v2236, %v2239
    %2243 = vrot.lane.b32.xlu0 %v2241, 32
    %v2244 = vpop.permute.xlu0 %2243
    %v2246 = vadd.f32 %v2228, %v2244
    %v2247 = vtanh.pop %v2246
    %v2248 = vsub.f32 1.0, %v2236
    %2250 = vrot.lane.b32.xlu0 %v2247, 112
    %v2251 = vpop.permute.xlu0 %2250
    %v2253 = vmul.f32 %v2248, %v2251
    %v2254 = vmul.f32 %v2236, %v1951
    %v2255 = vadd.f32 %v2253, %v2254
    %v2256 = vsel %vm267, %v2052, 0
    %2258 = vmatprep.subr.mxu0 0.0
    %2259 = vmatpush1.msra.mxu0 0.0
    %2260 = vmatprep.subr.mxu0 0.0
    %2261 = vmatpush1.msra.mxu0 0.0
    %2262 = vmatprep.subr.mxu0 0.0
    %2263 = vmatpush1.msra.mxu0 0.0
    %2264 = vmatprep.subr.mxu0 0.0
    %2265 = vmatpush1.msra.mxu0 0.0
    %2266 = vmatprep.subr.mxu0 0.0
    %2267 = vmatpush1.msra.mxu0 0.0
    %2268 = vmatprep.subr.mxu0 0.0
    %2269 = vmatpush1.msra.mxu0 0.0
    %2270 = vmatprep.subr.mxu0 0.0
    %2271 = vmatpush1.msra.mxu0 0.0
    %2272 = vmatprep.subr.mxu0 0.0
    %2273 = vmatpush1.msra.mxu0 0.0
    %2274 = vmatprep.subr.mxu0 0.0
    %2275 = vmatpush1.msra.mxu0 0.0
    %2276 = vmatprep.subr.mxu0 0.0
    %2277 = vmatpush1.msra.mxu0 0.0
    %2278 = vmatprep.subr.mxu0 0.0
    %2279 = vmatpush1.msra.mxu0 0.0
    %2280 = vmatprep.subr.mxu0 0.0
    %2281 = vmatpush1.msra.mxu0 0.0
    %2282 = vmatprep.subr.mxu0 0.0
    %2283 = vmatpush1.msra.mxu0 0.0
    %2284 = vmatprep.subr.mxu0 0.0
    %2285 = vmatpush1.msra.mxu0 0.0
    %2286 = vmatprep.subr.mxu0 0.0
    %2287 = vmatpush1.msra.mxu0 %v420
    %2288 = vmatprep.subr.mxu0 0.0
    %2289 = vmatpush1.msra.mxu0 %v419
    %2290 = vmatprep.subr.mxu0 0.0
    %2291 = vmatpush2.msra.mxu0 0.0
    %2292 = vmatprep.subr.mxu0 0.0
    %2293 = vmatpush2.msra.mxu0 0.0
    %2294 = vmatprep.subr.mxu0 0.0
    %2295 = vmatpush2.msra.mxu0 0.0
    %2296 = vmatprep.subr.mxu0 0.0
    %2297 = vmatpush2.msra.mxu0 0.0
    %2298 = vmatprep.subr.mxu0 0.0
    %2299 = vmatpush2.msra.mxu0 0.0
    %2300 = vmatprep.subr.mxu0 0.0
    %2301 = vmatpush2.msra.mxu0 0.0
    %2302 = vmatprep.subr.mxu0 0.0
    %2303 = vmatpush2.msra.mxu0 0.0
    %2304 = vmatprep.subr.mxu0 0.0
    %2305 = vmatpush2.msra.mxu0 0.0
    %2306 = vmatprep.subr.mxu0 0.0
    %2307 = vmatpush2.msra.mxu0 0.0
    %2308 = vmatprep.subr.mxu0 0.0
    %2309 = vmatpush2.msra.mxu0 0.0
    %2310 = vmatprep.subr.mxu0 0.0
    %2311 = vmatpush2.msra.mxu0 0.0
    %2312 = vmatprep.subr.mxu0 0.0
    %2313 = vmatpush2.msra.mxu0 0.0
    %2314 = vmatprep.subr.mxu0 0.0
    %2315 = vmatpush2.msra.mxu0 0.0
    %2316 = vmatprep.subr.mxu0 0.0
    %2317 = vmatpush2.msra.mxu0 0.0
    %2318 = vmatprep.subr.mxu0 0.0
    %2319 = vmatpush2.msra.mxu0 0.0
    %2320 = vmatprep.subr.mxu0 0.0
    %2321 = vmatpush2.msra.mxu0 0.0
    %2322 = vmatprep.mubr.f32.mxu0 0.0
    %2323 = vmatmul.mubr.f32.gmra.mxu0 %v2256
    %v2324 = vpop.f32.mrf.mxu0
    %v2325 = vadd.f32 %v402, %v2324
    %v2326 = vpop.f32.mrf.mxu0
    %2327 = vdwg.mxu0
    %v2328 = vadd.f32 %v389, %v2325
    %v2329 = vxor.u32 %v2328, 2147483648
    %v2330 = vmul.f32 %v2329, 1.442695
    %v2331 = vpow.pop %v2330
    %v2332 = vadd.f32 %v2331, 1.0
    %v2333 = vrcp.pop %v2332
    %v2334 = vmul.f32 1.0, %v2333
    %2336 = vrot.lane.b32.xlu0 %v2325, 96
    %v2337 = vpop.permute.xlu0 %2336
    %v2339 = vmul.f32 %v2334, %v2337
    %2341 = vrot.lane.b32.xlu0 %v2339, 32
    %v2342 = vpop.permute.xlu0 %2341
    %v2344 = vadd.f32 %v389, %v2342
    %v2345 = vtanh.pop %v2344
    %v2346 = vsub.f32 1.0, %v2334
    %2348 = vrot.lane.b32.xlu0 %v2345, 112
    %v2349 = vpop.permute.xlu0 %2348
    %v2351 = vmul.f32 %v2346, %v2349
    %v2352 = vmul.f32 %v2334, %v2049
    %v2353 = vadd.f32 %v2351, %v2352
    %2355 = vrot.lane.b32.xlu0 %v2353, 112
    %v2356 = vpop.permute.xlu0 %2355
    %v2358 = vsel %vm267, %v2356, %v2152
    %v2360 = vsel %vm529, %v2358, 0
    %2362 = vmatprep.subr.mxu0 0.0
    %2363 = vmatpush1.msra.mxu0 0.0
    %2364 = vmatprep.subr.mxu0 0.0
    %2365 = vmatpush1.msra.mxu0 0.0
    %2366 = vmatprep.subr.mxu0 0.0
    %2367 = vmatpush1.msra.mxu0 0.0
    %2368 = vmatprep.subr.mxu0 0.0
    %2369 = vmatpush1.msra.mxu0 0.0
    %2370 = vmatprep.subr.mxu0 0.0
    %2371 = vmatpush1.msra.mxu0 0.0
    %2372 = vmatprep.subr.mxu0 0.0
    %2373 = vmatpush1.msra.mxu0 0.0
    %2374 = vmatprep.subr.mxu0 0.0
    %2375 = vmatpush1.msra.mxu0 0.0
    %2376 = vmatprep.subr.mxu0 0.0
    %2377 = vmatpush1.msra.mxu0 0.0
    %2378 = vmatprep.subr.mxu0 0.0
    %2379 = vmatpush1.msra.mxu0 0.0
    %2380 = vmatprep.subr.mxu0 0.0
    %2381 = vmatpush1.msra.mxu0 0.0
    %2382 = vmatprep.subr.mxu0 0.0
    %2383 = vmatpush1.msra.mxu0 0.0
    %2384 = vmatprep.subr.mxu0 0.0
    %2385 = vmatpush1.msra.mxu0 0.0
    %2386 = vmatprep.subr.mxu0 0.0
    %2387 = vmatpush1.msra.mxu0 %v528
    %2388 = vmatprep.subr.mxu0 0.0
    %2389 = vmatpush1.msra.mxu0 %v527
    %2390 = vmatprep.subr.mxu0 0.0
    %2391 = vmatpush1.msra.mxu0 %v526
    %2392 = vmatprep.subr.mxu0 0.0
    %2393 = vmatpush1.msra.mxu0 %v525
    %2394 = vmatprep.subr.mxu0 0.0
    %2395 = vmatpush2.msra.mxu0 0.0
    %2396 = vmatprep.subr.mxu0 0.0
    %2397 = vmatpush2.msra.mxu0 0.0
    %2398 = vmatprep.subr.mxu0 0.0
    %2399 = vmatpush2.msra.mxu0 0.0
    %2400 = vmatprep.subr.mxu0 0.0
    %2401 = vmatpush2.msra.mxu0 0.0
    %2402 = vmatprep.subr.mxu0 0.0
    %2403 = vmatpush2.msra.mxu0 0.0
    %2404 = vmatprep.subr.mxu0 0.0
    %2405 = vmatpush2.msra.mxu0 0.0
    %2406 = vmatprep.subr.mxu0 0.0
    %2407 = vmatpush2.msra.mxu0 0.0
    %2408 = vmatprep.subr.mxu0 0.0
    %2409 = vmatpush2.msra.mxu0 0.0
    %2410 = vmatprep.subr.mxu0 0.0
    %2411 = vmatpush2.msra.mxu0 0.0
    %2412 = vmatprep.subr.mxu0 0.0
    %2413 = vmatpush2.msra.mxu0 0.0
    %2414 = vmatprep.subr.mxu0 0.0
    %2415 = vmatpush2.msra.mxu0 0.0
    %2416 = vmatprep.subr.mxu0 0.0
    %2417 = vmatpush2.msra.mxu0 0.0
    %2418 = vmatprep.subr.mxu0 0.0
    %2419 = vmatpush2.msra.mxu0 0.0
    %2420 = vmatprep.subr.mxu0 0.0
    %2421 = vmatpush2.msra.mxu0 0.0
    %2422 = vmatprep.subr.mxu0 0.0
    %2423 = vmatpush2.msra.mxu0 0.0
    %2424 = vmatprep.subr.mxu0 0.0
    %2425 = vmatpush2.msra.mxu0 0.0
    %2426 = vmatprep.mubr.f32.mxu0 0.0
    %2427 = vmatmul.mubr.f32.gmra.mxu0 %v2360
    %v2428 = vpop.f32.mrf.mxu0
    %v2429 = vadd.f32 %v409, %v2428
    %v2430 = vpop.f32.mrf.mxu0
    %2431 = vdwg.mxu0
    %v2432 = vxor.u32 %v2429, 2147483648
    %v2433 = vmul.f32 %v2432, 1.442695
    %v2434 = vpow.pop %v2433
    %v2435 = vadd.f32 %v2434, 1.0
    %v2436 = vrcp.pop %v2435
    %v2437 = vmul.f32 1.0, %v2436
    %2439 = vrot.lane.b32.xlu0 %v2429, 80
    %v2440 = vpop.permute.xlu0 %2439
    %v2442 = vmul.f32 %v2437, %v2440
    %2444 = vrot.lane.b32.xlu0 %v2442, 32
    %v2445 = vpop.permute.xlu0 %2444
    %v2447 = vadd.f32 %v2429, %v2445
    %v2448 = vtanh.pop %v2447
    %v2449 = vsub.f32 1.0, %v2437
    %2451 = vrot.lane.b32.xlu0 %v2448, 112
    %v2452 = vpop.permute.xlu0 %2451
    %v2454 = vmul.f32 %v2449, %v2452
    %v2455 = vmul.f32 %v2437, %v2152
    %v2456 = vadd.f32 %v2454, %v2455
    %2458 = vrot.lane.b32.xlu0 %v2456, 112
    %v2459 = vpop.permute.xlu0 %2458
    %v2461 = vsel %vm267, %v2459, %v2255
    %v2463 = vsel %vm529, %v2461, 0
    %2465 = vmatprep.subr.mxu0 0.0
    %2466 = vmatpush1.msra.mxu0 0.0
    %2467 = vmatprep.subr.mxu0 0.0
    %2468 = vmatpush1.msra.mxu0 0.0
    %2469 = vmatprep.subr.mxu0 0.0
    %2470 = vmatpush1.msra.mxu0 0.0
    %2471 = vmatprep.subr.mxu0 0.0
    %2472 = vmatpush1.msra.mxu0 0.0
    %2473 = vmatprep.subr.mxu0 0.0
    %2474 = vmatpush1.msra.mxu0 0.0
    %2475 = vmatprep.subr.mxu0 0.0
    %2476 = vmatpush1.msra.mxu0 0.0
    %2477 = vmatprep.subr.mxu0 0.0
    %2478 = vmatpush1.msra.mxu0 0.0
    %2479 = vmatprep.subr.mxu0 0.0
    %2480 = vmatpush1.msra.mxu0 0.0
    %2481 = vmatprep.subr.mxu0 0.0
    %2482 = vmatpush1.msra.mxu0 0.0
    %2483 = vmatprep.subr.mxu0 0.0
    %2484 = vmatpush1.msra.mxu0 0.0
    %2485 = vmatprep.subr.mxu0 0.0
    %2486 = vmatpush1.msra.mxu0 0.0
    %2487 = vmatprep.subr.mxu0 0.0
    %2488 = vmatpush1.msra.mxu0 0.0
    %2489 = vmatprep.subr.mxu0 0.0
    %2490 = vmatpush1.msra.mxu0 %v637
    %2491 = vmatprep.subr.mxu0 0.0
    %2492 = vmatpush1.msra.mxu0 %v636
    %2493 = vmatprep.subr.mxu0 0.0
    %2494 = vmatpush1.msra.mxu0 %v635
    %2495 = vmatprep.subr.mxu0 0.0
    %2496 = vmatpush1.msra.mxu0 %v634
    %2497 = vmatprep.subr.mxu0 0.0
    %2498 = vmatpush2.msra.mxu0 0.0
    %2499 = vmatprep.subr.mxu0 0.0
    %2500 = vmatpush2.msra.mxu0 0.0
    %2501 = vmatprep.subr.mxu0 0.0
    %2502 = vmatpush2.msra.mxu0 0.0
    %2503 = vmatprep.subr.mxu0 0.0
    %2504 = vmatpush2.msra.mxu0 0.0
    %2505 = vmatprep.subr.mxu0 0.0
    %2506 = vmatpush2.msra.mxu0 0.0
    %2507 = vmatprep.subr.mxu0 0.0
    %2508 = vmatpush2.msra.mxu0 0.0
    %2509 = vmatprep.subr.mxu0 0.0
    %2510 = vmatpush2.msra.mxu0 0.0
    %2511 = vmatprep.subr.mxu0 0.0
    %2512 = vmatpush2.msra.mxu0 0.0
    %2513 = vmatprep.subr.mxu0 0.0
    %2514 = vmatpush2.msra.mxu0 0.0
    %2515 = vmatprep.subr.mxu0 0.0
    %2516 = vmatpush2.msra.mxu0 0.0
    %2517 = vmatprep.subr.mxu0 0.0
    %2518 = vmatpush2.msra.mxu0 0.0
    %2519 = vmatprep.subr.mxu0 0.0
    %2520 = vmatpush2.msra.mxu0 0.0
    %2521 = vmatprep.subr.mxu0 0.0
    %2522 = vmatpush2.msra.mxu0 0.0
    %2523 = vmatprep.subr.mxu0 0.0
    %2524 = vmatpush2.msra.mxu0 0.0
    %2525 = vmatprep.subr.mxu0 0.0
    %2526 = vmatpush2.msra.mxu0 0.0
    %2527 = vmatprep.subr.mxu0 0.0
    %2528 = vmatpush2.msra.mxu0 0.0
    %2529 = vmatprep.mubr.f32.mxu0 0.0
    %2530 = vmatmul.mubr.f32.gmra.mxu0 %v2463
    %v2531 = vpop.f32.mrf.mxu0
    %v2532 = vadd.f32 %v417, %v2531
    %v2533 = vpop.f32.mrf.mxu0
    %2534 = vdwg.mxu0
    %v2535 = vxor.u32 %v2532, 2147483648
    %v2536 = vmul.f32 %v2535, 1.442695
    %v2537 = vpow.pop %v2536
    %v2538 = vadd.f32 %v2537, 1.0
    %v2539 = vrcp.pop %v2538
    %v2540 = vmul.f32 1.0, %v2539
    %2542 = vrot.lane.b32.xlu0 %v2532, 80
    %v2543 = vpop.permute.xlu0 %2542
    %v2545 = vmul.f32 %v2540, %v2543
    %2547 = vrot.lane.b32.xlu0 %v2545, 32
    %v2548 = vpop.permute.xlu0 %2547
    %v2550 = vadd.f32 %v2532, %v2548
    %v2551 = vtanh.pop %v2550
    %v2552 = vsub.f32 1.0, %v2540
    %2554 = vrot.lane.b32.xlu0 %v2551, 112
    %v2555 = vpop.permute.xlu0 %2554
    %v2557 = vmul.f32 %v2552, %v2555
    %v2558 = vmul.f32 %v2540, %v2255
    %v2559 = vadd.f32 %v2557, %v2558
    %v2560 = vsel %vm267, %v2356, 0
    %2562 = vmatprep.subr.mxu0 0.0
    %2563 = vmatpush1.msra.mxu0 0.0
    %2564 = vmatprep.subr.mxu0 0.0
    %2565 = vmatpush1.msra.mxu0 0.0
    %2566 = vmatprep.subr.mxu0 0.0
    %2567 = vmatpush1.msra.mxu0 0.0
    %2568 = vmatprep.subr.mxu0 0.0
    %2569 = vmatpush1.msra.mxu0 0.0
    %2570 = vmatprep.subr.mxu0 0.0
    %2571 = vmatpush1.msra.mxu0 0.0
    %2572 = vmatprep.subr.mxu0 0.0
    %2573 = vmatpush1.msra.mxu0 0.0
    %2574 = vmatprep.subr.mxu0 0.0
    %2575 = vmatpush1.msra.mxu0 0.0
    %2576 = vmatprep.subr.mxu0 0.0
    %2577 = vmatpush1.msra.mxu0 0.0
    %2578 = vmatprep.subr.mxu0 0.0
    %2579 = vmatpush1.msra.mxu0 0.0
    %2580 = vmatprep.subr.mxu0 0.0
    %2581 = vmatpush1.msra.mxu0 0.0
    %2582 = vmatprep.subr.mxu0 0.0
    %2583 = vmatpush1.msra.mxu0 0.0
    %2584 = vmatprep.subr.mxu0 0.0
    %2585 = vmatpush1.msra.mxu0 0.0
    %2586 = vmatprep.subr.mxu0 0.0
    %2587 = vmatpush1.msra.mxu0 0.0
    %2588 = vmatprep.subr.mxu0 0.0
    %2589 = vmatpush1.msra.mxu0 0.0
    %2590 = vmatprep.subr.mxu0 0.0
    %2591 = vmatpush1.msra.mxu0 %v420
    %2592 = vmatprep.subr.mxu0 0.0
    %2593 = vmatpush1.msra.mxu0 %v419
    %2594 = vmatprep.subr.mxu0 0.0
    %2595 = vmatpush2.msra.mxu0 0.0
    %2596 = vmatprep.subr.mxu0 0.0
    %2597 = vmatpush2.msra.mxu0 0.0
    %2598 = vmatprep.subr.mxu0 0.0
    %2599 = vmatpush2.msra.mxu0 0.0
    %2600 = vmatprep.subr.mxu0 0.0
    %2601 = vmatpush2.msra.mxu0 0.0
    %2602 = vmatprep.subr.mxu0 0.0
    %2603 = vmatpush2.msra.mxu0 0.0
    %2604 = vmatprep.subr.mxu0 0.0
    %2605 = vmatpush2.msra.mxu0 0.0
    %2606 = vmatprep.subr.mxu0 0.0
    %2607 = vmatpush2.msra.mxu0 0.0
    %2608 = vmatprep.subr.mxu0 0.0
    %2609 = vmatpush2.msra.mxu0 0.0
    %2610 = vmatprep.subr.mxu0 0.0
    %2611 = vmatpush2.msra.mxu0 0.0
    %2612 = vmatprep.subr.mxu0 0.0
    %2613 = vmatpush2.msra.mxu0 0.0
    %2614 = vmatprep.subr.mxu0 0.0
    %2615 = vmatpush2.msra.mxu0 0.0
    %2616 = vmatprep.subr.mxu0 0.0
    %2617 = vmatpush2.msra.mxu0 0.0
    %2618 = vmatprep.subr.mxu0 0.0
    %2619 = vmatpush2.msra.mxu0 0.0
    %2620 = vmatprep.subr.mxu0 0.0
    %2621 = vmatpush2.msra.mxu0 0.0
    %2622 = vmatprep.subr.mxu0 0.0
    %2623 = vmatpush2.msra.mxu0 0.0
    %2624 = vmatprep.subr.mxu0 0.0
    %2625 = vmatpush2.msra.mxu0 0.0
    %2626 = vmatprep.mubr.f32.mxu0 0.0
    %2627 = vmatmul.mubr.f32.gmra.mxu0 %v2560
    %v2628 = vpop.f32.mrf.mxu0
    %v2629 = vadd.f32 %v402, %v2628
    %v2630 = vpop.f32.mrf.mxu0
    %2631 = vdwg.mxu0
    %v2632 = vadd.f32 %v394, %v2629
    %v2633 = vxor.u32 %v2632, 2147483648
    %v2634 = vmul.f32 %v2633, 1.442695
    %v2635 = vpow.pop %v2634
    %v2636 = vadd.f32 %v2635, 1.0
    %v2637 = vrcp.pop %v2636
    %v2638 = vmul.f32 1.0, %v2637
    %2640 = vrot.lane.b32.xlu0 %v2629, 96
    %v2641 = vpop.permute.xlu0 %2640
    %v2643 = vmul.f32 %v2638, %v2641
    %2645 = vrot.lane.b32.xlu0 %v2643, 32
    %v2646 = vpop.permute.xlu0 %2645
    %v2648 = vadd.f32 %v394, %v2646
    %v2649 = vtanh.pop %v2648
    %v2650 = vsub.f32 1.0, %v2638
    %2652 = vrot.lane.b32.xlu0 %v2649, 112
    %v2653 = vpop.permute.xlu0 %2652
    %v2655 = vmul.f32 %v2650, %v2653
    %v2656 = vmul.f32 %v2638, %v2353
    %v2657 = vadd.f32 %v2655, %v2656
    %2659 = vrot.lane.b32.xlu0 %v2657, 112
    %v2660 = vpop.permute.xlu0 %2659
    %v2662 = vsel %vm267, %v2660, %v2456
    %v2664 = vsel %vm529, %v2662, 0
    %2666 = vmatprep.subr.mxu0 0.0
    %2667 = vmatpush1.msra.mxu0 0.0
    %2668 = vmatprep.subr.mxu0 0.0
    %2669 = vmatpush1.msra.mxu0 0.0
    %2670 = vmatprep.subr.mxu0 0.0
    %2671 = vmatpush1.msra.mxu0 0.0
    %2672 = vmatprep.subr.mxu0 0.0
    %2673 = vmatpush1.msra.mxu0 0.0
    %2674 = vmatprep.subr.mxu0 0.0
    %2675 = vmatpush1.msra.mxu0 0.0
    %2676 = vmatprep.subr.mxu0 0.0
    %2677 = vmatpush1.msra.mxu0 0.0
    %2678 = vmatprep.subr.mxu0 0.0
    %2679 = vmatpush1.msra.mxu0 0.0
    %2680 = vmatprep.subr.mxu0 0.0
    %2681 = vmatpush1.msra.mxu0 0.0
    %2682 = vmatprep.subr.mxu0 0.0
    %2683 = vmatpush1.msra.mxu0 0.0
    %2684 = vmatprep.subr.mxu0 0.0
    %2685 = vmatpush1.msra.mxu0 0.0
    %2686 = vmatprep.subr.mxu0 0.0
    %2687 = vmatpush1.msra.mxu0 0.0
    %2688 = vmatprep.subr.mxu0 0.0
    %2689 = vmatpush1.msra.mxu0 0.0
    %2690 = vmatprep.subr.mxu0 0.0
    %2691 = vmatpush1.msra.mxu0 %v528
    %2692 = vmatprep.subr.mxu0 0.0
    %2693 = vmatpush1.msra.mxu0 %v527
    %2694 = vmatprep.subr.mxu0 0.0
    %2695 = vmatpush1.msra.mxu0 %v526
    %2696 = vmatprep.subr.mxu0 0.0
    %2697 = vmatpush1.msra.mxu0 %v525
    %2698 = vmatprep.subr.mxu0 0.0
    %2699 = vmatpush2.msra.mxu0 0.0
    %2700 = vmatprep.subr.mxu0 0.0
    %2701 = vmatpush2.msra.mxu0 0.0
    %2702 = vmatprep.subr.mxu0 0.0
    %2703 = vmatpush2.msra.mxu0 0.0
    %2704 = vmatprep.subr.mxu0 0.0
    %2705 = vmatpush2.msra.mxu0 0.0
    %2706 = vmatprep.subr.mxu0 0.0
    %2707 = vmatpush2.msra.mxu0 0.0
    %2708 = vmatprep.subr.mxu0 0.0
    %2709 = vmatpush2.msra.mxu0 0.0
    %2710 = vmatprep.subr.mxu0 0.0
    %2711 = vmatpush2.msra.mxu0 0.0
    %2712 = vmatprep.subr.mxu0 0.0
    %2713 = vmatpush2.msra.mxu0 0.0
    %2714 = vmatprep.subr.mxu0 0.0
    %2715 = vmatpush2.msra.mxu0 0.0
    %2716 = vmatprep.subr.mxu0 0.0
    %2717 = vmatpush2.msra.mxu0 0.0
    %2718 = vmatprep.subr.mxu0 0.0
    %2719 = vmatpush2.msra.mxu0 0.0
    %2720 = vmatprep.subr.mxu0 0.0
    %2721 = vmatpush2.msra.mxu0 0.0
    %2722 = vmatprep.subr.mxu0 0.0
    %2723 = vmatpush2.msra.mxu0 0.0
    %2724 = vmatprep.subr.mxu0 0.0
    %2725 = vmatpush2.msra.mxu0 0.0
    %2726 = vmatprep.subr.mxu0 0.0
    %2727 = vmatpush2.msra.mxu0 0.0
    %2728 = vmatprep.subr.mxu0 0.0
    %2729 = vmatpush2.msra.mxu0 0.0
    %2730 = vmatprep.mubr.f32.mxu0 0.0
    %2731 = vmatmul.mubr.f32.gmra.mxu0 %v2664
    %v2732 = vpop.f32.mrf.mxu0
    %v2733 = vadd.f32 %v409, %v2732
    %v2734 = vpop.f32.mrf.mxu0
    %2735 = vdwg.mxu0
    %v2736 = vxor.u32 %v2733, 2147483648
    %v2737 = vmul.f32 %v2736, 1.442695
    %v2738 = vpow.pop %v2737
    %v2739 = vadd.f32 %v2738, 1.0
    %v2740 = vrcp.pop %v2739
    %v2741 = vmul.f32 1.0, %v2740
    %2743 = vrot.lane.b32.xlu0 %v2733, 80
    %v2744 = vpop.permute.xlu0 %2743
    %v2746 = vmul.f32 %v2741, %v2744
    %2748 = vrot.lane.b32.xlu0 %v2746, 32
    %v2749 = vpop.permute.xlu0 %2748
    %v2751 = vadd.f32 %v2733, %v2749
    %v2752 = vtanh.pop %v2751
    %v2753 = vsub.f32 1.0, %v2741
    %2755 = vrot.lane.b32.xlu0 %v2752, 112
    %v2756 = vpop.permute.xlu0 %2755
    %v2758 = vmul.f32 %v2753, %v2756
    %v2759 = vmul.f32 %v2741, %v2456
    %v2760 = vadd.f32 %v2758, %v2759
    %2762 = vrot.lane.b32.xlu0 %v2760, 112
    %v2763 = vpop.permute.xlu0 %2762
    %v2765 = vsel %vm267, %v2763, %v2559
    %v2767 = vsel %vm529, %v2765, 0
    %2769 = vmatprep.subr.mxu0 0.0
    %2770 = vmatpush1.msra.mxu0 0.0
    %2771 = vmatprep.subr.mxu0 0.0
    %2772 = vmatpush1.msra.mxu0 0.0
    %2773 = vmatprep.subr.mxu0 0.0
    %2774 = vmatpush1.msra.mxu0 0.0
    %2775 = vmatprep.subr.mxu0 0.0
    %2776 = vmatpush1.msra.mxu0 0.0
    %2777 = vmatprep.subr.mxu0 0.0
    %2778 = vmatpush1.msra.mxu0 0.0
    %2779 = vmatprep.subr.mxu0 0.0
    %2780 = vmatpush1.msra.mxu0 0.0
    %2781 = vmatprep.subr.mxu0 0.0
    %2782 = vmatpush1.msra.mxu0 0.0
    %2783 = vmatprep.subr.mxu0 0.0
    %2784 = vmatpush1.msra.mxu0 0.0
    %2785 = vmatprep.subr.mxu0 0.0
    %2786 = vmatpush1.msra.mxu0 0.0
    %2787 = vmatprep.subr.mxu0 0.0
    %2788 = vmatpush1.msra.mxu0 0.0
    %2789 = vmatprep.subr.mxu0 0.0
    %2790 = vmatpush1.msra.mxu0 0.0
    %2791 = vmatprep.subr.mxu0 0.0
    %2792 = vmatpush1.msra.mxu0 0.0
    %2793 = vmatprep.subr.mxu0 0.0
    %2794 = vmatpush1.msra.mxu0 %v637
    %2795 = vmatprep.subr.mxu0 0.0
    %2796 = vmatpush1.msra.mxu0 %v636
    %2797 = vmatprep.subr.mxu0 0.0
    %2798 = vmatpush1.msra.mxu0 %v635
    %2799 = vmatprep.subr.mxu0 0.0
    %2800 = vmatpush1.msra.mxu0 %v634
    %2801 = vmatprep.subr.mxu0 0.0
    %2802 = vmatpush2.msra.mxu0 0.0
    %2803 = vmatprep.subr.mxu0 0.0
    %2804 = vmatpush2.msra.mxu0 0.0
    %2805 = vmatprep.subr.mxu0 0.0
    %2806 = vmatpush2.msra.mxu0 0.0
    %2807 = vmatprep.subr.mxu0 0.0
    %2808 = vmatpush2.msra.mxu0 0.0
    %2809 = vmatprep.subr.mxu0 0.0
    %2810 = vmatpush2.msra.mxu0 0.0
    %2811 = vmatprep.subr.mxu0 0.0
    %2812 = vmatpush2.msra.mxu0 0.0
    %2813 = vmatprep.subr.mxu0 0.0
    %2814 = vmatpush2.msra.mxu0 0.0
    %2815 = vmatprep.subr.mxu0 0.0
    %2816 = vmatpush2.msra.mxu0 0.0
    %2817 = vmatprep.subr.mxu0 0.0
    %2818 = vmatpush2.msra.mxu0 0.0
    %2819 = vmatprep.subr.mxu0 0.0
    %2820 = vmatpush2.msra.mxu0 0.0
    %2821 = vmatprep.subr.mxu0 0.0
    %2822 = vmatpush2.msra.mxu0 0.0
    %2823 = vmatprep.subr.mxu0 0.0
    %2824 = vmatpush2.msra.mxu0 0.0
    %2825 = vmatprep.subr.mxu0 0.0
    %2826 = vmatpush2.msra.mxu0 0.0
    %2827 = vmatprep.subr.mxu0 0.0
    %2828 = vmatpush2.msra.mxu0 0.0
    %2829 = vmatprep.subr.mxu0 0.0
    %2830 = vmatpush2.msra.mxu0 0.0
    %2831 = vmatprep.subr.mxu0 0.0
    %2832 = vmatpush2.msra.mxu0 0.0
    %2833 = vmatprep.mubr.f32.mxu0 0.0
    %2834 = vmatmul.mubr.f32.gmra.mxu0 %v2767
    %v2835 = vpop.f32.mrf.mxu0
    %v2836 = vadd.f32 %v417, %v2835
    %v2837 = vpop.f32.mrf.mxu0
    %2838 = vdwg.mxu0
    %v2839 = vxor.u32 %v2836, 2147483648
    %v2840 = vmul.f32 %v2839, 1.442695
    %v2841 = vpow.pop %v2840
    %v2842 = vadd.f32 %v2841, 1.0
    %v2843 = vrcp.pop %v2842
    %v2844 = vmul.f32 1.0, %v2843
    %2846 = vrot.lane.b32.xlu0 %v2836, 80
    %v2847 = vpop.permute.xlu0 %2846
    %v2849 = vmul.f32 %v2844, %v2847
    %2851 = vrot.lane.b32.xlu0 %v2849, 32
    %v2852 = vpop.permute.xlu0 %2851
    %v2854 = vadd.f32 %v2836, %v2852
    %v2855 = vtanh.pop %v2854
    %v2856 = vsub.f32 1.0, %v2844
    %2858 = vrot.lane.b32.xlu0 %v2855, 112
    %v2859 = vpop.permute.xlu0 %2858
    %v2861 = vmul.f32 %v2856, %v2859
    %v2862 = vmul.f32 %v2844, %v2559
    %v2863 = vadd.f32 %v2861, %v2862
    %2864 = vst.msk [vmem:[%s12] sm:$0xff] %vm267, %v2660
    %s2865 = scalar_lea.vmem %s12, 8
    %2866 = vst.msk [vmem:[%s2865] sm:$0xff] %vm267, %v2763
    %2868 = vrot.lane.b32.xlu0 %v2863, 112
    %v2869 = vpop.permute.xlu0 %2868
    %s2871 = scalar_lea.vmem %s12, 16
    %2872 = vst.msk [vmem:[%s2871] sm:$0xff] %vm267, %v2869
    %v2873 = vld [vmem:[%s9] sm:$0xff]
    %v2874 = vld [vmem:[%s9 + $0x8] sm:$0xff]
    %v2875 = vld [vmem:[#allocation9] sm:$0x1]
    %v2877 = vlaneseq
    %v2878 = vshrl.u32 %v2877, 7
    %v2879 = vsub.s32 0, %v2878
    %v2880 = vrot.slane %v2875, %v2879
    %v2882 = vsel %vm267, %v2869, 0
    %2884 = vmatprep.subr.mxu0 0.0
    %2885 = vmatpush1.msra.mxu0 0.0
    %2886 = vmatprep.subr.mxu0 0.0
    %2887 = vmatpush1.msra.mxu0 0.0
    %2888 = vmatprep.subr.mxu0 0.0
    %2889 = vmatpush1.msra.mxu0 0.0
    %2890 = vmatprep.subr.mxu0 0.0
    %2891 = vmatpush1.msra.mxu0 0.0
    %2892 = vmatprep.subr.mxu0 0.0
    %2893 = vmatpush1.msra.mxu0 0.0
    %2894 = vmatprep.subr.mxu0 0.0
    %2895 = vmatpush1.msra.mxu0 0.0
    %2896 = vmatprep.subr.mxu0 0.0
    %2897 = vmatpush1.msra.mxu0 0.0
    %2898 = vmatprep.subr.mxu0 0.0
    %2899 = vmatpush1.msra.mxu0 0.0
    %2900 = vmatprep.subr.mxu0 0.0
    %2901 = vmatpush1.msra.mxu0 0.0
    %2902 = vmatprep.subr.mxu0 0.0
    %2903 = vmatpush1.msra.mxu0 0.0
    %2904 = vmatprep.subr.mxu0 0.0
    %2905 = vmatpush1.msra.mxu0 0.0
    %2906 = vmatprep.subr.mxu0 0.0
    %2907 = vmatpush1.msra.mxu0 0.0
    %2908 = vmatprep.subr.mxu0 0.0
    %2909 = vmatpush1.msra.mxu0 0.0
    %2910 = vmatprep.subr.mxu0 0.0
    %2911 = vmatpush1.msra.mxu0 0.0
    %2912 = vmatprep.subr.mxu0 0.0
    %2913 = vmatpush1.msra.mxu0 %v2874
    %2914 = vmatprep.subr.mxu0 0.0
    %2915 = vmatpush1.msra.mxu0 %v2873
    %2916 = vmatprep.subr.mxu0 0.0
    %2917 = vmatpush2.msra.mxu0 0.0
    %2918 = vmatprep.subr.mxu0 0.0
    %2919 = vmatpush2.msra.mxu0 0.0
    %2920 = vmatprep.subr.mxu0 0.0
    %2921 = vmatpush2.msra.mxu0 0.0
    %2922 = vmatprep.subr.mxu0 0.0
    %2923 = vmatpush2.msra.mxu0 0.0
    %2924 = vmatprep.subr.mxu0 0.0
    %2925 = vmatpush2.msra.mxu0 0.0
    %2926 = vmatprep.subr.mxu0 0.0
    %2927 = vmatpush2.msra.mxu0 0.0
    %2928 = vmatprep.subr.mxu0 0.0
    %2929 = vmatpush2.msra.mxu0 0.0
    %2930 = vmatprep.subr.mxu0 0.0
    %2931 = vmatpush2.msra.mxu0 0.0
    %2932 = vmatprep.subr.mxu0 0.0
    %2933 = vmatpush2.msra.mxu0 0.0
    %2934 = vmatprep.subr.mxu0 0.0
    %2935 = vmatpush2.msra.mxu0 0.0
    %2936 = vmatprep.subr.mxu0 0.0
    %2937 = vmatpush2.msra.mxu0 0.0
    %2938 = vmatprep.subr.mxu0 0.0
    %2939 = vmatpush2.msra.mxu0 0.0
    %2940 = vmatprep.subr.mxu0 0.0
    %2941 = vmatpush2.msra.mxu0 0.0
    %2942 = vmatprep.subr.mxu0 0.0
    %2943 = vmatpush2.msra.mxu0 0.0
    %2944 = vmatprep.subr.mxu0 0.0
    %2945 = vmatpush2.msra.mxu0 0.0
    %2946 = vmatprep.subr.mxu0 0.0
    %2947 = vmatpush2.msra.mxu0 0.0
    %2948 = vmatprep.mubr.f32.mxu0 0.0
    %2949 = vmatmul.mubr.f32.gmra.mxu0 %v2882
    %v2950 = vpop.f32.mrf.mxu0
    %v2951 = vadd.f32 %v2880, %v2950
    %v2952 = vpop.f32.mrf.mxu0
    %2953 = vdwg.mxu0
    %2954 = vst.msk [vmem:[%s11] sm:$0xff] %vm267, %v2951
    // Predicated region
    $region66: #{rnn_forward.1} parent=1 // pred_check
      _
    $region67: #{rnn_forward.1} parent=1 // pred_check_branch
      %2956 = sbr.rel (0) target = $region69
    $region68: #{rnn_forward.1} parent=1 // pred_region
      _
    $region69: #{rnn_forward.1} parent=1 // pred_fallthru
      _
    // Predicated region
    $region70: #{rnn_forward.1} parent=1 // pred_check
      _
    $region71: #{rnn_forward.1} parent=1 // pred_check_branch
      %2958 = sbr.rel (0) target = $region73
    $region72: #{rnn_forward.1} parent=1 // pred_region
      _
    $region73: #{rnn_forward.1} parent=1 // pred_fallthru
      _
    // Predicated region
    $region74: #{rnn_forward.1} parent=1 // pred_check
      _
    $region75: #{rnn_forward.1} parent=1 // pred_check_branch
      %2960 = sbr.rel (0) target = $region77
    $region76: #{rnn_forward.1} parent=1 // pred_region
      _
    $region77: #{rnn_forward.1} parent=1 // pred_fallthru
      _
    // Predicated region
    $region78: #{rnn_forward.1} parent=1 // pred_check
      _
    $region79: #{rnn_forward.1} parent=1 // pred_check_branch
      %2962 = sbr.rel (0) target = $region81
    $region80: #{rnn_forward.1} parent=1 // pred_region
      _
    $region81: #{rnn_forward.1} parent=1 // pred_fallthru
      _
    %2963 = vsyncpa [#allocation3], 1
    %2964 = vsyncpa [#allocation5], 1
    %2965 = vsyncpa [#allocation8], 1

</llo_original>
